<compile_context>
chip_gen: v6e
topology: v6e:2x2x1
jax: 0.10.0
libtpu: 0.0.40
codegen_flags: <defaults>
</compile_context>

<pallas_src>
import math
import functools
import numpy as np

import jax
import jax.numpy as jnp
from jax import lax
from jax.experimental import pallas as pl
from jax.experimental.pallas import tpu as pltpu


# ----------------------------------------------------------------------------
# Pallas kernel: StageNet core.  Grid = (batch, spatial tile, src view).
# The src-view axis is a reduction ("arbitrary"); accumulators live in VMEM
# scratch and are initialized with the first view / finalized with pl.when.
# ----------------------------------------------------------------------------
def stagenet_kernel(ref_ref, warped_ref, hypo_ref, mask_ref,
                    packed_out, prob_out,
                    var_sum_sc, wvar_sq_sc, cor_feats_sc, cor_wsum_sc,
                    *, num_views, group_cor_dim, attn_temp,
                    depth_interval_ratio, w_sim, w_var, stage_idx):
    v = pl.program_id(2)
    n_src = pl.num_programs(2)

    C = ref_ref.shape[1]
    T = ref_ref.shape[2]
    D = prob_out.shape[1]
    G = group_cor_dim
    eps = 1e-8 * math.sqrt(C)   # rescaled because 1/sqrt(C) on cw is dropped

    # ---- per-view contributions (one warped view resident at a time) --------
    ref = ref_ref[0]                                               # (C, T) f32
    w = warped_ref[0, 0].astype(jnp.float32).reshape(C, D, T)      # (C, D, T)

    prod = w * ref[:, None, :]                                     # (C, D, T)
    cor_feat = jnp.mean(prod.reshape(G, C // G, D, T), axis=1)     # (G, D, T)

    logits = jnp.sum(cor_feat, axis=0) * (1.0 / attn_temp)         # (D, T)
    cw = jax.nn.softmax(logits, axis=0)                            # (D, T)
    cwcf = cw[None] * cor_feat                                     # (G, D, T)

    # w_var-weighted sum of squares (linear in c)  ->  (D, T)
    wsq = float(w_var[0]) * (w[0] * w[0])
    for c in range(1, C):
        wsq = wsq + float(w_var[c]) * (w[c] * w[c])

    @pl.when(v == 0)
    def _():
        var_sum_sc[...] = w
        wvar_sq_sc[...] = wsq
        cor_feats_sc[...] = cwcf
        cor_wsum_sc[...] = cw + eps

    @pl.when(v > 0)
    def _():
        var_sum_sc[...] = var_sum_sc[...] + w
        wvar_sq_sc[...] = wvar_sq_sc[...] + wsq
        cor_feats_sc[...] = cor_feats_sc[...] + cwcf
        cor_wsum_sc[...] = cor_wsum_sc[...] + cw

    # ---- finalize after the last src view ------------------------------------
    @pl.when(v == n_src - 1)
    def _():
        inv_nv = 1.0 / float(num_views)
        inv_wsum = pl.reciprocal(cor_wsum_sc[...], approx=True)    # (D, T) EUP

        # TODO(synk): GeoRegNet2d / var_RegNet architectures are not provided;
        # deterministic 1x1 regularizers (fused weighted sums) stand in here.
        num = float(w_sim[0]) * cor_feats_sc[0]
        for g in range(1, G):
            num = num + float(w_sim[g]) * cor_feats_sc[g]
        cost_reg = num * inv_wsum                                  # (D, T)

        # variance regularizer: sum_c w_var[c] * (E[x^2] - E[x]^2) over views.
        # ref view contribution added once here; no (C,D,T) temporaries.
        r0 = ref[0:1]                                              # (1, T)
        wref_sq = float(w_var[0]) * (r0 * r0)
        m0 = (var_sum_sc[0] + r0) * inv_nv
        wmean_sq = float(w_var[0]) * (m0 * m0)
        for c in range(1, C):
            r = ref[c:c + 1]
            wref_sq = wref_sq + float(w_var[c]) * (r * r)
            m = (var_sum_sc[c] + r) * inv_nv
            wmean_sq = wmean_sq + float(w_var[c]) * (m * m)
        var_cost_reg = (wvar_sq_sc[...] + wref_sq) * inv_nv - wmean_sq   # (D, T)

        sim_prob = jax.nn.softmax(cost_reg, axis=0)                # (D, T)
        var_prob = jax.nn.softmax(var_cost_reg, axis=0)            # (D, T)

        if stage_idx == 0:
            m = mask_ref[0]                                        # (1, T)
            prob = (1.0 - m) * sim_prob + m * var_prob
        else:
            prob = jax.nn.softmax(sim_prob * var_prob, axis=0)

        # depth regression: gather depth hypothesis at arg-max of prob over D
        hypo = hypo_ref[0]                                         # (D, 1) f32
        max_prob = jnp.max(prob, axis=0, keepdims=True)            # (1, T)
        iota_d = lax.broadcasted_iota(jnp.int32, (D, T), 0)
        idx = jnp.min(jnp.where(prob == max_prob, iota_d, D),
                      axis=0, keepdims=True)                       # (1, T)
        onehot = iota_d == idx
        depth = jnp.sum(jnp.where(onehot, hypo, 0.0),
                        axis=0, keepdims=True)                     # (1, T)

        var_conf = jnp.max(var_prob, axis=0, keepdims=True)
        sim_conf = jnp.max(sim_prob, axis=0, keepdims=True)

        # last_depth_itv from the spatially-constant hypotheses; exact division
        itv_sc = 1.0 / hypo[2:3] - 1.0 / hypo[1:2]                 # (1, 1)
        itv = itv_sc + jnp.zeros_like(depth)                       # (1, T)
        inv_depth = 1.0 / depth
        inv_min = inv_depth + depth_interval_ratio * itv
        inv_max = inv_depth - depth_interval_ratio * itv

        # pack the seven single-row outputs into one sublane-dense (8, T) slab
        packed = jnp.concatenate(
            [depth, max_prob, var_conf, sim_conf, itv, inv_min, inv_max,
             jnp.zeros_like(depth)], axis=0)                       # (8, T)
        packed_out[0] = packed
        prob_out[0] = prob


# ----------------------------------------------------------------------------
# VMEM-budget-aware tiling
# ----------------------------------------------------------------------------
def _vmem_limit_bytes():
    cap = 64 * 1024 * 1024
    try:
        info = pltpu.get_tpu_info()
        cap = int(getattr(info, "vmem_capacity_bytes", cap))
    except Exception:
        pass
    # ~48 MiB on v7x (64 MiB physical), ~96 MiB on v5e/v6e (128 MiB physical)
    return int(min(max(cap * 3 // 4, 32 * 1024 * 1024), 96 * 1024 * 1024))


def _pick_tile(HW, B, C, D, G, vmem_limit_bytes, max_tile=4096):
    per_lane = (4 * (C * D + D + G * D + D)   # f32 scratch accumulators
                + 2 * 4 * C                   # ref f32, double-buffered
                + 2 * 2 * C * D               # warped bf16, double-buffered
                + 2 * 4                       # mask, double-buffered
                + 2 * 4 * (8 + D)             # packed + prob outputs, dbl-buf
                + 4 * 3 * C * D)              # in-kernel f32 temporaries
    budget = vmem_limit_bytes // 2            # headroom for compiler temps
    tile = max(128, min(max_tile, (budget // per_lane) // 128 * 128))
    hw128 = ((HW + 127) // 128) * 128
    tile = min(tile, hw128)
    # keep >= 2 parallel grid steps (megacore / dual-TC chips) when possible
    while tile > 128 and B * ((hw128 + tile - 1) // tile) < 2:
        tile -= 128
    return tile


def stagenet_pallas(stage_idx, ref_feat, warped, depth_hypo_bd, text_mask,
                    *, num_views, group_cor_dim, attn_temp,
                    depth_interval_ratio, w_sim, w_var):
    B, C, HW = ref_feat.shape
    V1 = warped.shape[0]
    D = depth_hypo_bd.shape[1]
    G = group_cor_dim
    f32 = jnp.float32

    vmem_limit = _vmem_limit_bytes()
    tile = _pick_tile(HW, B, C, D, G, vmem_limit)
    HW_pad = int(pl.cdiv(HW, tile)) * tile
    grid = (B, HW_pad // tile, V1)

    # C*D merged into one sublane axis (multiple of 16) -> bf16 without padding
    ref_feat = ref_feat.astype(f32)
    warped = warped.reshape(V1, B, C * D, HW).astype(jnp.bfloat16)
    hypo = depth_hypo_bd.astype(f32).reshape(B, D, 1)
    text_mask = text_mask.astype(f32).reshape(B, 1, HW)

    if HW_pad != HW:
        pad = HW_pad - HW
        ref_feat = jnp.pad(ref_feat, ((0, 0), (0, 0), (0, pad)))
        warped = jnp.pad(warped, ((0, 0), (0, 0), (0, 0), (0, pad)))
        text_mask = jnp.pad(text_mask, ((0, 0), (0, 0), (0, pad)))

    kernel = functools.partial(
        stagenet_kernel, num_views=num_views, group_cor_dim=G,
        attn_temp=float(attn_temp),
        depth_interval_ratio=float(depth_interval_ratio),
        w_sim=tuple(float(x) for x in w_sim),
        w_var=tuple(float(x) for x in w_var), stage_idx=stage_idx)

    in_specs = [
        pl.BlockSpec((1, C, tile), lambda b, t, v: (b, 0, t)),
        pl.BlockSpec((1, 1, C * D, tile), lambda b, t, v: (v, b, 0, t)),
        pl.BlockSpec((1, D, 1), lambda b, t, v: (b, 0, 0)),
        pl.BlockSpec((1, 1, tile), lambda b, t, v: (b, 0, t)),
    ]
    out_specs = (
        pl.BlockSpec((1, 8, tile), lambda b, t, v: (b, 0, t)),   # packed rows
        pl.BlockSpec((1, D, tile), lambda b, t, v: (b, 0, t)),   # prob volume
    )
    out_shape = (
        jax.ShapeDtypeStruct((B, 8, HW_pad), f32),
        jax.ShapeDtypeStruct((B, D, HW_pad), f32),
    )
    scratch_shapes = [
        pltpu.VMEM((C, D, tile), f32),   # per-channel view sum (needed for mean^2)
        pltpu.VMEM((D, tile), f32),      # w_var-weighted sum of squares
        pltpu.VMEM((G, D, tile), f32),   # cor_feats
        pltpu.VMEM((D, tile), f32),      # cor_weight_sum
    ]

    packed, prob = pl.pallas_call(
        kernel,
        out_shape=out_shape,
        grid_spec=pltpu.PrefetchScalarGridSpec(
            num_scalar_prefetch=0, grid=grid,
            in_specs=in_specs, out_specs=out_specs,
            scratch_shapes=scratch_shapes),
        compiler_params=pltpu.CompilerParams(
            dimension_semantics=("parallel", "parallel", "arbitrary"),
            vmem_limit_bytes=vmem_limit),
    )(ref_feat, warped, hypo, text_mask)

    packed = packed[:, :, :HW]
    prob = prob[:, :, :HW]
    return (packed[:, 0:1], packed[:, 1:2], packed[:, 2:3], packed[:, 3:4],
            prob, packed[:, 4:5], packed[:, 5:6], packed[:, 6:7])


# ----------------------------------------------------------------------------
# Plain-JAX glue (warping, hypotheses, masks, projection setup)
# ----------------------------------------------------------------------------
def init_inverse_range_1d(depth_values, ndepth):
    # stage-1 hypotheses are spatially constant -> keep them as (B, D)
    inv_min = 1.0 / depth_values[:, 0]
    inv_max = 1.0 / depth_values[:, -1]
    itv = jnp.arange(ndepth, dtype=jnp.float32)[None, :] / (ndepth - 1)
    inv_hypo = inv_max[:, None] + (inv_min - inv_max)[:, None] * itv   # (B, D)
    return 1.0 / inv_hypo


def bilinear_sample_zeros(fea, px, py):
    # fea: (B, C, H, W); px, py: (B, D, HW) pixel coords (align_corners=True)
    B, C, H, W = fea.shape
    x0 = jnp.floor(px)
    y0 = jnp.floor(py)
    wx1 = px - x0
    wx0 = 1.0 - wx1
    wy1 = py - y0
    wy0 = 1.0 - wy1
    fea_flat = fea.reshape(B, C, H * W)

    def corner(xi, yi, wgt):
        valid = (xi >= 0) & (xi <= W - 1) & (yi >= 0) & (yi <= H - 1)
        xi_c = jnp.clip(xi, 0, W - 1).astype(jnp.int32)
        yi_c = jnp.clip(yi, 0, H - 1).astype(jnp.int32)
        flat = yi_c * W + xi_c                                        # (B, D, HW)
        gathered = jax.vmap(lambda f, idx: f[:, idx])(fea_flat, flat)  # (B,C,D,HW)
        w = (wgt * valid.astype(jnp.float32))[:, None]                 # (B,1,D,HW)
        return gathered * w

    return (corner(x0, y0, wx0 * wy0) + corner(x0 + 1.0, y0, wx1 * wy0) +
            corner(x0, y0 + 1.0, wx0 * wy1) + corner(x0 + 1.0, y0 + 1.0, wx1 * wy1))


def homo_warping(src_fea, src_proj, ref_proj, depth_hypo_bd):
    # src_fea: (B,C,H,W)  src/ref_proj: (B,4,4)  depth_hypo_bd: (B,D)
    B, C, H, W = src_fea.shape
    D = depth_hypo_bd.shape[1]
    proj = jnp.matmul(src_proj, jnp.linalg.inv(ref_proj))
    rot = proj[:, :3, :3]
    trans = proj[:, :3, 3:4]
    yy, xx = jnp.meshgrid(jnp.arange(H, dtype=jnp.float32),
                          jnp.arange(W, dtype=jnp.float32), indexing="ij")
    xyz = jnp.stack([xx.ravel(), yy.ravel(), jnp.ones(H * W, jnp.float32)], axis=0)
    xyz = jnp.broadcast_to(xyz[None], (B, 3, H * W))
    rot_xyz = jnp.matmul(rot, xyz)                                      # (B,3,HW)
    rot_depth_xyz = rot_xyz[:, :, None, :] * depth_hypo_bd[:, None, :, None]
    proj_xyz = rot_depth_xyz + trans[:, :, :, None]                     # (B,3,D,HW)
    z = proj_xyz[:, 2:3]
    proj_xy = proj_xyz[:, :2] / z                                       # (B,2,D,HW)
    # grid_sample(bilinear, padding_mode='zeros', align_corners=True):
    # normalize->denormalize cancels, so use pixel coords directly.
    warped = bilinear_sample_zeros(src_fea, proj_xy[:, 0], proj_xy[:, 1])
    return warped.astype(src_fea.dtype).reshape(B, C, D, H, W)


def get_mask_stage1(ref_lbp_mask, mask):
    l0, l1, l2 = (ref_lbp_mask["stage1"][0], ref_lbp_mask["stage1"][1],
                  ref_lbp_mask["stage1"][2])
    m = (l0 + l1 + l2) != 0
    return jnp.logical_and(m, mask != 0)


def make_proj_matrices(B, V, H, W):
    K = jnp.eye(4, dtype=jnp.float32)
    K = K.at[0, 0].set(float(W)).at[1, 1].set(float(H))
    K = K.at[0, 2].set(W / 2.0).at[1, 2].set(H / 2.0)
    mats = []
    for v in range(V):
        E = jnp.eye(4, dtype=jnp.float32).at[0, 3].set(0.02 * v)  # small baseline
        mats.append(jnp.stack([E, K], axis=0))                    # (2,4,4)
    proj = jnp.stack(mats, axis=0)[None]                          # (1,V,2,4,4)
    return jnp.broadcast_to(proj, (B, V, 2, 4, 4))


# ----------------------------------------------------------------------------
# GeoMVSNet forward (coarsest stage; StageNet core runs in the Pallas kernel)
# ----------------------------------------------------------------------------
def geomvsnet_forward(imgs, proj_matrices, depth_values, ref_lbp_mask, mask,
                      w_feat, w_sim, w_var,
                      hypo_plane_num=8, group_cor_dim=4,
                      depth_interval_ratio=0.5, attn_temp=2.0):
    V, B, _, H, W = imgs.shape
    # TODO(synk): FPN / CoarestFeatureNet architectures are not provided; a
    # deterministic pointwise linear projection stands in as the feature net.
    feats = jnp.einsum("oc,vbchw->vbohw", w_feat, imgs)          # (V,B,C,H,W)
    C = feats.shape[2]
    D = hypo_plane_num

    depth_hypo_bd = init_inverse_range_1d(depth_values, D)      # (B, D)

    ref_proj = proj_matrices[:, 0]
    ref_proj_new = ref_proj[:, 0].at[:, :3, :4].set(
        jnp.matmul(ref_proj[:, 1, :3, :3], ref_proj[:, 0, :3, :4]))

    # bf16 source features -> the big warped intermediate is stored in bf16
    feats_src = feats.astype(jnp.bfloat16)
    warped_list = []
    for src_idx in range(1, V):
        src_proj = proj_matrices[:, src_idx]
        src_proj_new = src_proj[:, 0].at[:, :3, :4].set(
            jnp.matmul(src_proj[:, 1, :3, :3], src_proj[:, 0, :3, :4]))
        warped_list.append(
            homo_warping(feats_src[src_idx], src_proj_new, ref_proj_new,
                         depth_hypo_bd))
    warped = jnp.stack(warped_list, axis=0)                      # (V-1,B,C,D,H,W)
    # TODO(synk): fusing the homography warp / bilinear gather into the Pallas
    # kernel (scalar-prefetched projections + manual DMA gather) would remove
    # this HBM intermediate entirely.

    text_mask = get_mask_stage1(ref_lbp_mask, mask).astype(jnp.float32)  # (B,H,W)

    HW = H * W
    outs = stagenet_pallas(
        0,
        feats[0].reshape(B, C, HW),
        warped.reshape(V - 1, B, C, D, HW),
        depth_hypo_bd,
        text_mask.reshape(B, 1, HW),
        num_views=V, group_cor_dim=group_cor_dim, attn_temp=attn_temp,
        depth_interval_ratio=depth_interval_ratio, w_sim=w_sim, w_var=w_var)

    depth, conf, var_conf, sim_conf, prob, itv, inv_min, inv_max = outs
    depth_hypo_full = jnp.broadcast_to(
        depth_hypo_bd[:, :, None, None], (B, D, H, W))
    out_stage = {
        "depth": depth.reshape(B, H, W),
        "photometric_confidence": conf.reshape(B, H, W),
        "var_photometric_confidence": var_conf.reshape(B, H, W),
        "sim_photometric_confidence": sim_conf.reshape(B, H, W),
        "depth_hypo": depth_hypo_full,
        "prob_volume": prob.reshape(B, D, H, W),
        "last_depth_itv": itv.reshape(B, H, W),
        "text_mask": text_mask,
        "inverse_min_depth": inv_min.reshape(B, H, W),
        "inverse_max_depth": inv_max.reshape(B, H, W),
    }
    # TODO(synk): stages 2-4 (GeoFeatureFusion, schedule_inverse_range,
    # GeoRegNet2d with prob_volume_last, cv2-based fill_in_fast, FFT
    # frequency_domain_filter) rely on sub-modules / OpenCV ops that are not
    # provided; only the coarsest stage is executed here.
    outputs = {"stage1": out_stage}
    outputs.update(out_stage)
    return outputs


# ----------------------------------------------------------------------------
if __name__ == "__main__":
    B, V, H, W = 2, 3, 32, 32
    C_FEAT, GROUP_DIM, D_HYPO = 8, 4, 8

    key = jax.random.PRNGKey(0)
    k_img, k_feat, k_sim, k_var, k_lbp = jax.random.split(key, 5)

    imgs = jax.random.normal(k_img, (V, B, 3, H, W), dtype=jnp.float32)
    w_feat = jax.random.normal(k_feat, (C_FEAT, 3), dtype=jnp.float32) * 0.5
    w_sim = np.asarray(jax.random.normal(k_sim, (GROUP_DIM,), dtype=jnp.float32))
    w_var = np.asarray(jax.random.normal(k_var, (C_FEAT,), dtype=jnp.float32))

    depth_values = jnp.broadcast_to(
        jnp.linspace(0.5, 1.0, 48, dtype=jnp.float32)[None, :], (B, 48))
    proj_matrices = make_proj_matrices(B, V, H, W)
    ref_lbp_mask = {"stage1": [
        (jax.random.uniform(k, (B, H, W)) > 0.5).astype(jnp.float32)
        for k in jax.random.split(k_lbp, 9)]}
    mask = jnp.ones((B, H, W), dtype=jnp.float32)

    outputs = geomvsnet_forward(
        imgs, proj_matrices, depth_values, ref_lbp_mask, mask,
        w_feat, w_sim, w_var,
        hypo_plane_num=D_HYPO, group_cor_dim=GROUP_DIM,
        depth_interval_ratio=0.5, attn_temp=2.0)

    jax.block_until_ready(outputs)
    assert outputs["depth"].shape == (B, H, W)
    assert outputs["prob_volume"].shape == (B, D_HYPO, H, W)
    assert bool(jnp.all(jnp.isfinite(outputs["depth"])))
    print("KERNEL_OK")
</pallas_src>

<mosaic_0001>
module attributes {stable_mosaic.version = 11 : i64} {
  func.func @stagenet_kernel(%arg0: i32, %arg1: i32, %arg2: i32, %arg3: memref<1x8x1024xf32, #tpu.memory_space<vmem>>, %arg4: memref<1x1x64x1024xbf16, #tpu.memory_space<vmem>>, %arg5: memref<1x8x1xf32, #tpu.memory_space<vmem>>, %arg6: memref<1x1x1024xf32, #tpu.memory_space<vmem>>, %arg7: memref<1x8x1024xf32, #tpu.memory_space<vmem>>, %arg8: memref<1x8x1024xf32, #tpu.memory_space<vmem>>, %arg9: memref<8x8x1024xf32, #tpu.memory_space<vmem>>, %arg10: memref<8x1024xf32, #tpu.memory_space<vmem>>, %arg11: memref<4x8x1024xf32, #tpu.memory_space<vmem>>, %arg12: memref<8x1024xf32, #tpu.memory_space<vmem>>) attributes {dimension_semantics = [#tpu.dimension_semantics<parallel>, #tpu.dimension_semantics<parallel>, #tpu.dimension_semantics<arbitrary>], iteration_bounds = array<i64: 2, 1, 2>, scalar_prefetch = 0 : i64, scratch_operands = 4 : i64, tpu.core_type = #tpu.core_type<tc>, window_params = [{transform_indices = @transform_0, window_bounds = array<i64: 1, 8, 1024>}, {transform_indices = @transform_1, window_bounds = array<i64: 1, 1, 64, 1024>}, {transform_indices = @transform_2, window_bounds = array<i64: 1, 8, 1>}, {transform_indices = @transform_3, window_bounds = array<i64: 1, 1, 1024>}, {transform_indices = @transform_4, window_bounds = array<i64: 1, 8, 1024>}, {transform_indices = @transform_5, window_bounds = array<i64: 1, 8, 1024>}]} {
    %c0 = arith.constant 0 : index
    %c0_0 = arith.constant 0 : index
    %c0_1 = arith.constant 0 : index
    %0 = vector.load %arg3[%c0, %c0_0, %c0_1] : memref<1x8x1024xf32, #tpu.memory_space<vmem>>, vector<1x8x1024xf32>
    %1 = vector.shape_cast %0 : vector<1x8x1024xf32> to vector<8x1024xf32>
    %c0_2 = arith.constant 0 : index
    %c0_3 = arith.constant 0 : index
    %c0_4 = arith.constant 0 : index
    %c0_5 = arith.constant 0 : index
    %2 = vector.load %arg4[%c0_2, %c0_3, %c0_4, %c0_5] : memref<1x1x64x1024xbf16, #tpu.memory_space<vmem>>, vector<1x1x64x1024xbf16>
    %3 = vector.shape_cast %2 : vector<1x1x64x1024xbf16> to vector<64x1024xbf16>
    %4 = arith.extf %3 : vector<64x1024xbf16> to vector<64x1024xf32>
    %5 = vector.shape_cast %4 : vector<64x1024xf32> to vector<8x8x1024xf32>
    %6 = vector.shape_cast %1 : vector<8x1024xf32> to vector<8x1x1024xf32>
    %7 = vector.broadcast %6 : vector<8x1x1024xf32> to vector<8x8x1024xf32>
    %8 = arith.mulf %5, %7 : vector<8x8x1024xf32>
    %9 = vector.shape_cast %8 : vector<8x8x1024xf32> to vector<4x2x8x1024xf32>
    %cst = arith.constant dense<0.000000e+00> : vector<4x8x1024xf32>
    %10 = vector.multi_reduction <add>, %9, %cst [1] : vector<4x2x8x1024xf32> to vector<4x8x1024xf32>
    %cst_6 = arith.constant 2.000000e+00 : f32
    %11 = vector.broadcast %cst_6 : f32 to vector<4x8x1024xf32>
    %12 = arith.divf %10, %11 : vector<4x8x1024xf32>
    %cst_7 = arith.constant dense<0.000000e+00> : vector<8x1024xf32>
    %13 = vector.multi_reduction <add>, %12, %cst_7 [0] : vector<4x8x1024xf32> to vector<8x1024xf32>
    %cst_8 = arith.constant 5.000000e-01 : f32
    %14 = vector.broadcast %cst_8 : f32 to vector<8x1024xf32>
    %15 = arith.mulf %13, %14 : vector<8x1024xf32>
    %cst_9 = arith.constant dense<0xFF800000> : vector<1024xf32>
    %16 = vector.multi_reduction <maximumf>, %15, %cst_9 [0] : vector<8x1024xf32> to vector<1024xf32>
    %cst_10 = arith.constant 0xFF800000 : f32
    %17 = vector.broadcast %cst_10 : f32 to vector<1024xf32>
    %18 = arith.maximumf %17, %16 : vector<1024xf32>
    %19 = vector.shape_cast %18 : vector<1024xf32> to vector<1x1024xf32>
    %20 = vector.broadcast %19 : vector<1x1024xf32> to vector<8x1024xf32>
    %21 = arith.subf %15, %20 : vector<8x1024xf32>
    %22 = math.exp %21 : vector<8x1024xf32>
    %cst_11 = arith.constant dense<0.000000e+00> : vector<1024xf32>
    %23 = vector.multi_reduction <add>, %22, %cst_11 [0] : vector<8x1024xf32> to vector<1024xf32>
    %24 = vector.shape_cast %23 : vector<1024xf32> to vector<1x1024xf32>
    %25 = vector.broadcast %24 : vector<1x1024xf32> to vector<8x1024xf32>
    %26 = arith.divf %22, %25 : vector<8x1024xf32>
    %27 = vector.shape_cast %26 : vector<8x1024xf32> to vector<1x8x1024xf32>
    %28 = vector.broadcast %27 : vector<1x8x1024xf32> to vector<4x8x1024xf32>
    %29 = arith.mulf %28, %12 : vector<4x8x1024xf32>
    %30 = vector.extract_strided_slice %5 {offsets = [0, 0, 0], sizes = [1, 8, 1024], strides = [1, 1, 1]} : vector<8x8x1024xf32> to vector<1x8x1024xf32>
    %31 = vector.shape_cast %30 : vector<1x8x1024xf32> to vector<8x1024xf32>
    %32 = vector.extract_strided_slice %5 {offsets = [0, 0, 0], sizes = [1, 8, 1024], strides = [1, 1, 1]} : vector<8x8x1024xf32> to vector<1x8x1024xf32>
    %33 = vector.shape_cast %32 : vector<1x8x1024xf32> to vector<8x1024xf32>
    %34 = arith.mulf %31, %33 : vector<8x1024xf32>
    %cst_12 = arith.constant -0.621943593 : f32
    %35 = vector.broadcast %cst_12 : f32 to vector<8x1024xf32>
    %36 = arith.mulf %35, %34 : vector<8x1024xf32>
    %37 = vector.extract_strided_slice %5 {offsets = [1, 0, 0], sizes = [1, 8, 1024], strides = [1, 1, 1]} : vector<8x8x1024xf32> to vector<1x8x1024xf32>
    %38 = vector.shape_cast %37 : vector<1x8x1024xf32> to vector<8x1024xf32>
    %39 = vector.extract_strided_slice %5 {offsets = [1, 0, 0], sizes = [1, 8, 1024], strides = [1, 1, 1]} : vector<8x8x1024xf32> to vector<1x8x1024xf32>
    %40 = vector.shape_cast %39 : vector<1x8x1024xf32> to vector<8x1024xf32>
    %41 = arith.mulf %38, %40 : vector<8x1024xf32>
    %cst_13 = arith.constant 0.624804079 : f32
    %42 = vector.broadcast %cst_13 : f32 to vector<8x1024xf32>
    %43 = arith.mulf %42, %41 : vector<8x1024xf32>
    %44 = arith.addf %36, %43 : vector<8x1024xf32>
    %45 = vector.extract_strided_slice %5 {offsets = [2, 0, 0], sizes = [1, 8, 1024], strides = [1, 1, 1]} : vector<8x8x1024xf32> to vector<1x8x1024xf32>
    %46 = vector.shape_cast %45 : vector<1x8x1024xf32> to vector<8x1024xf32>
    %47 = vector.extract_strided_slice %5 {offsets = [2, 0, 0], sizes = [1, 8, 1024], strides = [1, 1, 1]} : vector<8x8x1024xf32> to vector<1x8x1024xf32>
    %48 = vector.shape_cast %47 : vector<1x8x1024xf32> to vector<8x1024xf32>
    %49 = arith.mulf %46, %48 : vector<8x1024xf32>
    %cst_14 = arith.constant 1.68207753 : f32
    %50 = vector.broadcast %cst_14 : f32 to vector<8x1024xf32>
    %51 = arith.mulf %50, %49 : vector<8x1024xf32>
    %52 = arith.addf %44, %51 : vector<8x1024xf32>
    %53 = vector.extract_strided_slice %5 {offsets = [3, 0, 0], sizes = [1, 8, 1024], strides = [1, 1, 1]} : vector<8x8x1024xf32> to vector<1x8x1024xf32>
    %54 = vector.shape_cast %53 : vector<1x8x1024xf32> to vector<8x1024xf32>
    %55 = vector.extract_strided_slice %5 {offsets = [3, 0, 0], sizes = [1, 8, 1024], strides = [1, 1, 1]} : vector<8x8x1024xf32> to vector<1x8x1024xf32>
    %56 = vector.shape_cast %55 : vector<1x8x1024xf32> to vector<8x1024xf32>
    %57 = arith.mulf %54, %56 : vector<8x1024xf32>
    %cst_15 = arith.constant -0.808012783 : f32
    %58 = vector.broadcast %cst_15 : f32 to vector<8x1024xf32>
    %59 = arith.mulf %58, %57 : vector<8x1024xf32>
    %60 = arith.addf %52, %59 : vector<8x1024xf32>
    %61 = vector.extract_strided_slice %5 {offsets = [4, 0, 0], sizes = [1, 8, 1024], strides = [1, 1, 1]} : vector<8x8x1024xf32> to vector<1x8x1024xf32>
    %62 = vector.shape_cast %61 : vector<1x8x1024xf32> to vector<8x1024xf32>
    %63 = vector.extract_strided_slice %5 {offsets = [4, 0, 0], sizes = [1, 8, 1024], strides = [1, 1, 1]} : vector<8x8x1024xf32> to vector<1x8x1024xf32>
    %64 = vector.shape_cast %63 : vector<1x8x1024xf32> to vector<8x1024xf32>
    %65 = arith.mulf %62, %64 : vector<8x1024xf32>
    %cst_16 = arith.constant -2.36621785 : f32
    %66 = vector.broadcast %cst_16 : f32 to vector<8x1024xf32>
    %67 = arith.mulf %66, %65 : vector<8x1024xf32>
    %68 = arith.addf %60, %67 : vector<8x1024xf32>
    %69 = vector.extract_strided_slice %5 {offsets = [5, 0, 0], sizes = [1, 8, 1024], strides = [1, 1, 1]} : vector<8x8x1024xf32> to vector<1x8x1024xf32>
    %70 = vector.shape_cast %69 : vector<1x8x1024xf32> to vector<8x1024xf32>
    %71 = vector.extract_strided_slice %5 {offsets = [5, 0, 0], sizes = [1, 8, 1024], strides = [1, 1, 1]} : vector<8x8x1024xf32> to vector<1x8x1024xf32>
    %72 = vector.shape_cast %71 : vector<1x8x1024xf32> to vector<8x1024xf32>
    %73 = arith.mulf %70, %72 : vector<8x1024xf32>
    %cst_17 = arith.constant 0.895946323 : f32
    %74 = vector.broadcast %cst_17 : f32 to vector<8x1024xf32>
    %75 = arith.mulf %74, %73 : vector<8x1024xf32>
    %76 = arith.addf %68, %75 : vector<8x1024xf32>
    %77 = vector.extract_strided_slice %5 {offsets = [6, 0, 0], sizes = [1, 8, 1024], strides = [1, 1, 1]} : vector<8x8x1024xf32> to vector<1x8x1024xf32>
    %78 = vector.shape_cast %77 : vector<1x8x1024xf32> to vector<8x1024xf32>
    %79 = vector.extract_strided_slice %5 {offsets = [6, 0, 0], sizes = [1, 8, 1024], strides = [1, 1, 1]} : vector<8x8x1024xf32> to vector<1x8x1024xf32>
    %80 = vector.shape_cast %79 : vector<1x8x1024xf32> to vector<8x1024xf32>
    %81 = arith.mulf %78, %80 : vector<8x1024xf32>
    %cst_18 = arith.constant 1.46280754 : f32
    %82 = vector.broadcast %cst_18 : f32 to vector<8x1024xf32>
    %83 = arith.mulf %82, %81 : vector<8x1024xf32>
    %84 = arith.addf %76, %83 : vector<8x1024xf32>
    %85 = vector.extract_strided_slice %5 {offsets = [7, 0, 0], sizes = [1, 8, 1024], strides = [1, 1, 1]} : vector<8x8x1024xf32> to vector<1x8x1024xf32>
    %86 = vector.shape_cast %85 : vector<1x8x1024xf32> to vector<8x1024xf32>
    %87 = vector.extract_strided_slice %5 {offsets = [7, 0, 0], sizes = [1, 8, 1024], strides = [1, 1, 1]} : vector<8x8x1024xf32> to vector<1x8x1024xf32>
    %88 = vector.shape_cast %87 : vector<1x8x1024xf32> to vector<8x1024xf32>
    %89 = arith.mulf %86, %88 : vector<8x1024xf32>
    %cst_19 = arith.constant -0.595528722 : f32
    %90 = vector.broadcast %cst_19 : f32 to vector<8x1024xf32>
    %91 = arith.mulf %90, %89 : vector<8x1024xf32>
    %92 = arith.addf %84, %91 : vector<8x1024xf32>
    %c0_i32 = arith.constant 0 : i32
    %93 = arith.cmpi eq, %arg2, %c0_i32 : i32
    %94 = arith.extui %93 : i1 to i32
    %c0_i32_20 = arith.constant 0 : i32
    %95 = arith.cmpi ne, %94, %c0_i32_20 : i32
    scf.if %95 {
      %c0_24 = arith.constant 0 : index
      %c0_25 = arith.constant 0 : index
      %c0_26 = arith.constant 0 : index
      %102 = vector.load %arg9[%c0_24, %c0_25, %c0_26] : memref<8x8x1024xf32, #tpu.memory_space<vmem>>, vector<8x8x1024xf32>
      tpu.vector_store %arg9[%c0_24, %c0_25, %c0_26], %5 {strides = array<i32>} : memref<8x8x1024xf32, #tpu.memory_space<vmem>>, vector<8x8x1024xf32>,
      %c0_27 = arith.constant 0 : index
      %c0_28 = arith.constant 0 : index
      %103 = vector.load %arg10[%c0_27, %c0_28] : memref<8x1024xf32, #tpu.memory_space<vmem>>, vector<8x1024xf32>
      tpu.vector_store %arg10[%c0_27, %c0_28], %92 {strides = array<i32>} : memref<8x1024xf32, #tpu.memory_space<vmem>>, vector<8x1024xf32>,
      %c0_29 = arith.constant 0 : index
      %c0_30 = arith.constant 0 : index
      %c0_31 = arith.constant 0 : index
      %104 = vector.load %arg11[%c0_29, %c0_30, %c0_31] : memref<4x8x1024xf32, #tpu.memory_space<vmem>>, vector<4x8x1024xf32>
      tpu.vector_store %arg11[%c0_29, %c0_30, %c0_31], %29 {strides = array<i32>} : memref<4x8x1024xf32, #tpu.memory_space<vmem>>, vector<4x8x1024xf32>,
      %cst_32 = arith.constant 2.82842709E-8 : f32
      %105 = vector.broadcast %cst_32 : f32 to vector<8x1024xf32>
      %106 = arith.addf %26, %105 : vector<8x1024xf32>
      %c0_33 = arith.constant 0 : index
      %c0_34 = arith.constant 0 : index
      %107 = vector.load %arg12[%c0_33, %c0_34] : memref<8x1024xf32, #tpu.memory_space<vmem>>, vector<8x1024xf32>
      tpu.vector_store %arg12[%c0_33, %c0_34], %106 {strides = array<i32>} : memref<8x1024xf32, #tpu.memory_space<vmem>>, vector<8x1024xf32>,
    } else {
    }
    %c0_i32_21 = arith.constant 0 : i32
    %96 = arith.cmpi sgt, %arg2, %c0_i32_21 : i32
    %97 = arith.extui %96 : i1 to i32
    %c0_i32_22 = arith.constant 0 : i32
    %98 = arith.cmpi ne, %97, %c0_i32_22 : i32
    scf.if %98 {
      %c0_24 = arith.constant 0 : index
      %c0_25 = arith.constant 0 : index
      %c0_26 = arith.constant 0 : index
      %102 = vector.load %arg9[%c0_24, %c0_25, %c0_26] : memref<8x8x1024xf32, #tpu.memory_space<vmem>>, vector<8x8x1024xf32>
      %103 = arith.addf %102, %5 : vector<8x8x1024xf32>
      %c0_27 = arith.constant 0 : index
      %c0_28 = arith.constant 0 : index
      %c0_29 = arith.constant 0 : index
      %104 = vector.load %arg9[%c0_27, %c0_28, %c0_29] : memref<8x8x1024xf32, #tpu.memory_space<vmem>>, vector<8x8x1024xf32>
      tpu.vector_store %arg9[%c0_27, %c0_28, %c0_29], %103 {strides = array<i32>} : memref<8x8x1024xf32, #tpu.memory_space<vmem>>, vector<8x8x1024xf32>,
      %c0_30 = arith.constant 0 : index
      %c0_31 = arith.constant 0 : index
      %105 = vector.load %arg10[%c0_30, %c0_31] : memref<8x1024xf32, #tpu.memory_space<vmem>>, vector<8x1024xf32>
      %106 = arith.addf %105, %92 : vector<8x1024xf32>
      %c0_32 = arith.constant 0 : index
      %c0_33 = arith.constant 0 : index
      %107 = vector.load %arg10[%c0_32, %c0_33] : memref<8x1024xf32, #tpu.memory_space<vmem>>, vector<8x1024xf32>
      tpu.vector_store %arg10[%c0_32, %c0_33], %106 {strides = array<i32>} : memref<8x1024xf32, #tpu.memory_space<vmem>>, vector<8x1024xf32>,
      %c0_34 = arith.constant 0 : index
      %c0_35 = arith.constant 0 : index
      %c0_36 = arith.constant 0 : index
      %108 = vector.load %arg11[%c0_34, %c0_35, %c0_36] : memref<4x8x1024xf32, #tpu.memory_space<vmem>>, vector<4x8x1024xf32>
      %109 = arith.addf %108, %29 : vector<4x8x1024xf32>
      %c0_37 = arith.constant 0 : index
      %c0_38 = arith.constant 0 : index
      %c0_39 = arith.constant 0 : index
      %110 = vector.load %arg11[%c0_37, %c0_38, %c0_39] : memref<4x8x1024xf32, #tpu.memory_space<vmem>>, vector<4x8x1024xf32>
      tpu.vector_store %arg11[%c0_37, %c0_38, %c0_39], %109 {strides = array<i32>} : memref<4x8x1024xf32, #tpu.memory_space<vmem>>, vector<4x8x1024xf32>,
      %c0_40 = arith.constant 0 : index
      %c0_41 = arith.constant 0 : index
      %111 = vector.load %arg12[%c0_40, %c0_41] : memref<8x1024xf32, #tpu.memory_space<vmem>>, vector<8x1024xf32>
      %112 = arith.addf %111, %26 : vector<8x1024xf32>
      %c0_42 = arith.constant 0 : index
      %c0_43 = arith.constant 0 : index
      %113 = vector.load %arg12[%c0_42, %c0_43] : memref<8x1024xf32, #tpu.memory_space<vmem>>, vector<8x1024xf32>
      tpu.vector_store %arg12[%c0_42, %c0_43], %112 {strides = array<i32>} : memref<8x1024xf32, #tpu.memory_space<vmem>>, vector<8x1024xf32>,
    } else {
    }
    %c1_i32 = arith.constant 1 : i32
    %99 = arith.cmpi eq, %arg2, %c1_i32 : i32
    %100 = arith.extui %99 : i1 to i32
    %c0_i32_23 = arith.constant 0 : i32
    %101 = arith.cmpi ne, %100, %c0_i32_23 : i32
    scf.if %101 {
      %c0_24 = arith.constant 0 : index
      %c0_25 = arith.constant 0 : index
      %102 = vector.load %arg12[%c0_24, %c0_25] : memref<8x1024xf32, #tpu.memory_space<vmem>>, vector<8x1024xf32>
      %103 = tpu.reciprocal %102 {approx = true} : vector<8x1024xf32> -> vector<8x1024xf32>
      %c0_26 = arith.constant 0 : index
      %c0_27 = arith.constant 0 : index
      %c0_28 = arith.constant 0 : index
      %104 = vector.load %arg11[%c0_26, %c0_27, %c0_28] : memref<4x8x1024xf32, #tpu.memory_space<vmem>>, vector<1x8x1024xf32>
      %105 = vector.shape_cast %104 : vector<1x8x1024xf32> to vector<8x1024xf32>
      %cst_29 = arith.constant 1.29563594 : f32
      %106 = vector.broadcast %cst_29 : f32 to vector<8x1024xf32>
      %107 = arith.mulf %106, %105 : vector<8x1024xf32>
      %c1 = arith.constant 1 : index
      %c0_30 = arith.constant 0 : index
      %c0_31 = arith.constant 0 : index
      %108 = vector.load %arg11[%c1, %c0_30, %c0_31] : memref<4x8x1024xf32, #tpu.memory_space<vmem>>, vector<1x8x1024xf32>
      %109 = vector.shape_cast %108 : vector<1x8x1024xf32> to vector<8x1024xf32>
      %cst_32 = arith.constant 1.35501051 : f32
      %110 = vector.broadcast %cst_32 : f32 to vector<8x1024xf32>
      %111 = arith.mulf %110, %109 : vector<8x1024xf32>
      %112 = arith.addf %107, %111 : vector<8x1024xf32>
      %c2 = arith.constant 2 : index
      %c0_33 = arith.constant 0 : index
      %c0_34 = arith.constant 0 : index
      %113 = vector.load %arg11[%c2, %c0_33, %c0_34] : memref<4x8x1024xf32, #tpu.memory_space<vmem>>, vector<1x8x1024xf32>
      %114 = vector.shape_cast %113 : vector<1x8x1024xf32> to vector<8x1024xf32>
      %cst_35 = arith.constant -0.409605563 : f32
      %115 = vector.broadcast %cst_35 : f32 to vector<8x1024xf32>
      %116 = arith.mulf %115, %114 : vector<8x1024xf32>
      %117 = arith.addf %112, %116 : vector<8x1024xf32>
      %c3 = arith.constant 3 : index
      %c0_36 = arith.constant 0 : index
      %c0_37 = arith.constant 0 : index
      %118 = vector.load %arg11[%c3, %c0_36, %c0_37] : memref<4x8x1024xf32, #tpu.memory_space<vmem>>, vector<1x8x1024xf32>
      %119 = vector.shape_cast %118 : vector<1x8x1024xf32> to vector<8x1024xf32>
      %cst_38 = arith.constant -0.771885454 : f32
      %120 = vector.broadcast %cst_38 : f32 to vector<8x1024xf32>
      %121 = arith.mulf %120, %119 : vector<8x1024xf32>
      %122 = arith.addf %117, %121 : vector<8x1024xf32>
      %123 = arith.mulf %122, %103 : vector<8x1024xf32>
      %124 = vector.extract_strided_slice %1 {offsets = [0, 0], sizes = [1, 1024], strides = [1, 1]} : vector<8x1024xf32> to vector<1x1024xf32>
      %125 = arith.mulf %124, %124 : vector<1x1024xf32>
      %cst_39 = arith.constant -0.621943593 : f32
      %126 = vector.broadcast %cst_39 : f32 to vector<1x1024xf32>
      %127 = arith.mulf %126, %125 : vector<1x1024xf32>
      %c0_40 = arith.constant 0 : index
      %c0_41 = arith.constant 0 : index
      %c0_42 = arith.constant 0 : index
      %128 = vector.load %arg9[%c0_40, %c0_41, %c0_42] : memref<8x8x1024xf32, #tpu.memory_space<vmem>>, vector<1x8x1024xf32>
      %129 = vector.shape_cast %128 : vector<1x8x1024xf32> to vector<8x1024xf32>
      %130 = vector.broadcast %124 : vector<1x1024xf32> to vector<8x1024xf32>
      %131 = arith.addf %129, %130 : vector<8x1024xf32>
      %cst_43 = arith.constant 0.333333343 : f32
      %132 = vector.broadcast %cst_43 : f32 to vector<8x1024xf32>
      %133 = arith.mulf %131, %132 : vector<8x1024xf32>
      %134 = arith.mulf %133, %133 : vector<8x1024xf32>
      %cst_44 = arith.constant -0.621943593 : f32
      %135 = vector.broadcast %cst_44 : f32 to vector<8x1024xf32>
      %136 = arith.mulf %135, %134 : vector<8x1024xf32>
      %137 = vector.extract_strided_slice %1 {offsets = [1, 0], sizes = [1, 1024], strides = [1, 1]} : vector<8x1024xf32> to vector<1x1024xf32>
      %138 = arith.mulf %137, %137 : vector<1x1024xf32>
      %cst_45 = arith.constant 0.624804079 : f32
      %139 = vector.broadcast %cst_45 : f32 to vector<1x1024xf32>
      %140 = arith.mulf %139, %138 : vector<1x1024xf32>
      %141 = arith.addf %127, %140 : vector<1x1024xf32>
      %c1_46 = arith.constant 1 : index
      %c0_47 = arith.constant 0 : index
      %c0_48 = arith.constant 0 : index
      %142 = vector.load %arg9[%c1_46, %c0_47, %c0_48] : memref<8x8x1024xf32, #tpu.memory_space<vmem>>, vector<1x8x1024xf32>
      %143 = vector.shape_cast %142 : vector<1x8x1024xf32> to vector<8x1024xf32>
      %144 = vector.broadcast %137 : vector<1x1024xf32> to vector<8x1024xf32>
      %145 = arith.addf %143, %144 : vector<8x1024xf32>
      %cst_49 = arith.constant 0.333333343 : f32
      %146 = vector.broadcast %cst_49 : f32 to vector<8x1024xf32>
      %147 = arith.mulf %145, %146 : vector<8x1024xf32>
      %148 = arith.mulf %147, %147 : vector<8x1024xf32>
      %cst_50 = arith.constant 0.624804079 : f32
      %149 = vector.broadcast %cst_50 : f32 to vector<8x1024xf32>
      %150 = arith.mulf %149, %148 : vector<8x1024xf32>
      %151 = arith.addf %136, %150 : vector<8x1024xf32>
      %152 = vector.extract_strided_slice %1 {offsets = [2, 0], sizes = [1, 1024], strides = [1, 1]} : vector<8x1024xf32> to vector<1x1024xf32>
      %153 = arith.mulf %152, %152 : vector<1x1024xf32>
      %cst_51 = arith.constant 1.68207753 : f32
      %154 = vector.broadcast %cst_51 : f32 to vector<1x1024xf32>
      %155 = arith.mulf %154, %153 : vector<1x1024xf32>
      %156 = arith.addf %141, %155 : vector<1x1024xf32>
      %c2_52 = arith.constant 2 : index
      %c0_53 = arith.constant 0 : index
      %c0_54 = arith.constant 0 : index
      %157 = vector.load %arg9[%c2_52, %c0_53, %c0_54] : memref<8x8x1024xf32, #tpu.memory_space<vmem>>, vector<1x8x1024xf32>
      %158 = vector.shape_cast %157 : vector<1x8x1024xf32> to vector<8x1024xf32>
      %159 = vector.broadcast %152 : vector<1x1024xf32> to vector<8x1024xf32>
      %160 = arith.addf %158, %159 : vector<8x1024xf32>
      %cst_55 = arith.constant 0.333333343 : f32
      %161 = vector.broadcast %cst_55 : f32 to vector<8x1024xf32>
      %162 = arith.mulf %160, %161 : vector<8x1024xf32>
      %163 = arith.mulf %162, %162 : vector<8x1024xf32>
      %cst_56 = arith.constant 1.68207753 : f32
      %164 = vector.broadcast %cst_56 : f32 to vector<8x1024xf32>
      %165 = arith.mulf %164, %163 : vector<8x1024xf32>
      %166 = arith.addf %151, %165 : vector<8x1024xf32>
      %167 = vector.extract_strided_slice %1 {offsets = [3, 0], sizes = [1, 1024], strides = [1, 1]} : vector<8x1024xf32> to vector<1x1024xf32>
      %168 = arith.mulf %167, %167 : vector<1x1024xf32>
      %cst_57 = arith.constant -0.808012783 : f32
      %169 = vector.broadcast %cst_57 : f32 to vector<1x1024xf32>
      %170 = arith.mulf %169, %168 : vector<1x1024xf32>
      %171 = arith.addf %156, %170 : vector<1x1024xf32>
      %c3_58 = arith.constant 3 : index
      %c0_59 = arith.constant 0 : index
      %c0_60 = arith.constant 0 : index
      %172 = vector.load %arg9[%c3_58, %c0_59, %c0_60] : memref<8x8x1024xf32, #tpu.memory_space<vmem>>, vector<1x8x1024xf32>
      %173 = vector.shape_cast %172 : vector<1x8x1024xf32> to vector<8x1024xf32>
      %174 = vector.broadcast %167 : vector<1x1024xf32> to vector<8x1024xf32>
      %175 = arith.addf %173, %174 : vector<8x1024xf32>
      %cst_61 = arith.constant 0.333333343 : f32
      %176 = vector.broadcast %cst_61 : f32 to vector<8x1024xf32>
      %177 = arith.mulf %175, %176 : vector<8x1024xf32>
      %178 = arith.mulf %177, %177 : vector<8x1024xf32>
      %cst_62 = arith.constant -0.808012783 : f32
      %179 = vector.broadcast %cst_62 : f32 to vector<8x1024xf32>
      %180 = arith.mulf %179, %178 : vector<8x1024xf32>
      %181 = arith.addf %166, %180 : vector<8x1024xf32>
      %182 = vector.extract_strided_slice %1 {offsets = [4, 0], sizes = [1, 1024], strides = [1, 1]} : vector<8x1024xf32> to vector<1x1024xf32>
      %183 = arith.mulf %182, %182 : vector<1x1024xf32>
      %cst_63 = arith.constant -2.36621785 : f32
      %184 = vector.broadcast %cst_63 : f32 to vector<1x1024xf32>
      %185 = arith.mulf %184, %183 : vector<1x1024xf32>
      %186 = arith.addf %171, %185 : vector<1x1024xf32>
      %c4 = arith.constant 4 : index
      %c0_64 = arith.constant 0 : index
      %c0_65 = arith.constant 0 : index
      %187 = vector.load %arg9[%c4, %c0_64, %c0_65] : memref<8x8x1024xf32, #tpu.memory_space<vmem>>, vector<1x8x1024xf32>
      %188 = vector.shape_cast %187 : vector<1x8x1024xf32> to vector<8x1024xf32>
      %189 = vector.broadcast %182 : vector<1x1024xf32> to vector<8x1024xf32>
      %190 = arith.addf %188, %189 : vector<8x1024xf32>
      %cst_66 = arith.constant 0.333333343 : f32
      %191 = vector.broadcast %cst_66 : f32 to vector<8x1024xf32>
      %192 = arith.mulf %190, %191 : vector<8x1024xf32>
      %193 = arith.mulf %192, %192 : vector<8x1024xf32>
      %cst_67 = arith.constant -2.36621785 : f32
      %194 = vector.broadcast %cst_67 : f32 to vector<8x1024xf32>
      %195 = arith.mulf %194, %193 : vector<8x1024xf32>
      %196 = arith.addf %181, %195 : vector<8x1024xf32>
      %197 = vector.extract_strided_slice %1 {offsets = [5, 0], sizes = [1, 1024], strides = [1, 1]} : vector<8x1024xf32> to vector<1x1024xf32>
      %198 = arith.mulf %197, %197 : vector<1x1024xf32>
      %cst_68 = arith.constant 0.895946323 : f32
      %199 = vector.broadcast %cst_68 : f32 to vector<1x1024xf32>
      %200 = arith.mulf %199, %198 : vector<1x1024xf32>
      %201 = arith.addf %186, %200 : vector<1x1024xf32>
      %c5 = arith.constant 5 : index
      %c0_69 = arith.constant 0 : index
      %c0_70 = arith.constant 0 : index
      %202 = vector.load %arg9[%c5, %c0_69, %c0_70] : memref<8x8x1024xf32, #tpu.memory_space<vmem>>, vector<1x8x1024xf32>
      %203 = vector.shape_cast %202 : vector<1x8x1024xf32> to vector<8x1024xf32>
      %204 = vector.broadcast %197 : vector<1x1024xf32> to vector<8x1024xf32>
      %205 = arith.addf %203, %204 : vector<8x1024xf32>
      %cst_71 = arith.constant 0.333333343 : f32
      %206 = vector.broadcast %cst_71 : f32 to vector<8x1024xf32>
      %207 = arith.mulf %205, %206 : vector<8x1024xf32>
      %208 = arith.mulf %207, %207 : vector<8x1024xf32>
      %cst_72 = arith.constant 0.895946323 : f32
      %209 = vector.broadcast %cst_72 : f32 to vector<8x1024xf32>
      %210 = arith.mulf %209, %208 : vector<8x1024xf32>
      %211 = arith.addf %196, %210 : vector<8x1024xf32>
      %212 = vector.extract_strided_slice %1 {offsets = [6, 0], sizes = [1, 1024], strides = [1, 1]} : vector<8x1024xf32> to vector<1x1024xf32>
      %213 = arith.mulf %212, %212 : vector<1x1024xf32>
      %cst_73 = arith.constant 1.46280754 : f32
      %214 = vector.broadcast %cst_73 : f32 to vector<1x1024xf32>
      %215 = arith.mulf %214, %213 : vector<1x1024xf32>
      %216 = arith.addf %201, %215 : vector<1x1024xf32>
      %c6 = arith.constant 6 : index
      %c0_74 = arith.constant 0 : index
      %c0_75 = arith.constant 0 : index
      %217 = vector.load %arg9[%c6, %c0_74, %c0_75] : memref<8x8x1024xf32, #tpu.memory_space<vmem>>, vector<1x8x1024xf32>
      %218 = vector.shape_cast %217 : vector<1x8x1024xf32> to vector<8x1024xf32>
      %219 = vector.broadcast %212 : vector<1x1024xf32> to vector<8x1024xf32>
      %220 = arith.addf %218, %219 : vector<8x1024xf32>
      %cst_76 = arith.constant 0.333333343 : f32
      %221 = vector.broadcast %cst_76 : f32 to vector<8x1024xf32>
      %222 = arith.mulf %220, %221 : vector<8x1024xf32>
      %223 = arith.mulf %222, %222 : vector<8x1024xf32>
      %cst_77 = arith.constant 1.46280754 : f32
      %224 = vector.broadcast %cst_77 : f32 to vector<8x1024xf32>
      %225 = arith.mulf %224, %223 : vector<8x1024xf32>
      %226 = arith.addf %211, %225 : vector<8x1024xf32>
      %227 = vector.extract_strided_slice %1 {offsets = [7, 0], sizes = [1, 1024], strides = [1, 1]} : vector<8x1024xf32> to vector<1x1024xf32>
      %228 = arith.mulf %227, %227 : vector<1x1024xf32>
      %cst_78 = arith.constant -0.595528722 : f32
      %229 = vector.broadcast %cst_78 : f32 to vector<1x1024xf32>
      %230 = arith.mulf %229, %228 : vector<1x1024xf32>
      %231 = arith.addf %216, %230 : vector<1x1024xf32>
      %c7 = arith.constant 7 : index
      %c0_79 = arith.constant 0 : index
      %c0_80 = arith.constant 0 : index
      %232 = vector.load %arg9[%c7, %c0_79, %c0_80] : memref<8x8x1024xf32, #tpu.memory_space<vmem>>, vector<1x8x1024xf32>
      %233 = vector.shape_cast %232 : vector<1x8x1024xf32> to vector<8x1024xf32>
      %234 = vector.broadcast %227 : vector<1x1024xf32> to vector<8x1024xf32>
      %235 = arith.addf %233, %234 : vector<8x1024xf32>
      %cst_81 = arith.constant 0.333333343 : f32
      %236 = vector.broadcast %cst_81 : f32 to vector<8x1024xf32>
      %237 = arith.mulf %235, %236 : vector<8x1024xf32>
      %238 = arith.mulf %237, %237 : vector<8x1024xf32>
      %cst_82 = arith.constant -0.595528722 : f32
      %239 = vector.broadcast %cst_82 : f32 to vector<8x1024xf32>
      %240 = arith.mulf %239, %238 : vector<8x1024xf32>
      %241 = arith.addf %226, %240 : vector<8x1024xf32>
      %c0_83 = arith.constant 0 : index
      %c0_84 = arith.constant 0 : index
      %242 = vector.load %arg10[%c0_83, %c0_84] : memref<8x1024xf32, #tpu.memory_space<vmem>>, vector<8x1024xf32>
      %243 = vector.broadcast %231 : vector<1x1024xf32> to vector<8x1024xf32>
      %244 = arith.addf %242, %243 : vector<8x1024xf32>
      %cst_85 = arith.constant 0.333333343 : f32
      %245 = vector.broadcast %cst_85 : f32 to vector<8x1024xf32>
      %246 = arith.mulf %244, %245 : vector<8x1024xf32>
      %247 = arith.subf %246, %241 : vector<8x1024xf32>
      %cst_86 = arith.constant dense<0xFF800000> : vector<1024xf32>
      %248 = vector.multi_reduction <maximumf>, %123, %cst_86 [0] : vector<8x1024xf32> to vector<1024xf32>
      %cst_87 = arith.constant 0xFF800000 : f32
      %249 = vector.broadcast %cst_87 : f32 to vector<1024xf32>
      %250 = arith.maximumf %249, %248 : vector<1024xf32>
      %251 = vector.shape_cast %250 : vector<1024xf32> to vector<1x1024xf32>
      %252 = vector.broadcast %251 : vector<1x1024xf32> to vector<8x1024xf32>
      %253 = arith.subf %123, %252 : vector<8x1024xf32>
      %254 = math.exp %253 : vector<8x1024xf32>
      %cst_88 = arith.constant dense<0.000000e+00> : vector<1024xf32>
      %255 = vector.multi_reduction <add>, %254, %cst_88 [0] : vector<8x1024xf32> to vector<1024xf32>
      %256 = vector.shape_cast %255 : vector<1024xf32> to vector<1x1024xf32>
      %257 = vector.broadcast %256 : vector<1x1024xf32> to vector<8x1024xf32>
      %258 = arith.divf %254, %257 : vector<8x1024xf32>
      %cst_89 = arith.constant dense<0xFF800000> : vector<1024xf32>
      %259 = vector.multi_reduction <maximumf>, %247, %cst_89 [0] : vector<8x1024xf32> to vector<1024xf32>
      %cst_90 = arith.constant 0xFF800000 : f32
      %260 = vector.broadcast %cst_90 : f32 to vector<1024xf32>
      %261 = arith.maximumf %260, %259 : vector<1024xf32>
      %262 = vector.shape_cast %261 : vector<1024xf32> to vector<1x1024xf32>
      %263 = vector.broadcast %262 : vector<1x1024xf32> to vector<8x1024xf32>
      %264 = arith.subf %247, %263 : vector<8x1024xf32>
      %265 = math.exp %264 : vector<8x1024xf32>
      %cst_91 = arith.constant dense<0.000000e+00> : vector<1024xf32>
      %266 = vector.multi_reduction <add>, %265, %cst_91 [0] : vector<8x1024xf32> to vector<1024xf32>
      %267 = vector.shape_cast %266 : vector<1024xf32> to vector<1x1024xf32>
      %268 = vector.broadcast %267 : vector<1x1024xf32> to vector<8x1024xf32>
      %269 = arith.divf %265, %268 : vector<8x1024xf32>
      %c0_92 = arith.constant 0 : index
      %c0_93 = arith.constant 0 : index
      %c0_94 = arith.constant 0 : index
      %270 = vector.load %arg6[%c0_92, %c0_93, %c0_94] : memref<1x1x1024xf32, #tpu.memory_space<vmem>>, vector<1x1x1024xf32>
      %271 = vector.shape_cast %270 : vector<1x1x1024xf32> to vector<1x1024xf32>
      %cst_95 = arith.constant 1.000000e+00 : f32
      %272 = vector.broadcast %cst_95 : f32 to vector<1x1024xf32>
      %273 = arith.subf %272, %271 : vector<1x1024xf32>
      %274 = vector.broadcast %273 : vector<1x1024xf32> to vector<8x1024xf32>
      %275 = arith.mulf %274, %258 : vector<8x1024xf32>
      %276 = vector.broadcast %271 : vector<1x1024xf32> to vector<8x1024xf32>
      %277 = arith.mulf %276, %269 : vector<8x1024xf32>
      %278 = arith.addf %275, %277 : vector<8x1024xf32>
      %c0_96 = arith.constant 0 : index
      %c0_97 = arith.constant 0 : index
      %c0_98 = arith.constant 0 : index
      %279 = vector.load %arg5[%c0_96, %c0_97, %c0_98] : memref<1x8x1xf32, #tpu.memory_space<vmem>>, vector<1x8x1xf32>
      %280 = vector.shape_cast %279 : vector<1x8x1xf32> to vector<8x1xf32>
      %cst_99 = arith.constant dense<0xFF800000> : vector<1024xf32>
      %281 = vector.multi_reduction <maximumf>, %278, %cst_99 [0] : vector<8x1024xf32> to vector<1024xf32>
      %282 = vector.shape_cast %281 : vector<1024xf32> to vector<1x1024xf32>
      %283 = tpu.iota {dimensions = array<i32: 0>} : vector<8x1024xi32>
      %284 = vector.broadcast %282 : vector<1x1024xf32> to vector<8x1024xf32>
      %285 = arith.cmpf oeq, %278, %284 : vector<8x1024xf32>
      %c8_i32 = arith.constant 8 : i32
      %286 = vector.broadcast %c8_i32 : i32 to vector<8x1024xi32>
      %287 = arith.select %285, %283, %286 : vector<8x1024xi1>, vector<8x1024xi32>
      %cst_100 = arith.constant dense<2147483647> : vector<1024xi32>
      %288 = vector.multi_reduction <minsi>, %287, %cst_100 [0] : vector<8x1024xi32> to vector<1024xi32>
      %289 = vector.shape_cast %288 : vector<1024xi32> to vector<1x1024xi32>
      %290 = vector.broadcast %289 : vector<1x1024xi32> to vector<8x1024xi32>
      %291 = arith.cmpi eq, %283, %290 : vector<8x1024xi32>
      %cst_101 = arith.constant 0.000000e+00 : f32
      %292 = vector.shape_cast %280 : vector<8x1xf32> to vector<8x1xf32>
      %293 = vector.broadcast %292 : vector<8x1xf32> to vector<8x1024xf32>
      %294 = vector.broadcast %cst_101 : f32 to vector<8x1024xf32>
      %295 = arith.select %291, %293, %294 : vector<8x1024xi1>, vector<8x1024xf32>
      %cst_102 = arith.constant dense<0.000000e+00> : vector<1024xf32>
      %296 = vector.multi_reduction <add>, %295, %cst_102 [0] : vector<8x1024xf32> to vector<1024xf32>
      %297 = vector.shape_cast %296 : vector<1024xf32> to vector<1x1024xf32>
      %cst_103 = arith.constant dense<0xFF800000> : vector<1024xf32>
      %298 = vector.multi_reduction <maximumf>, %269, %cst_103 [0] : vector<8x1024xf32> to vector<1024xf32>
      %299 = vector.shape_cast %298 : vector<1024xf32> to vector<1x1024xf32>
      %cst_104 = arith.constant dense<0xFF800000> : vector<1024xf32>
      %300 = vector.multi_reduction <maximumf>, %258, %cst_104 [0] : vector<8x1024xf32> to vector<1024xf32>
      %301 = vector.shape_cast %300 : vector<1024xf32> to vector<1x1024xf32>
      %302 = vector.extract_strided_slice %280 {offsets = [2, 0], sizes = [1, 1], strides = [1, 1]} : vector<8x1xf32> to vector<1x1xf32>
      %cst_105 = arith.constant 1.000000e+00 : f32
      %303 = vector.broadcast %cst_105 : f32 to vector<1x1xf32>
      %304 = arith.divf %303, %302 : vector<1x1xf32>
      %305 = vector.extract_strided_slice %280 {offsets = [1, 0], sizes = [1, 1], strides = [1, 1]} : vector<8x1xf32> to vector<1x1xf32>
      %cst_106 = arith.constant 1.000000e+00 : f32
      %306 = vector.broadcast %cst_106 : f32 to vector<1x1xf32>
      %307 = arith.divf %306, %305 : vector<1x1xf32>
      %308 = arith.subf %304, %307 : vector<1x1xf32>
      %cst_107 = arith.constant 0.000000e+00 : f32
      %309 = vector.broadcast %cst_107 : f32 to vector<1x1024xf32>
      %310 = vector.broadcast %308 : vector<1x1xf32> to vector<1x1024xf32>
      %311 = arith.addf %310, %309 : vector<1x1024xf32>
      %cst_108 = arith.constant 1.000000e+00 : f32
      %312 = vector.broadcast %cst_108 : f32 to vector<1x1024xf32>
      %313 = arith.divf %312, %297 : vector<1x1024xf32>
      %cst_109 = arith.constant 5.000000e-01 : f32
      %314 = vector.broadcast %cst_109 : f32 to vector<1x1024xf32>
      %315 = arith.mulf %314, %311 : vector<1x1024xf32>
      %316 = arith.addf %313, %315 : vector<1x1024xf32>
      %cst_110 = arith.constant 5.000000e-01 : f32
      %317 = vector.broadcast %cst_110 : f32 to vector<1x1024xf32>
      %318 = arith.mulf %317, %311 : vector<1x1024xf32>
      %319 = arith.subf %313, %318 : vector<1x1024xf32>
      %cst_111 = arith.constant 0.000000e+00 : f32
      %320 = vector.broadcast %cst_111 : f32 to vector<1x1024xf32>
      %321 = tpu.concatenate %297, %282, %299, %301, %311, %316, %319, %320 in 0 : vector<1x1024xf32>, vector<1x1024xf32>, vector<1x1024xf32>, vector<1x1024xf32>, vector<1x1024xf32>, vector<1x1024xf32>, vector<1x1024xf32>, vector<1x1024xf32> -> vector<8x1024xf32>
      %c0_112 = arith.constant 0 : index
      %c0_113 = arith.constant 0 : index
      %c0_114 = arith.constant 0 : index
      %322 = vector.load %arg7[%c0_112, %c0_113, %c0_114] : memref<1x8x1024xf32, #tpu.memory_space<vmem>>, vector<1x8x1024xf32>
      %323 = vector.shape_cast %322 : vector<1x8x1024xf32> to vector<8x1024xf32>
      %324 = vector.shape_cast %321 : vector<8x1024xf32> to vector<1x8x1024xf32>
      tpu.vector_store %arg7[%c0_112, %c0_113, %c0_114], %324 {strides = array<i32>} : memref<1x8x1024xf32, #tpu.memory_space<vmem>>, vector<1x8x1024xf32>,
      %c0_115 = arith.constant 0 : index
      %c0_116 = arith.constant 0 : index
      %c0_117 = arith.constant 0 : index
      %325 = vector.load %arg8[%c0_115, %c0_116, %c0_117] : memref<1x8x1024xf32, #tpu.memory_space<vmem>>, vector<1x8x1024xf32>
      %326 = vector.shape_cast %325 : vector<1x8x1024xf32> to vector<8x1024xf32>
      %327 = vector.shape_cast %278 : vector<8x1024xf32> to vector<1x8x1024xf32>
      tpu.vector_store %arg8[%c0_115, %c0_116, %c0_117], %327 {strides = array<i32>} : memref<1x8x1024xf32, #tpu.memory_space<vmem>>, vector<1x8x1024xf32>,
    } else {
    }
    return
  }
  func.func @transform_0(%arg0: i32, %arg1: i32, %arg2: i32) -> (i32, i32, i32) {
    %c0_i32 = arith.constant 0 : i32
    %c0_i32_0 = arith.constant 0 : i32
    return %arg0, %c0_i32, %arg1 : i32, i32, i32
  }
  func.func @transform_1(%arg0: i32, %arg1: i32, %arg2: i32) -> (i32, i32, i32, i32) {
    %c0_i32 = arith.constant 0 : i32
    %c0_i32_0 = arith.constant 0 : i32
    return %arg2, %arg0, %c0_i32, %arg1 : i32, i32, i32, i32
  }
  func.func @transform_2(%arg0: i32, %arg1: i32, %arg2: i32) -> (i32, i32, i32) {
    %c0_i32 = arith.constant 0 : i32
    %c0_i32_0 = arith.constant 0 : i32
    %c0_i32_1 = arith.constant 0 : i32
    return %arg0, %c0_i32, %c0_i32_0 : i32, i32, i32
  }
  func.func @transform_3(%arg0: i32, %arg1: i32, %arg2: i32) -> (i32, i32, i32) {
    %c0_i32 = arith.constant 0 : i32
    %c0_i32_0 = arith.constant 0 : i32
    return %arg0, %c0_i32, %arg1 : i32, i32, i32
  }
  func.func @transform_4(%arg0: i32, %arg1: i32, %arg2: i32) -> (i32, i32, i32) {
    %c0_i32 = arith.constant 0 : i32
    %c0_i32_0 = arith.constant 0 : i32
    return %arg0, %c0_i32, %arg1 : i32, i32, i32
  }
  func.func @transform_5(%arg0: i32, %arg1: i32, %arg2: i32) -> (i32, i32, i32) {
    %c0_i32 = arith.constant 0 : i32
    %c0_i32_0 = arith.constant 0 : i32
    return %arg0, %c0_i32, %arg1 : i32, i32, i32
  }
}

</mosaic_0001>

<llo_original>
// kernel: tpu_custom_call.1
$region0: #{tpu_custom_call.1}
  #allocation0 [shape = 'u32[]', space=smem, size = 0x4, offset = 0x4, fixed_abs, tag = 'smem constant byte address 0x4 - core index']
  #allocation1 [shape = 'u32[144,128]{1,0:T(1,128)}', space=vmem, size = 0x12000, scoped, tag = 'internal scratch']
  #allocation2 [shape = 'f32[8,8,1024]{2,1,0:T(8,128)}', space=vmem, size = 0x40000, scoped, tag = 'scratch operand']
  #allocation3 [shape = 'f32[8,1024]{1,0:T(8,128)}', space=vmem, size = 0x8000, scoped, tag = 'scratch operand']
  #allocation4 [shape = 'f32[4,8,1024]{2,1,0:T(8,128)}', space=vmem, size = 0x20000, scoped, tag = 'scratch operand']
  #allocation5 [shape = 'f32[8,1024]{1,0:T(8,128)}', space=vmem, size = 0x8000, scoped, tag = 'scratch operand']
  %s0 = inlined_call_operand.hbm [shape: f32[2,8,1024], index: 0, kind: input, shape index: {}]
  %s1 = inlined_call_operand.hbm [shape: bf16[2,2,64,1024], index: 1, kind: input, shape index: {}]
  %s2 = inlined_call_operand.vmem [shape: f32[2,8,1], index: 2, kind: input, shape index: {}]
  %s3 = inlined_call_operand.vmem [shape: f32[2,1,1024], index: 3, kind: input, shape index: {}]
  %s4 = inlined_call_operand.hbm [shape: f32[2,8,1024], index: 4, kind: output, shape index: {0}]
  %s5 = inlined_call_operand.hbm [shape: f32[2,8,1024], index: 5, kind: output, shape index: {1}]
  %6 = xla_tuple %s4, %s5
  %s7 = sld [smem:[#allocation0]]
  $region77: #{tpu_custom_call.1} parent=0
    _
  %s9 = ssub.s32 1, %s7
  %s10 = scalar_select 0, %s9, %s7
  $region1: #{tpu_custom_call.1} parent=0
    #allocation6 [shape = 'u8[65536]{0}', space=vmem, size = 0x10000, scoped, tag = 'input window, operand 0']
    #allocation7 [shape = 's32[2]{0}', space=sflag, size = 0x8, scoped, tag = 'scoped memory for tpu_custom_call.1']
    #allocation8 [shape = 's32[2]{0}', space=sflag, size = 0x8, scoped, tag = 'scoped memory for tpu_custom_call.1']
    #allocation9 [shape = 'u8[262144]{0}', space=vmem, size = 0x40000, scoped, tag = 'input window, operand 1']
    #allocation10 [shape = 's32[2]{0}', space=sflag, size = 0x8, scoped, tag = 'scoped memory for tpu_custom_call.1']
    #allocation11 [shape = 'u8[65536]{0}', space=vmem, size = 0x10000, scoped, tag = 'output window, operand 0']
    #allocation12 [shape = 'u8[65536]{0}', space=vmem, size = 0x10000, scoped, tag = 'output window, operand 1']
    #allocation13 [shape = 's32[2]{0}', space=sflag, size = 0x8, scoped, tag = 'scoped memory for tpu_custom_call.1']
    %11 = vsyncpa [#allocation7], 0
    %s12 = scalar_lea.sflag [#allocation7], 1
    %13 = vsyncpa %s12, 0
    %14 = vsyncpa [#allocation10], 0
    %s15 = scalar_lea.sflag [#allocation10], 1
    %16 = vsyncpa %s15, 0
    %17 = vsyncpa [#allocation8], 0
    %s18 = scalar_lea.sflag [#allocation8], 1
    %19 = vsyncpa %s18, 0
    %20 = vsyncpa [#allocation13], 0
    %s21 = scalar_lea.sflag [#allocation13], 1
    %22 = vsyncpa %s21, 0
    loop: start=0, step=1, limit=6
    $region2: #{tpu_custom_call.1} parent=1 // loop_pre_header
      _
    $region3: #{tpu_custom_call.1} parent=1 // loop_header
      %s24 = sphi 0, %s28
      %p25 = scmp.ge.s32.totalorder %s24, 6
      %s31 = sphi 0, %s50
      %s32 = sphi 0, %s46
      %s33 = sphi 0, %s42
      %s34 = sphi 0, %s31
      %s35 = sphi 0, %s32
      %s36 = sphi 0, %s33
      %s37 = sphi 0, %s34
      %s38 = sphi 0, %s35
      %s39 = sphi 0, %s36
      %s55 = sphi 0, %s57
      %s58 = sphi 0, %s55
      %s59 = sphi 0, %s58
      %s75 = sphi 0, %s59
      %s85 = sphi 0, %s87
      %s88 = sphi 0, %s85
      %s89 = sphi 0, %s88
      %s105 = sphi 0, %s89
      %s111 = sphi 0, %s113
      %s114 = sphi 0, %s111
      %s115 = sphi 0, %s114
      %s131 = sphi 0, %s115
      %s139 = sphi 0, %s141
      %s142 = sphi 0, %s139
      %s143 = sphi 0, %s142
      %s159 = sphi 0, %s143
      %s167 = sphi 0, %s169
      %s170 = sphi 0, %s167
      %s171 = sphi 0, %s170
      %s187 = sphi 0, %s171
      %s195 = sphi 0, %s197
      %s198 = sphi 0, %s195
      %s199 = sphi 0, %s198
      %s215 = sphi 0, %s199
    $region4: #{tpu_custom_call.1} parent=1 // loop_header_branch
      %27 = sbr.rel (%p25) target = $region8
    $region5: #{tpu_custom_call.1} parent=1 // loop_body
      %s29 = ssub.s32 %s24, 1
      %s30 = ssub.s32 %s24, 2
      %s40 = sadd.s32 1, %s33
      %p41 = scmp.ge.s32.totalorder %s40, 2
      %s42 = scalar_select %p41, 0, %s40
      %s43 = sadd.s32 1, %s32
      %s44 = scalar_select %p41, %s43, %s32
      %p45 = scmp.ge.s32.totalorder %s44, 1
      %s46 = scalar_select %p45, 0, %s44
      %s47 = sadd.s32 1, %s31
      %s48 = scalar_select %p45, %s47, %s31
      %p49 = scmp.ge.s32.totalorder %s48, 2
      %s50 = scalar_select %p49, 0, %s48
      %s51 = ssub.s32 %s31, %s50
      %s52 = ssub.s32 %s32, %s46
      %s53 = sor.u32 %s51, %s52
      %p54 = scmp.eq.s32.totalorder %s53, 0
      %s56 = sadd.s32 %s55, 1
      %s57 = scalar_select %p54, %s55, %s56
      %p60 = pneg %p54
      %p61 = scmp.eq.s32.totalorder %s24, 3
      %p62 = por %p60, %p61
      %p63 = scmp.ne.s32.totalorder %s55, %s58
      %p64 = scmp.eq.s32.totalorder %s24, 0
      %p65 = por %p63, %p64
      %p66 = scmp.ne.s32.totalorder %s55, %s58
      %p67 = scmp.eq.s32.totalorder %s29, 3
      %p68 = por %p66, %p67
      %p69 = scmp.ne.s32.totalorder %s58, %s59
      %p70 = scmp.eq.s32.totalorder %s29, 0
      %p71 = por %p69, %p70
      %p72 = scmp.ne.s32.totalorder %s58, %s59
      %p73 = scmp.eq.s32.totalorder %s30, 3
      %p74 = por %p72, %p73
      %p76 = scmp.ne.s32.totalorder %s59, %s75
      %p77 = scmp.eq.s32.totalorder %s30, 0
      %p78 = por %p76, %p77
      %s79 = ssub.s32 %s33, %s42
      %s80 = ssub.s32 %s31, %s50
      %s81 = sor.u32 %s79, %s80
      %s82 = ssub.s32 %s32, %s46
      %s83 = sor.u32 %s81, %s82
      %p84 = scmp.eq.s32.totalorder %s83, 0
      %s86 = sadd.s32 %s85, 1
      %s87 = scalar_select %p84, %s85, %s86
      %p90 = pneg %p84
      %p91 = scmp.eq.s32.totalorder %s24, 3
      %p92 = por %p90, %p91
      %p93 = scmp.ne.s32.totalorder %s85, %s88
      %p94 = scmp.eq.s32.totalorder %s24, 0
      %p95 = por %p93, %p94
      %p96 = scmp.ne.s32.totalorder %s85, %s88
      %p97 = scmp.eq.s32.totalorder %s29, 3
      %p98 = por %p96, %p97
      %p99 = scmp.ne.s32.totalorder %s88, %s89
      %p100 = scmp.eq.s32.totalorder %s29, 0
      %p101 = por %p99, %p100
      %p102 = scmp.ne.s32.totalorder %s88, %s89
      %p103 = scmp.eq.s32.totalorder %s30, 3
      %p104 = por %p102, %p103
      %p106 = scmp.ne.s32.totalorder %s89, %s105
      %p107 = scmp.eq.s32.totalorder %s30, 0
      %p108 = por %p106, %p107
      %s109 = ssub.s32 %s31, %s50
      %p110 = scmp.eq.s32.totalorder %s109, 0
      %s112 = sadd.s32 %s111, 1
      %s113 = scalar_select %p110, %s111, %s112
      %p116 = pneg %p110
      %p117 = scmp.eq.s32.totalorder %s24, 3
      %p118 = por %p116, %p117
      %p119 = scmp.ne.s32.totalorder %s111, %s114
      %p120 = scmp.eq.s32.totalorder %s24, 0
      %p121 = por %p119, %p120
      %p122 = scmp.ne.s32.totalorder %s111, %s114
      %p123 = scmp.eq.s32.totalorder %s29, 3
      %p124 = por %p122, %p123
      %p125 = scmp.ne.s32.totalorder %s114, %s115
      %p126 = scmp.eq.s32.totalorder %s29, 0
      %p127 = por %p125, %p126
      %p128 = scmp.ne.s32.totalorder %s114, %s115
      %p129 = scmp.eq.s32.totalorder %s30, 3
      %p130 = por %p128, %p129
      %p132 = scmp.ne.s32.totalorder %s115, %s131
      %p133 = scmp.eq.s32.totalorder %s30, 0
      %p134 = por %p132, %p133
      %s135 = ssub.s32 %s31, %s50
      %s136 = ssub.s32 %s32, %s46
      %s137 = sor.u32 %s135, %s136
      %p138 = scmp.eq.s32.totalorder %s137, 0
      %s140 = sadd.s32 %s139, 1
      %s141 = scalar_select %p138, %s139, %s140
      %p144 = pneg %p138
      %p145 = scmp.eq.s32.totalorder %s24, 3
      %p146 = por %p144, %p145
      %p147 = scmp.ne.s32.totalorder %s139, %s142
      %p148 = scmp.eq.s32.totalorder %s24, 0
      %p149 = por %p147, %p148
      %p150 = scmp.ne.s32.totalorder %s139, %s142
      %p151 = scmp.eq.s32.totalorder %s29, 3
      %p152 = por %p150, %p151
      %p153 = scmp.ne.s32.totalorder %s142, %s143
      %p154 = scmp.eq.s32.totalorder %s29, 0
      %p155 = por %p153, %p154
      %p156 = scmp.ne.s32.totalorder %s142, %s143
      %p157 = scmp.eq.s32.totalorder %s30, 3
      %p158 = por %p156, %p157
      %p160 = scmp.ne.s32.totalorder %s143, %s159
      %p161 = scmp.eq.s32.totalorder %s30, 0
      %p162 = por %p160, %p161
      %s163 = ssub.s32 %s31, %s50
      %s164 = ssub.s32 %s32, %s46
      %s165 = sor.u32 %s163, %s164
      %p166 = scmp.eq.s32.totalorder %s165, 0
      %s168 = sadd.s32 %s167, 1
      %s169 = scalar_select %p166, %s167, %s168
      %p172 = pneg %p166
      %p173 = scmp.eq.s32.totalorder %s24, 3
      %p174 = por %p172, %p173
      %p175 = scmp.ne.s32.totalorder %s167, %s170
      %p176 = scmp.eq.s32.totalorder %s24, 0
      %p177 = por %p175, %p176
      %p178 = scmp.ne.s32.totalorder %s167, %s170
      %p179 = scmp.eq.s32.totalorder %s29, 3
      %p180 = por %p178, %p179
      %p181 = scmp.ne.s32.totalorder %s170, %s171
      %p182 = scmp.eq.s32.totalorder %s29, 0
      %p183 = por %p181, %p182
      %p184 = scmp.ne.s32.totalorder %s170, %s171
      %p185 = scmp.eq.s32.totalorder %s30, 3
      %p186 = por %p184, %p185
      %p188 = scmp.ne.s32.totalorder %s171, %s187
      %p189 = scmp.eq.s32.totalorder %s30, 0
      %p190 = por %p188, %p189
      %s191 = ssub.s32 %s31, %s50
      %s192 = ssub.s32 %s32, %s46
      %s193 = sor.u32 %s191, %s192
      %p194 = scmp.eq.s32.totalorder %s193, 0
      %s196 = sadd.s32 %s195, 1
      %s197 = scalar_select %p194, %s195, %s196
      %p200 = pneg %p194
      %p201 = scmp.eq.s32.totalorder %s24, 3
      %p202 = por %p200, %p201
      %p203 = scmp.ne.s32.totalorder %s195, %s198
      %p204 = scmp.eq.s32.totalorder %s24, 0
      %p205 = por %p203, %p204
      %p206 = scmp.ne.s32.totalorder %s195, %s198
      %p207 = scmp.eq.s32.totalorder %s29, 3
      %p208 = por %p206, %p207
      %p209 = scmp.ne.s32.totalorder %s198, %s199
      %p210 = scmp.eq.s32.totalorder %s29, 0
      %p211 = por %p209, %p210
      %p212 = scmp.ne.s32.totalorder %s198, %s199
      %p213 = scmp.eq.s32.totalorder %s30, 3
      %p214 = por %p212, %p213
      %p216 = scmp.ne.s32.totalorder %s199, %s215
      %p217 = scmp.eq.s32.totalorder %s30, 0
      %p218 = por %p216, %p217
      %p219 = scmp.le.s32.totalorder 1, %s24
      %p220 = scmp.lt.s32.totalorder %s24, 5
      %p221 = pnand %p219, %p220
      %p222 = pneg %p221
      // Predicated region
      $region9: #{tpu_custom_call.1} parent=5 // pred_check
        _
      $region10: #{tpu_custom_call.1} parent=5 // pred_check_branch
        %224 = sbr.rel (%p221) target = $region12
      $region11: #{tpu_custom_call.1} parent=5 // pred_region
        %s225 = ssub.s32 %s24, 1
      $region12: #{tpu_custom_call.1} parent=5 // pred_fallthru
        _
      %p226 = scmp.lt.s32.totalorder %s24, 4
      // Predicated region
      $region13: #{tpu_custom_call.1} parent=5 // pred_check
        %p227 = pneg %p226
      $region14: #{tpu_custom_call.1} parent=5 // pred_check_branch
        %229 = sbr.rel (%p227) target = $region16
      $region15: #{tpu_custom_call.1} parent=5 // pred_region
        // Predicated region
        $region17: #{tpu_custom_call.1} parent=15 // pred_check
          %p230 = pneg %p65
        $region18: #{tpu_custom_call.1} parent=15 // pred_check_branch
          %232 = sbr.rel (%p230) target = $region20
        $region19: #{tpu_custom_call.1} parent=15 // pred_region
          %s233 = sand.u32 %s55, 1
          %s234 = scalar_lea.sflag [#allocation7], %s233
          %s235 = sand.u32 %s55, 1
          %s236 = smul.addr %s235, 64
          %s237 = scalar_lea.vmem [#allocation6], %s236
          %s238 = smul.u32 8, %s32
          %s240 = ssub.s32 1024, 1024
          %241 = vsyncadd %s234, %s240
          %s242 = smul.addr %s31, 8
          %s243 = sadd.s32 %s238, %s242
          %s244 = smul.addr %s243, 128
          %s245 = scalar_lea.hbm %s0, %s244
          %s247 = sshll.u32 %s237, 4
          %s248 = int_to_ptr.vmem [resolvable:$true] %s247
          %250 = dma.hbm_to_vmem [thread:$0]  %s245, 1024, %s248, %s234
        $region20: #{tpu_custom_call.1} parent=15 // pred_fallthru
          _
        // Predicated region
        $region21: #{tpu_custom_call.1} parent=15 // pred_check
          %p251 = pneg %p95
        $region22: #{tpu_custom_call.1} parent=15 // pred_check_branch
          %253 = sbr.rel (%p251) target = $region24
        $region23: #{tpu_custom_call.1} parent=15 // pred_region
          %s254 = sand.u32 %s85, 1
          %s255 = scalar_lea.sflag [#allocation10], %s254
          %s256 = sand.u32 %s85, 1
          %s257 = smul.addr %s256, 256
          %s258 = scalar_lea.vmem [#allocation9], %s257
          %s259 = smul.u32 8, %s32
          %s261 = ssub.s32 4096, 4096
          %262 = vsyncadd %s255, %s261
          %s263 = smul.addr %s31, 64
          %s264 = sadd.s32 %s259, %s263
          %s265 = smul.addr %s33, 128
          %s266 = sadd.s32 %s264, %s265
          %s267 = smul.addr %s266, 64
          %s268 = scalar_lea.hbm %s1, %s267
          %s269 = sshll.u32 %s258, 4
          %s270 = int_to_ptr.vmem [resolvable:$true] %s269
          %275 = dma.hbm_to_vmem [thread:$0]  %s268, 4096, %s270, %s255, 512, 512, 32
        $region24: #{tpu_custom_call.1} parent=15 // pred_fallthru
          _
        // Predicated region
        $region25: #{tpu_custom_call.1} parent=15 // pred_check
          %p276 = pneg %p121
        $region26: #{tpu_custom_call.1} parent=15 // pred_check_branch
          %278 = sbr.rel (%p276) target = $region28
        $region27: #{tpu_custom_call.1} parent=15 // pred_region
          %p279 = scmp.lt.s32.totalorder %s31, 1
          %s280 = scalar_select %p279, %s31, 1
          %s281 = smul.addr %s280, 8
          %s282 = scalar_lea.vmem %s2, %s281
        $region28: #{tpu_custom_call.1} parent=15 // pred_fallthru
          _
        // Predicated region
        $region29: #{tpu_custom_call.1} parent=15 // pred_check
          %p283 = pneg %p149
        $region30: #{tpu_custom_call.1} parent=15 // pred_check_branch
          %285 = sbr.rel (%p283) target = $region32
        $region31: #{tpu_custom_call.1} parent=15 // pred_region
          %s286 = smul.u32 8, %s32
          %p287 = scmp.lt.s32.totalorder %s31, 1
          %s288 = scalar_select %p287, %s31, 1
          %p289 = scmp.lt.s32.totalorder %s286, 7
          %s290 = scalar_select %p289, %s286, 7
          %s291 = smul.addr %s288, 8
          %s292 = sadd.s32 %s290, %s291
          %s293 = scalar_lea.vmem %s3, %s292
          %s294 = smul.u32 8, %s32
        $region32: #{tpu_custom_call.1} parent=15 // pred_fallthru
          _
      $region16: #{tpu_custom_call.1} parent=5 // pred_fallthru
        _
      %p295 = scmp.le.s32.totalorder 1, %s24
      %p296 = scmp.lt.s32.totalorder %s24, 5
      %p297 = pnand %p295, %p296
      %p298 = pneg %p297
      // Predicated region
      $region33: #{tpu_custom_call.1} parent=5 // pred_check
        _
      $region34: #{tpu_custom_call.1} parent=5 // pred_check_branch
        %300 = sbr.rel (%p297) target = $region36
      $region35: #{tpu_custom_call.1} parent=5 // pred_region
        %s301 = ssub.s32 %s24, 1
        %s302 = sand.u32 %s58, 1
        %s303 = scalar_lea.sflag [#allocation7], %s302
        %s304 = sand.u32 %s58, 1
        %s305 = smul.addr %s304, 64
        %s306 = scalar_lea.vmem [#allocation6], %s305
        // Predicated region
        $region37: #{tpu_custom_call.1} parent=35 // pred_check
          %p307 = pneg %p71
        $region38: #{tpu_custom_call.1} parent=35 // pred_check_branch
          %309 = sbr.rel (%p307) target = $region40
        $region39: #{tpu_custom_call.1} parent=35 // pred_region
          %310 = dma.done %s303, 1024
        $region40: #{tpu_custom_call.1} parent=35 // pred_fallthru
          _
        %s311 = sand.u32 %s88, 1
        %s312 = scalar_lea.sflag [#allocation10], %s311
        %s313 = sand.u32 %s88, 1
        %s314 = smul.addr %s313, 256
        %s315 = scalar_lea.vmem [#allocation9], %s314
        // Predicated region
        $region41: #{tpu_custom_call.1} parent=35 // pred_check
          %p316 = pneg %p101
        $region42: #{tpu_custom_call.1} parent=35 // pred_check_branch
          %318 = sbr.rel (%p316) target = $region44
        $region43: #{tpu_custom_call.1} parent=35 // pred_region
          %319 = dma.done %s312, 4096
        $region44: #{tpu_custom_call.1} parent=35 // pred_fallthru
          _
        %s320 = sand.u32 %s58, 1
        %s321 = scalar_lea.sflag [#allocation7], %s320
        %s322 = sand.u32 %s58, 1
        %s323 = smul.addr %s322, 64
        %s324 = scalar_lea.vmem [#allocation6], %s323
        %p325 = pneg %p71
        %p326 = pneg %p68
        %s327 = sand.u32 %s88, 1
        %s328 = scalar_lea.sflag [#allocation10], %s327
        %s329 = sand.u32 %s88, 1
        %s330 = smul.addr %s329, 256
        %s331 = scalar_lea.vmem [#allocation9], %s330
        %p332 = pneg %p101
        %p333 = pneg %p98
        %p334 = scmp.lt.s32.totalorder %s34, 1
        %s335 = scalar_select %p334, %s34, 1
        %s336 = smul.addr %s335, 8
        %s337 = scalar_lea.vmem %s2, %s336
        %p338 = pneg %p127
        %p339 = pneg %p124
        %s340 = smul.u32 8, %s35
        %p341 = scmp.lt.s32.totalorder %s34, 1
        %s342 = scalar_select %p341, %s34, 1
        %p343 = scmp.lt.s32.totalorder %s340, 7
        %s344 = scalar_select %p343, %s340, 7
        %s345 = smul.addr %s342, 8
        %s346 = sadd.s32 %s344, %s345
        %s347 = scalar_lea.vmem %s3, %s346
        %p348 = pneg %p155
        %p349 = pneg %p152
        %p350 = pneg %p183
        %p351 = pneg %p180
        %s352 = sand.u32 %s170, 1
        %s353 = scalar_lea.sflag [#allocation8], %s352
        %s354 = sand.u32 %s170, 1
        %s355 = smul.addr %s354, 64
        %s356 = scalar_lea.vmem [#allocation11], %s355
        %p357 = pneg %p211
        %p358 = pneg %p208
        %s359 = sand.u32 %s198, 1
        %s360 = scalar_lea.sflag [#allocation13], %s359
        %s361 = sand.u32 %s198, 1
        %s362 = smul.addr %s361, 64
        %s363 = scalar_lea.vmem [#allocation12], %s362
        %s364 = smul.u32 8, %s35
        %s365 = smul.u32 8, %s35
        %p366 = scmp.lt.s32.totalorder %s34, 1
        %s367 = scalar_select %p366, %s34, 1
        %s368 = smul.addr %s367, 8
        %s369 = scalar_lea.vmem %s2, %s368
        %s370 = smul.u32 8, %s35
        %p371 = scmp.lt.s32.totalorder %s34, 1
        %s372 = scalar_select %p371, %s34, 1
        %p373 = scmp.lt.s32.totalorder %s370, 7
        %s374 = scalar_select %p373, %s370, 7
        %s375 = smul.addr %s372, 8
        %s376 = sadd.s32 %s374, %s375
        %s377 = scalar_lea.vmem %s3, %s376
        %s378 = smul.u32 8, %s35
        %s379 = smul.u32 8, %s35
        %s380 = smul.u32 8, %s35
        %v381 = vld [vmem:[%s306] sm:$0xff]
        %v382 = vld [vmem:[%s306 + $0x8] sm:$0xff]
        %v383 = vld [vmem:[%s306 + $0x10] sm:$0xff]
        %v384 = vld [vmem:[%s306 + $0x18] sm:$0xff]
        %v385 = vld [vmem:[%s306 + $0x20] sm:$0xff]
        %v386 = vld [vmem:[%s306 + $0x28] sm:$0xff]
        %v387 = vld [vmem:[%s306 + $0x30] sm:$0xff]
        %v388 = vld [vmem:[%s306 + $0x38] sm:$0xff]
        %v389 = vld [vmem:[%s315] sm:$0xff]
        %v390 = vld [vmem:[%s315 + $0x8] sm:$0xff]
        %v391 = vld [vmem:[%s315 + $0x10] sm:$0xff]
        %v392 = vld [vmem:[%s315 + $0x18] sm:$0xff]
        %v393 = vld [vmem:[%s315 + $0x20] sm:$0xff]
        %v394 = vld [vmem:[%s315 + $0x28] sm:$0xff]
        %v395 = vld [vmem:[%s315 + $0x30] sm:$0xff]
        %v396 = vld [vmem:[%s315 + $0x38] sm:$0xff]
        %v397 = vld [vmem:[%s315 + $0x40] sm:$0xff]
        %v398 = vld [vmem:[%s315 + $0x48] sm:$0xff]
        %v399 = vld [vmem:[%s315 + $0x50] sm:$0xff]
        %v400 = vld [vmem:[%s315 + $0x58] sm:$0xff]
        %v401 = vld [vmem:[%s315 + $0x60] sm:$0xff]
        %v402 = vld [vmem:[%s315 + $0x68] sm:$0xff]
        %v403 = vld [vmem:[%s315 + $0x70] sm:$0xff]
        %v404 = vld [vmem:[%s315 + $0x78] sm:$0xff]
        %v405 = vld [vmem:[%s315 + $0x80] sm:$0xff]
        %v406 = vld [vmem:[%s315 + $0x88] sm:$0xff]
        %v407 = vld [vmem:[%s315 + $0x90] sm:$0xff]
        %v408 = vld [vmem:[%s315 + $0x98] sm:$0xff]
        %v409 = vld [vmem:[%s315 + $0xa0] sm:$0xff]
        %v410 = vld [vmem:[%s315 + $0xa8] sm:$0xff]
        %v411 = vld [vmem:[%s315 + $0xb0] sm:$0xff]
        %v412 = vld [vmem:[%s315 + $0xb8] sm:$0xff]
        %v413 = vld [vmem:[%s315 + $0xc0] sm:$0xff]
        %v414 = vld [vmem:[%s315 + $0xc8] sm:$0xff]
        %v415 = vld [vmem:[%s315 + $0xd0] sm:$0xff]
        %v416 = vld [vmem:[%s315 + $0xd8] sm:$0xff]
        %v417 = vld [vmem:[%s315 + $0xe0] sm:$0xff]
        %v418 = vld [vmem:[%s315 + $0xe8] sm:$0xff]
        %v419 = vld [vmem:[%s315 + $0xf0] sm:$0xff]
        %v420 = vld [vmem:[%s315 + $0xf8] sm:$0xff]
        %v421 = vunpack.c.l.bf16 %v389
        %v422 = vunpack.c.h.bf16 %v389
        %v423 = vunpack.c.l.bf16 %v390
        %v424 = vunpack.c.h.bf16 %v390
        %v425 = vunpack.c.l.bf16 %v391
        %v426 = vunpack.c.h.bf16 %v391
        %v427 = vunpack.c.l.bf16 %v392
        %v428 = vunpack.c.h.bf16 %v392
        %v429 = vunpack.c.l.bf16 %v393
        %v430 = vunpack.c.h.bf16 %v393
        %v431 = vunpack.c.l.bf16 %v394
        %v432 = vunpack.c.h.bf16 %v394
        %v433 = vunpack.c.l.bf16 %v395
        %v434 = vunpack.c.h.bf16 %v395
        %v435 = vunpack.c.l.bf16 %v396
        %v436 = vunpack.c.h.bf16 %v396
        %v437 = vunpack.c.l.bf16 %v397
        %v438 = vunpack.c.h.bf16 %v397
        %v439 = vunpack.c.l.bf16 %v398
        %v440 = vunpack.c.h.bf16 %v398
        %v441 = vunpack.c.l.bf16 %v399
        %v442 = vunpack.c.h.bf16 %v399
        %v443 = vunpack.c.l.bf16 %v400
        %v444 = vunpack.c.h.bf16 %v400
        %v445 = vunpack.c.l.bf16 %v401
        %v446 = vunpack.c.h.bf16 %v401
        %v447 = vunpack.c.l.bf16 %v402
        %v448 = vunpack.c.h.bf16 %v402
        %v449 = vunpack.c.l.bf16 %v403
        %v450 = vunpack.c.h.bf16 %v403
        %v451 = vunpack.c.l.bf16 %v404
        %v452 = vunpack.c.h.bf16 %v404
        %v453 = vunpack.c.l.bf16 %v405
        %v454 = vunpack.c.h.bf16 %v405
        %v455 = vunpack.c.l.bf16 %v406
        %v456 = vunpack.c.h.bf16 %v406
        %v457 = vunpack.c.l.bf16 %v407
        %v458 = vunpack.c.h.bf16 %v407
        %v459 = vunpack.c.l.bf16 %v408
        %v460 = vunpack.c.h.bf16 %v408
        %v461 = vunpack.c.l.bf16 %v409
        %v462 = vunpack.c.h.bf16 %v409
        %v463 = vunpack.c.l.bf16 %v410
        %v464 = vunpack.c.h.bf16 %v410
        %v465 = vunpack.c.l.bf16 %v411
        %v466 = vunpack.c.h.bf16 %v411
        %v467 = vunpack.c.l.bf16 %v412
        %v468 = vunpack.c.h.bf16 %v412
        %v469 = vunpack.c.l.bf16 %v413
        %v470 = vunpack.c.h.bf16 %v413
        %v471 = vunpack.c.l.bf16 %v414
        %v472 = vunpack.c.h.bf16 %v414
        %v473 = vunpack.c.l.bf16 %v415
        %v474 = vunpack.c.h.bf16 %v415
        %v475 = vunpack.c.l.bf16 %v416
        %v476 = vunpack.c.h.bf16 %v416
        %v477 = vunpack.c.l.bf16 %v417
        %v478 = vunpack.c.h.bf16 %v417
        %v479 = vunpack.c.l.bf16 %v418
        %v480 = vunpack.c.h.bf16 %v418
        %v481 = vunpack.c.l.bf16 %v419
        %v482 = vunpack.c.h.bf16 %v419
        %v483 = vunpack.c.l.bf16 %v420
        %v484 = vunpack.c.h.bf16 %v420
        %v493 = vcombine.low %v381, %v382
        %v494 = vcombine.high %v381, %v382
        %v495 = vcombine.low %v383, %v384
        %v496 = vcombine.high %v383, %v384
        %v497 = vcombine.low %v385, %v386
        %v498 = vcombine.high %v385, %v386
        %v499 = vcombine.low %v387, %v388
        %v500 = vcombine.high %v387, %v388
        %v502 = vunpack.c.l.s4 1966171168
        %v503 = vunpack.c.0.s8 %v502
        %v504 = vlaneseq
        %v505 = vshrl.u32 %v504, 7
        %v506 = vsub.s32 %v503, %v505
        %v507 = vrot.slane %v493, %v506
        %v509 = vunpack.c.l.s4 1966171168
        %v510 = vunpack.c.0.s8 %v509
        %v511 = vlaneseq
        %v512 = vshrl.u32 %v511, 7
        %v513 = vsub.s32 %v510, %v512
        %v514 = vrot.slane %v494, %v513
        %v516 = vunpack.c.l.s4 1966171168
        %v517 = vunpack.c.0.s8 %v516
        %v518 = vlaneseq
        %v519 = vshrl.u32 %v518, 7
        %v520 = vsub.s32 %v517, %v519
        %v521 = vrot.slane %v495, %v520
        %v523 = vunpack.c.l.s4 1966171168
        %v524 = vunpack.c.0.s8 %v523
        %v525 = vlaneseq
        %v526 = vshrl.u32 %v525, 7
        %v527 = vsub.s32 %v524, %v526
        %v528 = vrot.slane %v496, %v527
        %v530 = vunpack.c.l.s4 1966171168
        %v531 = vunpack.c.0.s8 %v530
        %v532 = vlaneseq
        %v533 = vshrl.u32 %v532, 7
        %v534 = vsub.s32 %v531, %v533
        %v535 = vrot.slane %v497, %v534
        %v537 = vunpack.c.l.s4 1966171168
        %v538 = vunpack.c.0.s8 %v537
        %v539 = vlaneseq
        %v540 = vshrl.u32 %v539, 7
        %v541 = vsub.s32 %v538, %v540
        %v542 = vrot.slane %v498, %v541
        %v544 = vunpack.c.l.s4 1966171168
        %v545 = vunpack.c.0.s8 %v544
        %v546 = vlaneseq
        %v547 = vshrl.u32 %v546, 7
        %v548 = vsub.s32 %v545, %v547
        %v549 = vrot.slane %v499, %v548
        %v551 = vunpack.c.l.s4 1966171168
        %v552 = vunpack.c.0.s8 %v551
        %v553 = vlaneseq
        %v554 = vshrl.u32 %v553, 7
        %v555 = vsub.s32 %v552, %v554
        %v556 = vrot.slane %v500, %v555
        %v557 = vcombine.low %v507, %v521
        %v558 = vcombine.high %v507, %v521
        %v559 = vcombine.low %v514, %v528
        %v560 = vcombine.high %v514, %v528
        %v561 = vcombine.low %v535, %v549
        %v562 = vcombine.high %v535, %v549
        %v563 = vcombine.low %v542, %v556
        %v564 = vcombine.high %v542, %v556
        %v566 = vunpack.c.l.s4 1966171168
        %v567 = vunpack.c.0.s8 %v566
        %v568 = vlaneseq
        %v569 = vshrl.u32 %v568, 7
        %v570 = vsub.s32 %v567, %v569
        %v571 = vrot.slane %v557, %v570
        %v573 = vunpack.c.l.s4 1966171168
        %v574 = vunpack.c.0.s8 %v573
        %v575 = vlaneseq
        %v576 = vshrl.u32 %v575, 7
        %v577 = vsub.s32 %v574, %v576
        %v578 = vrot.slane %v559, %v577
        %v580 = vunpack.c.l.s4 1966171168
        %v581 = vunpack.c.0.s8 %v580
        %v582 = vlaneseq
        %v583 = vshrl.u32 %v582, 7
        %v584 = vsub.s32 %v581, %v583
        %v585 = vrot.slane %v558, %v584
        %v587 = vunpack.c.l.s4 1966171168
        %v588 = vunpack.c.0.s8 %v587
        %v589 = vlaneseq
        %v590 = vshrl.u32 %v589, 7
        %v591 = vsub.s32 %v588, %v590
        %v592 = vrot.slane %v560, %v591
        %v594 = vunpack.c.l.s4 1966171168
        %v595 = vunpack.c.0.s8 %v594
        %v596 = vlaneseq
        %v597 = vshrl.u32 %v596, 7
        %v598 = vsub.s32 %v595, %v597
        %v599 = vrot.slane %v561, %v598
        %v601 = vunpack.c.l.s4 1966171168
        %v602 = vunpack.c.0.s8 %v601
        %v603 = vlaneseq
        %v604 = vshrl.u32 %v603, 7
        %v605 = vsub.s32 %v602, %v604
        %v606 = vrot.slane %v563, %v605
        %v608 = vunpack.c.l.s4 1966171168
        %v609 = vunpack.c.0.s8 %v608
        %v610 = vlaneseq
        %v611 = vshrl.u32 %v610, 7
        %v612 = vsub.s32 %v609, %v611
        %v613 = vrot.slane %v562, %v612
        %v615 = vunpack.c.l.s4 1966171168
        %v616 = vunpack.c.0.s8 %v615
        %v617 = vlaneseq
        %v618 = vshrl.u32 %v617, 7
        %v619 = vsub.s32 %v616, %v618
        %v620 = vrot.slane %v564, %v619
        %v621 = vcombine.low %v571, %v599
        %v622 = vcombine.high %v571, %v599
        %v623 = vcombine.low %v578, %v606
        %v624 = vcombine.high %v578, %v606
        %v625 = vcombine.low %v585, %v613
        %v626 = vcombine.high %v585, %v613
        %v627 = vcombine.low %v592, %v620
        %v628 = vcombine.high %v592, %v620
        %v629 = vlaneseq
        %v630 = vshrl.u32 %v629, 7
        %v631 = vsub.s32 0, %v630
        %v632 = vrot.slane %v621, %v631
        %v633 = vlaneseq
        %v634 = vshrl.u32 %v633, 7
        %v635 = vsub.s32 1, %v634
        %v636 = vrot.slane %v621, %v635
        %v637 = vlaneseq
        %v638 = vshrl.u32 %v637, 7
        %v639 = vsub.s32 2, %v638
        %v640 = vrot.slane %v621, %v639
        %v641 = vlaneseq
        %v642 = vshrl.u32 %v641, 7
        %v643 = vsub.s32 3, %v642
        %v644 = vrot.slane %v621, %v643
        %v645 = vlaneseq
        %v646 = vshrl.u32 %v645, 7
        %v647 = vsub.s32 4, %v646
        %v648 = vrot.slane %v621, %v647
        %v649 = vlaneseq
        %v650 = vshrl.u32 %v649, 7
        %v651 = vsub.s32 5, %v650
        %v652 = vrot.slane %v621, %v651
        %v653 = vlaneseq
        %v654 = vshrl.u32 %v653, 7
        %v655 = vsub.s32 6, %v654
        %v656 = vrot.slane %v621, %v655
        %v657 = vlaneseq
        %v658 = vshrl.u32 %v657, 7
        %v659 = vsub.s32 7, %v658
        %v660 = vrot.slane %v621, %v659
        %v661 = vlaneseq
        %v662 = vshrl.u32 %v661, 7
        %v663 = vsub.s32 0, %v662
        %v664 = vrot.slane %v625, %v663
        %v665 = vlaneseq
        %v666 = vshrl.u32 %v665, 7
        %v667 = vsub.s32 1, %v666
        %v668 = vrot.slane %v625, %v667
        %v669 = vlaneseq
        %v670 = vshrl.u32 %v669, 7
        %v671 = vsub.s32 2, %v670
        %v672 = vrot.slane %v625, %v671
        %v673 = vlaneseq
        %v674 = vshrl.u32 %v673, 7
        %v675 = vsub.s32 3, %v674
        %v676 = vrot.slane %v625, %v675
        %v677 = vlaneseq
        %v678 = vshrl.u32 %v677, 7
        %v679 = vsub.s32 4, %v678
        %v680 = vrot.slane %v625, %v679
        %v681 = vlaneseq
        %v682 = vshrl.u32 %v681, 7
        %v683 = vsub.s32 5, %v682
        %v684 = vrot.slane %v625, %v683
        %v685 = vlaneseq
        %v686 = vshrl.u32 %v685, 7
        %v687 = vsub.s32 6, %v686
        %v688 = vrot.slane %v625, %v687
        %v689 = vlaneseq
        %v690 = vshrl.u32 %v689, 7
        %v691 = vsub.s32 7, %v690
        %v692 = vrot.slane %v625, %v691
        %v693 = vlaneseq
        %v694 = vshrl.u32 %v693, 7
        %v695 = vsub.s32 0, %v694
        %v696 = vrot.slane %v622, %v695
        %v697 = vlaneseq
        %v698 = vshrl.u32 %v697, 7
        %v699 = vsub.s32 1, %v698
        %v700 = vrot.slane %v622, %v699
        %v701 = vlaneseq
        %v702 = vshrl.u32 %v701, 7
        %v703 = vsub.s32 2, %v702
        %v704 = vrot.slane %v622, %v703
        %v705 = vlaneseq
        %v706 = vshrl.u32 %v705, 7
        %v707 = vsub.s32 3, %v706
        %v708 = vrot.slane %v622, %v707
        %v709 = vlaneseq
        %v710 = vshrl.u32 %v709, 7
        %v711 = vsub.s32 4, %v710
        %v712 = vrot.slane %v622, %v711
        %v713 = vlaneseq
        %v714 = vshrl.u32 %v713, 7
        %v715 = vsub.s32 5, %v714
        %v716 = vrot.slane %v622, %v715
        %v717 = vlaneseq
        %v718 = vshrl.u32 %v717, 7
        %v719 = vsub.s32 6, %v718
        %v720 = vrot.slane %v622, %v719
        %v721 = vlaneseq
        %v722 = vshrl.u32 %v721, 7
        %v723 = vsub.s32 7, %v722
        %v724 = vrot.slane %v622, %v723
        %v725 = vlaneseq
        %v726 = vshrl.u32 %v725, 7
        %v727 = vsub.s32 0, %v726
        %v728 = vrot.slane %v626, %v727
        %v729 = vlaneseq
        %v730 = vshrl.u32 %v729, 7
        %v731 = vsub.s32 1, %v730
        %v732 = vrot.slane %v626, %v731
        %v733 = vlaneseq
        %v734 = vshrl.u32 %v733, 7
        %v735 = vsub.s32 2, %v734
        %v736 = vrot.slane %v626, %v735
        %v737 = vlaneseq
        %v738 = vshrl.u32 %v737, 7
        %v739 = vsub.s32 3, %v738
        %v740 = vrot.slane %v626, %v739
        %v741 = vlaneseq
        %v742 = vshrl.u32 %v741, 7
        %v743 = vsub.s32 4, %v742
        %v744 = vrot.slane %v626, %v743
        %v745 = vlaneseq
        %v746 = vshrl.u32 %v745, 7
        %v747 = vsub.s32 5, %v746
        %v748 = vrot.slane %v626, %v747
        %v749 = vlaneseq
        %v750 = vshrl.u32 %v749, 7
        %v751 = vsub.s32 6, %v750
        %v752 = vrot.slane %v626, %v751
        %v753 = vlaneseq
        %v754 = vshrl.u32 %v753, 7
        %v755 = vsub.s32 7, %v754
        %v756 = vrot.slane %v626, %v755
        %v757 = vlaneseq
        %v758 = vshrl.u32 %v757, 7
        %v759 = vsub.s32 0, %v758
        %v760 = vrot.slane %v623, %v759
        %v761 = vlaneseq
        %v762 = vshrl.u32 %v761, 7
        %v763 = vsub.s32 1, %v762
        %v764 = vrot.slane %v623, %v763
        %v765 = vlaneseq
        %v766 = vshrl.u32 %v765, 7
        %v767 = vsub.s32 2, %v766
        %v768 = vrot.slane %v623, %v767
        %v769 = vlaneseq
        %v770 = vshrl.u32 %v769, 7
        %v771 = vsub.s32 3, %v770
        %v772 = vrot.slane %v623, %v771
        %v773 = vlaneseq
        %v774 = vshrl.u32 %v773, 7
        %v775 = vsub.s32 4, %v774
        %v776 = vrot.slane %v623, %v775
        %v777 = vlaneseq
        %v778 = vshrl.u32 %v777, 7
        %v779 = vsub.s32 5, %v778
        %v780 = vrot.slane %v623, %v779
        %v781 = vlaneseq
        %v782 = vshrl.u32 %v781, 7
        %v783 = vsub.s32 6, %v782
        %v784 = vrot.slane %v623, %v783
        %v785 = vlaneseq
        %v786 = vshrl.u32 %v785, 7
        %v787 = vsub.s32 7, %v786
        %v788 = vrot.slane %v623, %v787
        %v789 = vlaneseq
        %v790 = vshrl.u32 %v789, 7
        %v791 = vsub.s32 0, %v790
        %v792 = vrot.slane %v627, %v791
        %v793 = vlaneseq
        %v794 = vshrl.u32 %v793, 7
        %v795 = vsub.s32 1, %v794
        %v796 = vrot.slane %v627, %v795
        %v797 = vlaneseq
        %v798 = vshrl.u32 %v797, 7
        %v799 = vsub.s32 2, %v798
        %v800 = vrot.slane %v627, %v799
        %v801 = vlaneseq
        %v802 = vshrl.u32 %v801, 7
        %v803 = vsub.s32 3, %v802
        %v804 = vrot.slane %v627, %v803
        %v805 = vlaneseq
        %v806 = vshrl.u32 %v805, 7
        %v807 = vsub.s32 4, %v806
        %v808 = vrot.slane %v627, %v807
        %v809 = vlaneseq
        %v810 = vshrl.u32 %v809, 7
        %v811 = vsub.s32 5, %v810
        %v812 = vrot.slane %v627, %v811
        %v813 = vlaneseq
        %v814 = vshrl.u32 %v813, 7
        %v815 = vsub.s32 6, %v814
        %v816 = vrot.slane %v627, %v815
        %v817 = vlaneseq
        %v818 = vshrl.u32 %v817, 7
        %v819 = vsub.s32 7, %v818
        %v820 = vrot.slane %v627, %v819
        %v821 = vlaneseq
        %v822 = vshrl.u32 %v821, 7
        %v823 = vsub.s32 0, %v822
        %v824 = vrot.slane %v624, %v823
        %v825 = vlaneseq
        %v826 = vshrl.u32 %v825, 7
        %v827 = vsub.s32 1, %v826
        %v828 = vrot.slane %v624, %v827
        %v829 = vlaneseq
        %v830 = vshrl.u32 %v829, 7
        %v831 = vsub.s32 2, %v830
        %v832 = vrot.slane %v624, %v831
        %v833 = vlaneseq
        %v834 = vshrl.u32 %v833, 7
        %v835 = vsub.s32 3, %v834
        %v836 = vrot.slane %v624, %v835
        %v837 = vlaneseq
        %v838 = vshrl.u32 %v837, 7
        %v839 = vsub.s32 4, %v838
        %v840 = vrot.slane %v624, %v839
        %v841 = vlaneseq
        %v842 = vshrl.u32 %v841, 7
        %v843 = vsub.s32 5, %v842
        %v844 = vrot.slane %v624, %v843
        %v845 = vlaneseq
        %v846 = vshrl.u32 %v845, 7
        %v847 = vsub.s32 6, %v846
        %v848 = vrot.slane %v624, %v847
        %v849 = vlaneseq
        %v850 = vshrl.u32 %v849, 7
        %v851 = vsub.s32 7, %v850
        %v852 = vrot.slane %v624, %v851
        %v853 = vlaneseq
        %v854 = vshrl.u32 %v853, 7
        %v855 = vsub.s32 0, %v854
        %v856 = vrot.slane %v628, %v855
        %v857 = vlaneseq
        %v858 = vshrl.u32 %v857, 7
        %v859 = vsub.s32 1, %v858
        %v860 = vrot.slane %v628, %v859
        %v861 = vlaneseq
        %v862 = vshrl.u32 %v861, 7
        %v863 = vsub.s32 2, %v862
        %v864 = vrot.slane %v628, %v863
        %v865 = vlaneseq
        %v866 = vshrl.u32 %v865, 7
        %v867 = vsub.s32 3, %v866
        %v868 = vrot.slane %v628, %v867
        %v869 = vlaneseq
        %v870 = vshrl.u32 %v869, 7
        %v871 = vsub.s32 4, %v870
        %v872 = vrot.slane %v628, %v871
        %v873 = vlaneseq
        %v874 = vshrl.u32 %v873, 7
        %v875 = vsub.s32 5, %v874
        %v876 = vrot.slane %v628, %v875
        %v877 = vlaneseq
        %v878 = vshrl.u32 %v877, 7
        %v879 = vsub.s32 6, %v878
        %v880 = vrot.slane %v628, %v879
        %v881 = vlaneseq
        %v882 = vshrl.u32 %v881, 7
        %v883 = vsub.s32 7, %v882
        %v884 = vrot.slane %v628, %v883
        %v949 = vmul.f32 %v421, %v632
        %v950 = vmul.f32 %v422, %v636
        %v951 = vmul.f32 %v423, %v640
        %v952 = vmul.f32 %v424, %v644
        %v953 = vmul.f32 %v425, %v648
        %v954 = vmul.f32 %v426, %v652
        %v955 = vmul.f32 %v427, %v656
        %v956 = vmul.f32 %v428, %v660
        %v957 = vmul.f32 %v429, %v664
        %v958 = vmul.f32 %v430, %v668
        %v959 = vmul.f32 %v431, %v672
        %v960 = vmul.f32 %v432, %v676
        %v961 = vmul.f32 %v433, %v680
        %v962 = vmul.f32 %v434, %v684
        %v963 = vmul.f32 %v435, %v688
        %v964 = vmul.f32 %v436, %v692
        %v965 = vmul.f32 %v437, %v696
        %v966 = vmul.f32 %v438, %v700
        %v967 = vmul.f32 %v439, %v704
        %v968 = vmul.f32 %v440, %v708
        %v969 = vmul.f32 %v441, %v712
        %v970 = vmul.f32 %v442, %v716
        %v971 = vmul.f32 %v443, %v720
        %v972 = vmul.f32 %v444, %v724
        %v973 = vmul.f32 %v445, %v728
        %v974 = vmul.f32 %v446, %v732
        %v975 = vmul.f32 %v447, %v736
        %v976 = vmul.f32 %v448, %v740
        %v977 = vmul.f32 %v449, %v744
        %v978 = vmul.f32 %v450, %v748
        %v979 = vmul.f32 %v451, %v752
        %v980 = vmul.f32 %v452, %v756
        %v981 = vmul.f32 %v453, %v760
        %v982 = vmul.f32 %v454, %v764
        %v983 = vmul.f32 %v455, %v768
        %v984 = vmul.f32 %v456, %v772
        %v985 = vmul.f32 %v457, %v776
        %v986 = vmul.f32 %v458, %v780
        %v987 = vmul.f32 %v459, %v784
        %v988 = vmul.f32 %v460, %v788
        %v989 = vmul.f32 %v461, %v792
        %v990 = vmul.f32 %v462, %v796
        %v991 = vmul.f32 %v463, %v800
        %v992 = vmul.f32 %v464, %v804
        %v993 = vmul.f32 %v465, %v808
        %v994 = vmul.f32 %v466, %v812
        %v995 = vmul.f32 %v467, %v816
        %v996 = vmul.f32 %v468, %v820
        %v997 = vmul.f32 %v469, %v824
        %v998 = vmul.f32 %v470, %v828
        %v999 = vmul.f32 %v471, %v832
        %v1000 = vmul.f32 %v472, %v836
        %v1001 = vmul.f32 %v473, %v840
        %v1002 = vmul.f32 %v474, %v844
        %v1003 = vmul.f32 %v475, %v848
        %v1004 = vmul.f32 %v476, %v852
        %v1005 = vmul.f32 %v477, %v856
        %v1006 = vmul.f32 %v478, %v860
        %v1007 = vmul.f32 %v479, %v864
        %v1008 = vmul.f32 %v480, %v868
        %v1009 = vmul.f32 %v481, %v872
        %v1010 = vmul.f32 %v482, %v876
        %v1011 = vmul.f32 %v483, %v880
        %v1012 = vmul.f32 %v484, %v884
        %v1013 = vadd.f32 %v949, %v957
        %v1014 = vadd.f32 %v950, %v958
        %v1015 = vadd.f32 %v951, %v959
        %v1016 = vadd.f32 %v952, %v960
        %v1017 = vadd.f32 %v953, %v961
        %v1018 = vadd.f32 %v954, %v962
        %v1019 = vadd.f32 %v955, %v963
        %v1020 = vadd.f32 %v956, %v964
        %v1021 = vadd.f32 %v965, %v973
        %v1022 = vadd.f32 %v966, %v974
        %v1023 = vadd.f32 %v967, %v975
        %v1024 = vadd.f32 %v968, %v976
        %v1025 = vadd.f32 %v969, %v977
        %v1026 = vadd.f32 %v970, %v978
        %v1027 = vadd.f32 %v971, %v979
        %v1028 = vadd.f32 %v972, %v980
        %v1029 = vadd.f32 %v981, %v989
        %v1030 = vadd.f32 %v982, %v990
        %v1031 = vadd.f32 %v983, %v991
        %v1032 = vadd.f32 %v984, %v992
        %v1033 = vadd.f32 %v985, %v993
        %v1034 = vadd.f32 %v986, %v994
        %v1035 = vadd.f32 %v987, %v995
        %v1036 = vadd.f32 %v988, %v996
        %v1037 = vadd.f32 %v997, %v1005
        %v1038 = vadd.f32 %v998, %v1006
        %v1039 = vadd.f32 %v999, %v1007
        %v1040 = vadd.f32 %v1000, %v1008
        %v1041 = vadd.f32 %v1001, %v1009
        %v1042 = vadd.f32 %v1002, %v1010
        %v1043 = vadd.f32 %v1003, %v1011
        %v1044 = vadd.f32 %v1004, %v1012
        %v1045 = vrcp.pop 2.0
        %v1046 = vmul.f32 %v1013, %v1045
        %v1047 = vmul.f32 %v1014, %v1045
        %v1048 = vmul.f32 %v1015, %v1045
        %v1049 = vmul.f32 %v1016, %v1045
        %v1050 = vmul.f32 %v1017, %v1045
        %v1051 = vmul.f32 %v1018, %v1045
        %v1052 = vmul.f32 %v1019, %v1045
        %v1053 = vmul.f32 %v1020, %v1045
        %v1054 = vmul.f32 %v1021, %v1045
        %v1055 = vmul.f32 %v1022, %v1045
        %v1056 = vmul.f32 %v1023, %v1045
        %v1057 = vmul.f32 %v1024, %v1045
        %v1058 = vmul.f32 %v1025, %v1045
        %v1059 = vmul.f32 %v1026, %v1045
        %v1060 = vmul.f32 %v1027, %v1045
        %v1061 = vmul.f32 %v1028, %v1045
        %v1062 = vmul.f32 %v1029, %v1045
        %v1063 = vmul.f32 %v1030, %v1045
        %v1064 = vmul.f32 %v1031, %v1045
        %v1065 = vmul.f32 %v1032, %v1045
        %v1066 = vmul.f32 %v1033, %v1045
        %v1067 = vmul.f32 %v1034, %v1045
        %v1068 = vmul.f32 %v1035, %v1045
        %v1069 = vmul.f32 %v1036, %v1045
        %v1070 = vmul.f32 %v1037, %v1045
        %v1071 = vmul.f32 %v1038, %v1045
        %v1072 = vmul.f32 %v1039, %v1045
        %v1073 = vmul.f32 %v1040, %v1045
        %v1074 = vmul.f32 %v1041, %v1045
        %v1075 = vmul.f32 %v1042, %v1045
        %v1076 = vmul.f32 %v1043, %v1045
        %v1077 = vmul.f32 %v1044, %v1045
        %v1078 = vadd.f32 %v1046, %v1054
        %v1079 = vadd.f32 %v1078, %v1062
        %v1080 = vadd.f32 %v1079, %v1070
        %v1081 = vadd.f32 %v1047, %v1055
        %v1082 = vadd.f32 %v1081, %v1063
        %v1083 = vadd.f32 %v1082, %v1071
        %v1084 = vadd.f32 %v1048, %v1056
        %v1085 = vadd.f32 %v1084, %v1064
        %v1086 = vadd.f32 %v1085, %v1072
        %v1087 = vadd.f32 %v1049, %v1057
        %v1088 = vadd.f32 %v1087, %v1065
        %v1089 = vadd.f32 %v1088, %v1073
        %v1090 = vadd.f32 %v1050, %v1058
        %v1091 = vadd.f32 %v1090, %v1066
        %v1092 = vadd.f32 %v1091, %v1074
        %v1093 = vadd.f32 %v1051, %v1059
        %v1094 = vadd.f32 %v1093, %v1067
        %v1095 = vadd.f32 %v1094, %v1075
        %v1096 = vadd.f32 %v1052, %v1060
        %v1097 = vadd.f32 %v1096, %v1068
        %v1098 = vadd.f32 %v1097, %v1076
        %v1099 = vadd.f32 %v1053, %v1061
        %v1100 = vadd.f32 %v1099, %v1069
        %v1101 = vadd.f32 %v1100, %v1077
        %v1102 = vmul.f32 %v1080, 0.5
        %v1103 = vmul.f32 %v1083, 0.5
        %v1104 = vmul.f32 %v1086, 0.5
        %v1105 = vmul.f32 %v1089, 0.5
        %v1106 = vmul.f32 %v1092, 0.5
        %v1107 = vmul.f32 %v1095, 0.5
        %v1108 = vmul.f32 %v1098, 0.5
        %v1109 = vmul.f32 %v1101, 0.5
        %v1110 = vrot.slane %v1102, 4
        %v1111 = vmax.f32 %v1102, %v1110
        %v1112 = vrot.slane %v1111, 2
        %v1113 = vmax.f32 %v1111, %v1112
        %v1114 = vrot.slane %v1113, 1
        %v1115 = vmax.f32 %v1113, %v1114
        %v1116 = vrot.slane %v1103, 4
        %v1117 = vmax.f32 %v1103, %v1116
        %v1118 = vrot.slane %v1117, 2
        %v1119 = vmax.f32 %v1117, %v1118
        %v1120 = vrot.slane %v1119, 1
        %v1121 = vmax.f32 %v1119, %v1120
        %v1122 = vrot.slane %v1104, 4
        %v1123 = vmax.f32 %v1104, %v1122
        %v1124 = vrot.slane %v1123, 2
        %v1125 = vmax.f32 %v1123, %v1124
        %v1126 = vrot.slane %v1125, 1
        %v1127 = vmax.f32 %v1125, %v1126
        %v1128 = vrot.slane %v1105, 4
        %v1129 = vmax.f32 %v1105, %v1128
        %v1130 = vrot.slane %v1129, 2
        %v1131 = vmax.f32 %v1129, %v1130
        %v1132 = vrot.slane %v1131, 1
        %v1133 = vmax.f32 %v1131, %v1132
        %v1134 = vrot.slane %v1106, 4
        %v1135 = vmax.f32 %v1106, %v1134
        %v1136 = vrot.slane %v1135, 2
        %v1137 = vmax.f32 %v1135, %v1136
        %v1138 = vrot.slane %v1137, 1
        %v1139 = vmax.f32 %v1137, %v1138
        %v1140 = vrot.slane %v1107, 4
        %v1141 = vmax.f32 %v1107, %v1140
        %v1142 = vrot.slane %v1141, 2
        %v1143 = vmax.f32 %v1141, %v1142
        %v1144 = vrot.slane %v1143, 1
        %v1145 = vmax.f32 %v1143, %v1144
        %v1146 = vrot.slane %v1108, 4
        %v1147 = vmax.f32 %v1108, %v1146
        %v1148 = vrot.slane %v1147, 2
        %v1149 = vmax.f32 %v1147, %v1148
        %v1150 = vrot.slane %v1149, 1
        %v1151 = vmax.f32 %v1149, %v1150
        %v1152 = vrot.slane %v1109, 4
        %v1153 = vmax.f32 %v1109, %v1152
        %v1154 = vrot.slane %v1153, 2
        %v1155 = vmax.f32 %v1153, %v1154
        %v1156 = vrot.slane %v1155, 1
        %v1157 = vmax.f32 %v1155, %v1156
        %v1158 = vsub.f32 %v1102, %v1115
        %v1159 = vsub.f32 %v1103, %v1121
        %v1160 = vsub.f32 %v1104, %v1127
        %v1161 = vsub.f32 %v1105, %v1133
        %v1162 = vsub.f32 %v1106, %v1139
        %v1163 = vsub.f32 %v1107, %v1145
        %v1164 = vsub.f32 %v1108, %v1151
        %v1165 = vsub.f32 %v1109, %v1157
        %v1166 = vmul.f32 %v1158, 1.442695
        %v1167 = vpow.pop %v1166
        %v1168 = vmul.f32 %v1159, 1.442695
        %v1169 = vpow.pop %v1168
        %v1170 = vmul.f32 %v1160, 1.442695
        %v1171 = vpow.pop %v1170
        %v1172 = vmul.f32 %v1161, 1.442695
        %v1173 = vpow.pop %v1172
        %v1174 = vmul.f32 %v1162, 1.442695
        %v1175 = vpow.pop %v1174
        %v1176 = vmul.f32 %v1163, 1.442695
        %v1177 = vpow.pop %v1176
        %v1178 = vmul.f32 %v1164, 1.442695
        %v1179 = vpow.pop %v1178
        %v1180 = vmul.f32 %v1165, 1.442695
        %v1181 = vpow.pop %v1180
        %v1182 = vrot.slane %v1167, 4
        %v1183 = vadd.f32 %v1167, %v1182
        %v1184 = vrot.slane %v1183, 2
        %v1185 = vadd.f32 %v1183, %v1184
        %v1186 = vrot.slane %v1185, 1
        %v1187 = vadd.f32 %v1185, %v1186
        %v1188 = vrot.slane %v1169, 4
        %v1189 = vadd.f32 %v1169, %v1188
        %v1190 = vrot.slane %v1189, 2
        %v1191 = vadd.f32 %v1189, %v1190
        %v1192 = vrot.slane %v1191, 1
        %v1193 = vadd.f32 %v1191, %v1192
        %v1194 = vrot.slane %v1171, 4
        %v1195 = vadd.f32 %v1171, %v1194
        %v1196 = vrot.slane %v1195, 2
        %v1197 = vadd.f32 %v1195, %v1196
        %v1198 = vrot.slane %v1197, 1
        %v1199 = vadd.f32 %v1197, %v1198
        %v1200 = vrot.slane %v1173, 4
        %v1201 = vadd.f32 %v1173, %v1200
        %v1202 = vrot.slane %v1201, 2
        %v1203 = vadd.f32 %v1201, %v1202
        %v1204 = vrot.slane %v1203, 1
        %v1205 = vadd.f32 %v1203, %v1204
        %v1206 = vrot.slane %v1175, 4
        %v1207 = vadd.f32 %v1175, %v1206
        %v1208 = vrot.slane %v1207, 2
        %v1209 = vadd.f32 %v1207, %v1208
        %v1210 = vrot.slane %v1209, 1
        %v1211 = vadd.f32 %v1209, %v1210
        %v1212 = vrot.slane %v1177, 4
        %v1213 = vadd.f32 %v1177, %v1212
        %v1214 = vrot.slane %v1213, 2
        %v1215 = vadd.f32 %v1213, %v1214
        %v1216 = vrot.slane %v1215, 1
        %v1217 = vadd.f32 %v1215, %v1216
        %v1218 = vrot.slane %v1179, 4
        %v1219 = vadd.f32 %v1179, %v1218
        %v1220 = vrot.slane %v1219, 2
        %v1221 = vadd.f32 %v1219, %v1220
        %v1222 = vrot.slane %v1221, 1
        %v1223 = vadd.f32 %v1221, %v1222
        %v1224 = vrot.slane %v1181, 4
        %v1225 = vadd.f32 %v1181, %v1224
        %v1226 = vrot.slane %v1225, 2
        %v1227 = vadd.f32 %v1225, %v1226
        %v1228 = vrot.slane %v1227, 1
        %v1229 = vadd.f32 %v1227, %v1228
        %v1230 = vrcp.pop %v1187
        %v1231 = vmul.f32 %v1167, %v1230
        %v1232 = vrcp.pop %v1193
        %v1233 = vmul.f32 %v1169, %v1232
        %v1234 = vrcp.pop %v1199
        %v1235 = vmul.f32 %v1171, %v1234
        %v1236 = vrcp.pop %v1205
        %v1237 = vmul.f32 %v1173, %v1236
        %v1238 = vrcp.pop %v1211
        %v1239 = vmul.f32 %v1175, %v1238
        %v1240 = vrcp.pop %v1217
        %v1241 = vmul.f32 %v1177, %v1240
        %v1242 = vrcp.pop %v1223
        %v1243 = vmul.f32 %v1179, %v1242
        %v1244 = vrcp.pop %v1229
        %v1245 = vmul.f32 %v1181, %v1244
        %v1246 = vmul.f32 %v1231, %v1046
        %v1247 = vmul.f32 %v1233, %v1047
        %v1248 = vmul.f32 %v1235, %v1048
        %v1249 = vmul.f32 %v1237, %v1049
        %v1250 = vmul.f32 %v1239, %v1050
        %v1251 = vmul.f32 %v1241, %v1051
        %v1252 = vmul.f32 %v1243, %v1052
        %v1253 = vmul.f32 %v1245, %v1053
        %v1254 = vmul.f32 %v1231, %v1054
        %v1255 = vmul.f32 %v1233, %v1055
        %v1256 = vmul.f32 %v1235, %v1056
        %v1257 = vmul.f32 %v1237, %v1057
        %v1258 = vmul.f32 %v1239, %v1058
        %v1259 = vmul.f32 %v1241, %v1059
        %v1260 = vmul.f32 %v1243, %v1060
        %v1261 = vmul.f32 %v1245, %v1061
        %v1262 = vmul.f32 %v1231, %v1062
        %v1263 = vmul.f32 %v1233, %v1063
        %v1264 = vmul.f32 %v1235, %v1064
        %v1265 = vmul.f32 %v1237, %v1065
        %v1266 = vmul.f32 %v1239, %v1066
        %v1267 = vmul.f32 %v1241, %v1067
        %v1268 = vmul.f32 %v1243, %v1068
        %v1269 = vmul.f32 %v1245, %v1069
        %v1270 = vmul.f32 %v1231, %v1070
        %v1271 = vmul.f32 %v1233, %v1071
        %v1272 = vmul.f32 %v1235, %v1072
        %v1273 = vmul.f32 %v1237, %v1073
        %v1274 = vmul.f32 %v1239, %v1074
        %v1275 = vmul.f32 %v1241, %v1075
        %v1276 = vmul.f32 %v1243, %v1076
        %v1277 = vmul.f32 %v1245, %v1077
        %v1278 = vmul.f32 %v421, %v421
        %v1279 = vmul.f32 %v422, %v422
        %v1280 = vmul.f32 %v423, %v423
        %v1281 = vmul.f32 %v424, %v424
        %v1282 = vmul.f32 %v425, %v425
        %v1283 = vmul.f32 %v426, %v426
        %v1284 = vmul.f32 %v427, %v427
        %v1285 = vmul.f32 %v428, %v428
        %v1286 = vmul.f32 %v1278, -0.6219436
        %v1287 = vmul.f32 %v1279, -0.6219436
        %v1288 = vmul.f32 %v1280, -0.6219436
        %v1289 = vmul.f32 %v1281, -0.6219436
        %v1290 = vmul.f32 %v1282, -0.6219436
        %v1291 = vmul.f32 %v1283, -0.6219436
        %v1292 = vmul.f32 %v1284, -0.6219436
        %v1293 = vmul.f32 %v1285, -0.6219436
        %v1294 = vmul.f32 %v429, %v429
        %v1295 = vmul.f32 %v430, %v430
        %v1296 = vmul.f32 %v431, %v431
        %v1297 = vmul.f32 %v432, %v432
        %v1298 = vmul.f32 %v433, %v433
        %v1299 = vmul.f32 %v434, %v434
        %v1300 = vmul.f32 %v435, %v435
        %v1301 = vmul.f32 %v436, %v436
        %v1302 = vmul.f32 %v1294, 0.6248041
        %v1303 = vmul.f32 %v1295, 0.6248041
        %v1304 = vmul.f32 %v1296, 0.6248041
        %v1305 = vmul.f32 %v1297, 0.6248041
        %v1306 = vmul.f32 %v1298, 0.6248041
        %v1307 = vmul.f32 %v1299, 0.6248041
        %v1308 = vmul.f32 %v1300, 0.6248041
        %v1309 = vmul.f32 %v1301, 0.6248041
        %v1310 = vadd.f32 %v1286, %v1302
        %v1311 = vadd.f32 %v1287, %v1303
        %v1312 = vadd.f32 %v1288, %v1304
        %v1313 = vadd.f32 %v1289, %v1305
        %v1314 = vadd.f32 %v1290, %v1306
        %v1315 = vadd.f32 %v1291, %v1307
        %v1316 = vadd.f32 %v1292, %v1308
        %v1317 = vadd.f32 %v1293, %v1309
        %v1318 = vmul.f32 %v437, %v437
        %v1319 = vmul.f32 %v438, %v438
        %v1320 = vmul.f32 %v439, %v439
        %v1321 = vmul.f32 %v440, %v440
        %v1322 = vmul.f32 %v441, %v441
        %v1323 = vmul.f32 %v442, %v442
        %v1324 = vmul.f32 %v443, %v443
        %v1325 = vmul.f32 %v444, %v444
        %v1326 = vmul.f32 %v1318, 1.6820775
        %v1327 = vmul.f32 %v1319, 1.6820775
        %v1328 = vmul.f32 %v1320, 1.6820775
        %v1329 = vmul.f32 %v1321, 1.6820775
        %v1330 = vmul.f32 %v1322, 1.6820775
        %v1331 = vmul.f32 %v1323, 1.6820775
        %v1332 = vmul.f32 %v1324, 1.6820775
        %v1333 = vmul.f32 %v1325, 1.6820775
        %v1334 = vadd.f32 %v1310, %v1326
        %v1335 = vadd.f32 %v1311, %v1327
        %v1336 = vadd.f32 %v1312, %v1328
        %v1337 = vadd.f32 %v1313, %v1329
        %v1338 = vadd.f32 %v1314, %v1330
        %v1339 = vadd.f32 %v1315, %v1331
        %v1340 = vadd.f32 %v1316, %v1332
        %v1341 = vadd.f32 %v1317, %v1333
        %v1342 = vmul.f32 %v445, %v445
        %v1343 = vmul.f32 %v446, %v446
        %v1344 = vmul.f32 %v447, %v447
        %v1345 = vmul.f32 %v448, %v448
        %v1346 = vmul.f32 %v449, %v449
        %v1347 = vmul.f32 %v450, %v450
        %v1348 = vmul.f32 %v451, %v451
        %v1349 = vmul.f32 %v452, %v452
        %v1350 = vmul.f32 %v1342, -0.8080128
        %v1351 = vmul.f32 %v1343, -0.8080128
        %v1352 = vmul.f32 %v1344, -0.8080128
        %v1353 = vmul.f32 %v1345, -0.8080128
        %v1354 = vmul.f32 %v1346, -0.8080128
        %v1355 = vmul.f32 %v1347, -0.8080128
        %v1356 = vmul.f32 %v1348, -0.8080128
        %v1357 = vmul.f32 %v1349, -0.8080128
        %v1358 = vadd.f32 %v1334, %v1350
        %v1359 = vadd.f32 %v1335, %v1351
        %v1360 = vadd.f32 %v1336, %v1352
        %v1361 = vadd.f32 %v1337, %v1353
        %v1362 = vadd.f32 %v1338, %v1354
        %v1363 = vadd.f32 %v1339, %v1355
        %v1364 = vadd.f32 %v1340, %v1356
        %v1365 = vadd.f32 %v1341, %v1357
        %v1366 = vmul.f32 %v453, %v453
        %v1367 = vmul.f32 %v454, %v454
        %v1368 = vmul.f32 %v455, %v455
        %v1369 = vmul.f32 %v456, %v456
        %v1370 = vmul.f32 %v457, %v457
        %v1371 = vmul.f32 %v458, %v458
        %v1372 = vmul.f32 %v459, %v459
        %v1373 = vmul.f32 %v460, %v460
        %v1374 = vmul.f32 %v1366, -2.3662179
        %v1375 = vmul.f32 %v1367, -2.3662179
        %v1376 = vmul.f32 %v1368, -2.3662179
        %v1377 = vmul.f32 %v1369, -2.3662179
        %v1378 = vmul.f32 %v1370, -2.3662179
        %v1379 = vmul.f32 %v1371, -2.3662179
        %v1380 = vmul.f32 %v1372, -2.3662179
        %v1381 = vmul.f32 %v1373, -2.3662179
        %v1382 = vadd.f32 %v1358, %v1374
        %v1383 = vadd.f32 %v1359, %v1375
        %v1384 = vadd.f32 %v1360, %v1376
        %v1385 = vadd.f32 %v1361, %v1377
        %v1386 = vadd.f32 %v1362, %v1378
        %v1387 = vadd.f32 %v1363, %v1379
        %v1388 = vadd.f32 %v1364, %v1380
        %v1389 = vadd.f32 %v1365, %v1381
        %v1390 = vmul.f32 %v461, %v461
        %v1391 = vmul.f32 %v462, %v462
        %v1392 = vmul.f32 %v463, %v463
        %v1393 = vmul.f32 %v464, %v464
        %v1394 = vmul.f32 %v465, %v465
        %v1395 = vmul.f32 %v466, %v466
        %v1396 = vmul.f32 %v467, %v467
        %v1397 = vmul.f32 %v468, %v468
        %v1398 = vmul.f32 %v1390, 0.8959463
        %v1399 = vmul.f32 %v1391, 0.8959463
        %v1400 = vmul.f32 %v1392, 0.8959463
        %v1401 = vmul.f32 %v1393, 0.8959463
        %v1402 = vmul.f32 %v1394, 0.8959463
        %v1403 = vmul.f32 %v1395, 0.8959463
        %v1404 = vmul.f32 %v1396, 0.8959463
        %v1405 = vmul.f32 %v1397, 0.8959463
        %v1406 = vadd.f32 %v1382, %v1398
        %v1407 = vadd.f32 %v1383, %v1399
        %v1408 = vadd.f32 %v1384, %v1400
        %v1409 = vadd.f32 %v1385, %v1401
        %v1410 = vadd.f32 %v1386, %v1402
        %v1411 = vadd.f32 %v1387, %v1403
        %v1412 = vadd.f32 %v1388, %v1404
        %v1413 = vadd.f32 %v1389, %v1405
        %v1414 = vmul.f32 %v469, %v469
        %v1415 = vmul.f32 %v470, %v470
        %v1416 = vmul.f32 %v471, %v471
        %v1417 = vmul.f32 %v472, %v472
        %v1418 = vmul.f32 %v473, %v473
        %v1419 = vmul.f32 %v474, %v474
        %v1420 = vmul.f32 %v475, %v475
        %v1421 = vmul.f32 %v476, %v476
        %v1422 = vmul.f32 %v1414, 1.4628075
        %v1423 = vmul.f32 %v1415, 1.4628075
        %v1424 = vmul.f32 %v1416, 1.4628075
        %v1425 = vmul.f32 %v1417, 1.4628075
        %v1426 = vmul.f32 %v1418, 1.4628075
        %v1427 = vmul.f32 %v1419, 1.4628075
        %v1428 = vmul.f32 %v1420, 1.4628075
        %v1429 = vmul.f32 %v1421, 1.4628075
        %v1430 = vadd.f32 %v1406, %v1422
        %v1431 = vadd.f32 %v1407, %v1423
        %v1432 = vadd.f32 %v1408, %v1424
        %v1433 = vadd.f32 %v1409, %v1425
        %v1434 = vadd.f32 %v1410, %v1426
        %v1435 = vadd.f32 %v1411, %v1427
        %v1436 = vadd.f32 %v1412, %v1428
        %v1437 = vadd.f32 %v1413, %v1429
        %v1438 = vmul.f32 %v477, %v477
        %v1439 = vmul.f32 %v478, %v478
        %v1440 = vmul.f32 %v479, %v479
        %v1441 = vmul.f32 %v480, %v480
        %v1442 = vmul.f32 %v481, %v481
        %v1443 = vmul.f32 %v482, %v482
        %v1444 = vmul.f32 %v483, %v483
        %v1445 = vmul.f32 %v484, %v484
        %v1446 = vmul.f32 %v1438, -0.5955287
        %v1447 = vmul.f32 %v1439, -0.5955287
        %v1448 = vmul.f32 %v1440, -0.5955287
        %v1449 = vmul.f32 %v1441, -0.5955287
        %v1450 = vmul.f32 %v1442, -0.5955287
        %v1451 = vmul.f32 %v1443, -0.5955287
        %v1452 = vmul.f32 %v1444, -0.5955287
        %v1453 = vmul.f32 %v1445, -0.5955287
        %v1454 = vadd.f32 %v1430, %v1446
        %v1455 = vadd.f32 %v1431, %v1447
        %v1456 = vadd.f32 %v1432, %v1448
        %v1457 = vadd.f32 %v1433, %v1449
        %v1458 = vadd.f32 %v1434, %v1450
        %v1459 = vadd.f32 %v1435, %v1451
        %v1460 = vadd.f32 %v1436, %v1452
        %v1461 = vadd.f32 %v1437, %v1453
        %p1462 = scmp.eq.s32.totalorder %s36, 0
        // Predicated region
        $region45: #{tpu_custom_call.1} parent=35 // pred_check
          %p1463 = pneg %p1462
        $region46: #{tpu_custom_call.1} parent=35 // pred_check_branch
          %1465 = sbr.rel (%p1463) target = $region48
        $region47: #{tpu_custom_call.1} parent=35 // pred_region
          %1466 = vst [vmem:[#allocation2] sm:$0xff] %v421
          %1467 = vst [vmem:[#allocation2 + $0x8] sm:$0xff] %v422
          %1468 = vst [vmem:[#allocation2 + $0x10] sm:$0xff] %v423
          %1469 = vst [vmem:[#allocation2 + $0x18] sm:$0xff] %v424
          %1470 = vst [vmem:[#allocation2 + $0x20] sm:$0xff] %v425
          %1471 = vst [vmem:[#allocation2 + $0x28] sm:$0xff] %v426
          %1472 = vst [vmem:[#allocation2 + $0x30] sm:$0xff] %v427
          %1473 = vst [vmem:[#allocation2 + $0x38] sm:$0xff] %v428
          %1474 = vst [vmem:[#allocation2 + $0x40] sm:$0xff] %v429
          %1475 = vst [vmem:[#allocation2 + $0x48] sm:$0xff] %v430
          %1476 = vst [vmem:[#allocation2 + $0x50] sm:$0xff] %v431
          %1477 = vst [vmem:[#allocation2 + $0x58] sm:$0xff] %v432
          %1478 = vst [vmem:[#allocation2 + $0x60] sm:$0xff] %v433
          %1479 = vst [vmem:[#allocation2 + $0x68] sm:$0xff] %v434
          %1480 = vst [vmem:[#allocation2 + $0x70] sm:$0xff] %v435
          %1481 = vst [vmem:[#allocation2 + $0x78] sm:$0xff] %v436
          %1482 = vst [vmem:[#allocation2 + $0x80] sm:$0xff] %v437
          %1483 = vst [vmem:[#allocation2 + $0x88] sm:$0xff] %v438
          %1484 = vst [vmem:[#allocation2 + $0x90] sm:$0xff] %v439
          %1485 = vst [vmem:[#allocation2 + $0x98] sm:$0xff] %v440
          %1486 = vst [vmem:[#allocation2 + $0xa0] sm:$0xff] %v441
          %1487 = vst [vmem:[#allocation2 + $0xa8] sm:$0xff] %v442
          %1488 = vst [vmem:[#allocation2 + $0xb0] sm:$0xff] %v443
          %1489 = vst [vmem:[#allocation2 + $0xb8] sm:$0xff] %v444
          %1490 = vst [vmem:[#allocation2 + $0xc0] sm:$0xff] %v445
          %1491 = vst [vmem:[#allocation2 + $0xc8] sm:$0xff] %v446
          %1492 = vst [vmem:[#allocation2 + $0xd0] sm:$0xff] %v447
          %1493 = vst [vmem:[#allocation2 + $0xd8] sm:$0xff] %v448
          %1494 = vst [vmem:[#allocation2 + $0xe0] sm:$0xff] %v449
          %1495 = vst [vmem:[#allocation2 + $0xe8] sm:$0xff] %v450
          %1496 = vst [vmem:[#allocation2 + $0xf0] sm:$0xff] %v451
          %1497 = vst [vmem:[#allocation2 + $0xf8] sm:$0xff] %v452
          %1498 = vst [vmem:[#allocation2 + $0x100] sm:$0xff] %v453
          %1499 = vst [vmem:[#allocation2 + $0x108] sm:$0xff] %v454
          %1500 = vst [vmem:[#allocation2 + $0x110] sm:$0xff] %v455
          %1501 = vst [vmem:[#allocation2 + $0x118] sm:$0xff] %v456
          %1502 = vst [vmem:[#allocation2 + $0x120] sm:$0xff] %v457
          %1503 = vst [vmem:[#allocation2 + $0x128] sm:$0xff] %v458
          %1504 = vst [vmem:[#allocation2 + $0x130] sm:$0xff] %v459
          %1505 = vst [vmem:[#allocation2 + $0x138] sm:$0xff] %v460
          %1506 = vst [vmem:[#allocation2 + $0x140] sm:$0xff] %v461
          %1507 = vst [vmem:[#allocation2 + $0x148] sm:$0xff] %v462
          %1508 = vst [vmem:[#allocation2 + $0x150] sm:$0xff] %v463
          %1509 = vst [vmem:[#allocation2 + $0x158] sm:$0xff] %v464
          %1510 = vst [vmem:[#allocation2 + $0x160] sm:$0xff] %v465
          %1511 = vst [vmem:[#allocation2 + $0x168] sm:$0xff] %v466
          %1512 = vst [vmem:[#allocation2 + $0x170] sm:$0xff] %v467
          %1513 = vst [vmem:[#allocation2 + $0x178] sm:$0xff] %v468
          %1514 = vst [vmem:[#allocation2 + $0x180] sm:$0xff] %v469
          %1515 = vst [vmem:[#allocation2 + $0x188] sm:$0xff] %v470
          %1516 = vst [vmem:[#allocation2 + $0x190] sm:$0xff] %v471
          %1517 = vst [vmem:[#allocation2 + $0x198] sm:$0xff] %v472
          %1518 = vst [vmem:[#allocation2 + $0x1a0] sm:$0xff] %v473
          %1519 = vst [vmem:[#allocation2 + $0x1a8] sm:$0xff] %v474
          %1520 = vst [vmem:[#allocation2 + $0x1b0] sm:$0xff] %v475
          %1521 = vst [vmem:[#allocation2 + $0x1b8] sm:$0xff] %v476
          %1522 = vst [vmem:[#allocation2 + $0x1c0] sm:$0xff] %v477
          %1523 = vst [vmem:[#allocation2 + $0x1c8] sm:$0xff] %v478
          %1524 = vst [vmem:[#allocation2 + $0x1d0] sm:$0xff] %v479
          %1525 = vst [vmem:[#allocation2 + $0x1d8] sm:$0xff] %v480
          %1526 = vst [vmem:[#allocation2 + $0x1e0] sm:$0xff] %v481
          %1527 = vst [vmem:[#allocation2 + $0x1e8] sm:$0xff] %v482
          %1528 = vst [vmem:[#allocation2 + $0x1f0] sm:$0xff] %v483
          %1529 = vst [vmem:[#allocation2 + $0x1f8] sm:$0xff] %v484
          %1530 = vst [vmem:[#allocation3] sm:$0xff] %v1454
          %1531 = vst [vmem:[#allocation3 + $0x8] sm:$0xff] %v1455
          %1532 = vst [vmem:[#allocation3 + $0x10] sm:$0xff] %v1456
          %1533 = vst [vmem:[#allocation3 + $0x18] sm:$0xff] %v1457
          %1534 = vst [vmem:[#allocation3 + $0x20] sm:$0xff] %v1458
          %1535 = vst [vmem:[#allocation3 + $0x28] sm:$0xff] %v1459
          %1536 = vst [vmem:[#allocation3 + $0x30] sm:$0xff] %v1460
          %1537 = vst [vmem:[#allocation3 + $0x38] sm:$0xff] %v1461
          %1538 = vst [vmem:[#allocation4] sm:$0xff] %v1246
          %1539 = vst [vmem:[#allocation4 + $0x8] sm:$0xff] %v1247
          %1540 = vst [vmem:[#allocation4 + $0x10] sm:$0xff] %v1248
          %1541 = vst [vmem:[#allocation4 + $0x18] sm:$0xff] %v1249
          %1542 = vst [vmem:[#allocation4 + $0x20] sm:$0xff] %v1250
          %1543 = vst [vmem:[#allocation4 + $0x28] sm:$0xff] %v1251
          %1544 = vst [vmem:[#allocation4 + $0x30] sm:$0xff] %v1252
          %1545 = vst [vmem:[#allocation4 + $0x38] sm:$0xff] %v1253
          %1546 = vst [vmem:[#allocation4 + $0x40] sm:$0xff] %v1254
          %1547 = vst [vmem:[#allocation4 + $0x48] sm:$0xff] %v1255
          %1548 = vst [vmem:[#allocation4 + $0x50] sm:$0xff] %v1256
          %1549 = vst [vmem:[#allocation4 + $0x58] sm:$0xff] %v1257
          %1550 = vst [vmem:[#allocation4 + $0x60] sm:$0xff] %v1258
          %1551 = vst [vmem:[#allocation4 + $0x68] sm:$0xff] %v1259
          %1552 = vst [vmem:[#allocation4 + $0x70] sm:$0xff] %v1260
          %1553 = vst [vmem:[#allocation4 + $0x78] sm:$0xff] %v1261
          %1554 = vst [vmem:[#allocation4 + $0x80] sm:$0xff] %v1262
          %1555 = vst [vmem:[#allocation4 + $0x88] sm:$0xff] %v1263
          %1556 = vst [vmem:[#allocation4 + $0x90] sm:$0xff] %v1264
          %1557 = vst [vmem:[#allocation4 + $0x98] sm:$0xff] %v1265
          %1558 = vst [vmem:[#allocation4 + $0xa0] sm:$0xff] %v1266
          %1559 = vst [vmem:[#allocation4 + $0xa8] sm:$0xff] %v1267
          %1560 = vst [vmem:[#allocation4 + $0xb0] sm:$0xff] %v1268
          %1561 = vst [vmem:[#allocation4 + $0xb8] sm:$0xff] %v1269
          %1562 = vst [vmem:[#allocation4 + $0xc0] sm:$0xff] %v1270
          %1563 = vst [vmem:[#allocation4 + $0xc8] sm:$0xff] %v1271
          %1564 = vst [vmem:[#allocation4 + $0xd0] sm:$0xff] %v1272
          %1565 = vst [vmem:[#allocation4 + $0xd8] sm:$0xff] %v1273
          %1566 = vst [vmem:[#allocation4 + $0xe0] sm:$0xff] %v1274
          %1567 = vst [vmem:[#allocation4 + $0xe8] sm:$0xff] %v1275
          %1568 = vst [vmem:[#allocation4 + $0xf0] sm:$0xff] %v1276
          %1569 = vst [vmem:[#allocation4 + $0xf8] sm:$0xff] %v1277
          %v1570 = vadd.f32 %v1231, 2.8284271e-08
          %v1571 = vadd.f32 %v1233, 2.8284271e-08
          %v1572 = vadd.f32 %v1235, 2.8284271e-08
          %v1573 = vadd.f32 %v1237, 2.8284271e-08
          %v1574 = vadd.f32 %v1239, 2.8284271e-08
          %v1575 = vadd.f32 %v1241, 2.8284271e-08
          %v1576 = vadd.f32 %v1243, 2.8284271e-08
          %v1577 = vadd.f32 %v1245, 2.8284271e-08
          %1578 = vst [vmem:[#allocation5] sm:$0xff] %v1570
          %1579 = vst [vmem:[#allocation5 + $0x8] sm:$0xff] %v1571
          %1580 = vst [vmem:[#allocation5 + $0x10] sm:$0xff] %v1572
          %1581 = vst [vmem:[#allocation5 + $0x18] sm:$0xff] %v1573
          %1582 = vst [vmem:[#allocation5 + $0x20] sm:$0xff] %v1574
          %1583 = vst [vmem:[#allocation5 + $0x28] sm:$0xff] %v1575
          %1584 = vst [vmem:[#allocation5 + $0x30] sm:$0xff] %v1576
          %1585 = vst [vmem:[#allocation5 + $0x38] sm:$0xff] %v1577
        $region48: #{tpu_custom_call.1} parent=35 // pred_fallthru
          _
        %p1586 = scmp.gt.s32.totalorder %s36, 0
        // Predicated region
        $region49: #{tpu_custom_call.1} parent=35 // pred_check
          %p1587 = pneg %p1586
        $region50: #{tpu_custom_call.1} parent=35 // pred_check_branch
          %1589 = sbr.rel (%p1587) target = $region52
        $region51: #{tpu_custom_call.1} parent=35 // pred_region
          %v1590 = vld [vmem:[#allocation2] sm:$0xff]
          %v1591 = vld [vmem:[#allocation2 + $0x8] sm:$0xff]
          %v1592 = vld [vmem:[#allocation2 + $0x10] sm:$0xff]
          %v1593 = vld [vmem:[#allocation2 + $0x18] sm:$0xff]
          %v1594 = vld [vmem:[#allocation2 + $0x20] sm:$0xff]
          %v1595 = vld [vmem:[#allocation2 + $0x28] sm:$0xff]
          %v1596 = vld [vmem:[#allocation2 + $0x30] sm:$0xff]
          %v1597 = vld [vmem:[#allocation2 + $0x38] sm:$0xff]
          %v1598 = vld [vmem:[#allocation2 + $0x40] sm:$0xff]
          %v1599 = vld [vmem:[#allocation2 + $0x48] sm:$0xff]
          %v1600 = vld [vmem:[#allocation2 + $0x50] sm:$0xff]
          %v1601 = vld [vmem:[#allocation2 + $0x58] sm:$0xff]
          %v1602 = vld [vmem:[#allocation2 + $0x60] sm:$0xff]
          %v1603 = vld [vmem:[#allocation2 + $0x68] sm:$0xff]
          %v1604 = vld [vmem:[#allocation2 + $0x70] sm:$0xff]
          %v1605 = vld [vmem:[#allocation2 + $0x78] sm:$0xff]
          %v1606 = vld [vmem:[#allocation2 + $0x80] sm:$0xff]
          %v1607 = vld [vmem:[#allocation2 + $0x88] sm:$0xff]
          %v1608 = vld [vmem:[#allocation2 + $0x90] sm:$0xff]
          %v1609 = vld [vmem:[#allocation2 + $0x98] sm:$0xff]
          %v1610 = vld [vmem:[#allocation2 + $0xa0] sm:$0xff]
          %v1611 = vld [vmem:[#allocation2 + $0xa8] sm:$0xff]
          %v1612 = vld [vmem:[#allocation2 + $0xb0] sm:$0xff]
          %v1613 = vld [vmem:[#allocation2 + $0xb8] sm:$0xff]
          %v1614 = vld [vmem:[#allocation2 + $0xc0] sm:$0xff]
          %v1615 = vld [vmem:[#allocation2 + $0xc8] sm:$0xff]
          %v1616 = vld [vmem:[#allocation2 + $0xd0] sm:$0xff]
          %v1617 = vld [vmem:[#allocation2 + $0xd8] sm:$0xff]
          %v1618 = vld [vmem:[#allocation2 + $0xe0] sm:$0xff]
          %v1619 = vld [vmem:[#allocation2 + $0xe8] sm:$0xff]
          %v1620 = vld [vmem:[#allocation2 + $0xf0] sm:$0xff]
          %v1621 = vld [vmem:[#allocation2 + $0xf8] sm:$0xff]
          %v1622 = vld [vmem:[#allocation2 + $0x100] sm:$0xff]
          %v1623 = vld [vmem:[#allocation2 + $0x108] sm:$0xff]
          %v1624 = vld [vmem:[#allocation2 + $0x110] sm:$0xff]
          %v1625 = vld [vmem:[#allocation2 + $0x118] sm:$0xff]
          %v1626 = vld [vmem:[#allocation2 + $0x120] sm:$0xff]
          %v1627 = vld [vmem:[#allocation2 + $0x128] sm:$0xff]
          %v1628 = vld [vmem:[#allocation2 + $0x130] sm:$0xff]
          %v1629 = vld [vmem:[#allocation2 + $0x138] sm:$0xff]
          %v1630 = vld [vmem:[#allocation2 + $0x140] sm:$0xff]
          %v1631 = vld [vmem:[#allocation2 + $0x148] sm:$0xff]
          %v1632 = vld [vmem:[#allocation2 + $0x150] sm:$0xff]
          %v1633 = vld [vmem:[#allocation2 + $0x158] sm:$0xff]
          %v1634 = vld [vmem:[#allocation2 + $0x160] sm:$0xff]
          %v1635 = vld [vmem:[#allocation2 + $0x168] sm:$0xff]
          %v1636 = vld [vmem:[#allocation2 + $0x170] sm:$0xff]
          %v1637 = vld [vmem:[#allocation2 + $0x178] sm:$0xff]
          %v1638 = vld [vmem:[#allocation2 + $0x180] sm:$0xff]
          %v1639 = vld [vmem:[#allocation2 + $0x188] sm:$0xff]
          %v1640 = vld [vmem:[#allocation2 + $0x190] sm:$0xff]
          %v1641 = vld [vmem:[#allocation2 + $0x198] sm:$0xff]
          %v1642 = vld [vmem:[#allocation2 + $0x1a0] sm:$0xff]
          %v1643 = vld [vmem:[#allocation2 + $0x1a8] sm:$0xff]
          %v1644 = vld [vmem:[#allocation2 + $0x1b0] sm:$0xff]
          %v1645 = vld [vmem:[#allocation2 + $0x1b8] sm:$0xff]
          %v1646 = vld [vmem:[#allocation2 + $0x1c0] sm:$0xff]
          %v1647 = vld [vmem:[#allocation2 + $0x1c8] sm:$0xff]
          %v1648 = vld [vmem:[#allocation2 + $0x1d0] sm:$0xff]
          %v1649 = vld [vmem:[#allocation2 + $0x1d8] sm:$0xff]
          %v1650 = vld [vmem:[#allocation2 + $0x1e0] sm:$0xff]
          %v1651 = vld [vmem:[#allocation2 + $0x1e8] sm:$0xff]
          %v1652 = vld [vmem:[#allocation2 + $0x1f0] sm:$0xff]
          %v1653 = vld [vmem:[#allocation2 + $0x1f8] sm:$0xff]
          %v1654 = vadd.f32 %v1590, %v421
          %v1655 = vadd.f32 %v1591, %v422
          %v1656 = vadd.f32 %v1592, %v423
          %v1657 = vadd.f32 %v1593, %v424
          %v1658 = vadd.f32 %v1594, %v425
          %v1659 = vadd.f32 %v1595, %v426
          %v1660 = vadd.f32 %v1596, %v427
          %v1661 = vadd.f32 %v1597, %v428
          %v1662 = vadd.f32 %v1598, %v429
          %v1663 = vadd.f32 %v1599, %v430
          %v1664 = vadd.f32 %v1600, %v431
          %v1665 = vadd.f32 %v1601, %v432
          %v1666 = vadd.f32 %v1602, %v433
          %v1667 = vadd.f32 %v1603, %v434
          %v1668 = vadd.f32 %v1604, %v435
          %v1669 = vadd.f32 %v1605, %v436
          %v1670 = vadd.f32 %v1606, %v437
          %v1671 = vadd.f32 %v1607, %v438
          %v1672 = vadd.f32 %v1608, %v439
          %v1673 = vadd.f32 %v1609, %v440
          %v1674 = vadd.f32 %v1610, %v441
          %v1675 = vadd.f32 %v1611, %v442
          %v1676 = vadd.f32 %v1612, %v443
          %v1677 = vadd.f32 %v1613, %v444
          %v1678 = vadd.f32 %v1614, %v445
          %v1679 = vadd.f32 %v1615, %v446
          %v1680 = vadd.f32 %v1616, %v447
          %v1681 = vadd.f32 %v1617, %v448
          %v1682 = vadd.f32 %v1618, %v449
          %v1683 = vadd.f32 %v1619, %v450
          %v1684 = vadd.f32 %v1620, %v451
          %v1685 = vadd.f32 %v1621, %v452
          %v1686 = vadd.f32 %v1622, %v453
          %v1687 = vadd.f32 %v1623, %v454
          %v1688 = vadd.f32 %v1624, %v455
          %v1689 = vadd.f32 %v1625, %v456
          %v1690 = vadd.f32 %v1626, %v457
          %v1691 = vadd.f32 %v1627, %v458
          %v1692 = vadd.f32 %v1628, %v459
          %v1693 = vadd.f32 %v1629, %v460
          %v1694 = vadd.f32 %v1630, %v461
          %v1695 = vadd.f32 %v1631, %v462
          %v1696 = vadd.f32 %v1632, %v463
          %v1697 = vadd.f32 %v1633, %v464
          %v1698 = vadd.f32 %v1634, %v465
          %v1699 = vadd.f32 %v1635, %v466
          %v1700 = vadd.f32 %v1636, %v467
          %v1701 = vadd.f32 %v1637, %v468
          %v1702 = vadd.f32 %v1638, %v469
          %v1703 = vadd.f32 %v1639, %v470
          %v1704 = vadd.f32 %v1640, %v471
          %v1705 = vadd.f32 %v1641, %v472
          %v1706 = vadd.f32 %v1642, %v473
          %v1707 = vadd.f32 %v1643, %v474
          %v1708 = vadd.f32 %v1644, %v475
          %v1709 = vadd.f32 %v1645, %v476
          %v1710 = vadd.f32 %v1646, %v477
          %v1711 = vadd.f32 %v1647, %v478
          %v1712 = vadd.f32 %v1648, %v479
          %v1713 = vadd.f32 %v1649, %v480
          %v1714 = vadd.f32 %v1650, %v481
          %v1715 = vadd.f32 %v1651, %v482
          %v1716 = vadd.f32 %v1652, %v483
          %v1717 = vadd.f32 %v1653, %v484
          %1718 = vst [vmem:[#allocation2] sm:$0xff] %v1654
          %1719 = vst [vmem:[#allocation2 + $0x8] sm:$0xff] %v1655
          %1720 = vst [vmem:[#allocation2 + $0x10] sm:$0xff] %v1656
          %1721 = vst [vmem:[#allocation2 + $0x18] sm:$0xff] %v1657
          %1722 = vst [vmem:[#allocation2 + $0x20] sm:$0xff] %v1658
          %1723 = vst [vmem:[#allocation2 + $0x28] sm:$0xff] %v1659
          %1724 = vst [vmem:[#allocation2 + $0x30] sm:$0xff] %v1660
          %1725 = vst [vmem:[#allocation2 + $0x38] sm:$0xff] %v1661
          %1726 = vst [vmem:[#allocation2 + $0x40] sm:$0xff] %v1662
          %1727 = vst [vmem:[#allocation2 + $0x48] sm:$0xff] %v1663
          %1728 = vst [vmem:[#allocation2 + $0x50] sm:$0xff] %v1664
          %1729 = vst [vmem:[#allocation2 + $0x58] sm:$0xff] %v1665
          %1730 = vst [vmem:[#allocation2 + $0x60] sm:$0xff] %v1666
          %1731 = vst [vmem:[#allocation2 + $0x68] sm:$0xff] %v1667
          %1732 = vst [vmem:[#allocation2 + $0x70] sm:$0xff] %v1668
          %1733 = vst [vmem:[#allocation2 + $0x78] sm:$0xff] %v1669
          %1734 = vst [vmem:[#allocation2 + $0x80] sm:$0xff] %v1670
          %1735 = vst [vmem:[#allocation2 + $0x88] sm:$0xff] %v1671
          %1736 = vst [vmem:[#allocation2 + $0x90] sm:$0xff] %v1672
          %1737 = vst [vmem:[#allocation2 + $0x98] sm:$0xff] %v1673
          %1738 = vst [vmem:[#allocation2 + $0xa0] sm:$0xff] %v1674
          %1739 = vst [vmem:[#allocation2 + $0xa8] sm:$0xff] %v1675
          %1740 = vst [vmem:[#allocation2 + $0xb0] sm:$0xff] %v1676
          %1741 = vst [vmem:[#allocation2 + $0xb8] sm:$0xff] %v1677
          %1742 = vst [vmem:[#allocation2 + $0xc0] sm:$0xff] %v1678
          %1743 = vst [vmem:[#allocation2 + $0xc8] sm:$0xff] %v1679
          %1744 = vst [vmem:[#allocation2 + $0xd0] sm:$0xff] %v1680
          %1745 = vst [vmem:[#allocation2 + $0xd8] sm:$0xff] %v1681
          %1746 = vst [vmem:[#allocation2 + $0xe0] sm:$0xff] %v1682
          %1747 = vst [vmem:[#allocation2 + $0xe8] sm:$0xff] %v1683
          %1748 = vst [vmem:[#allocation2 + $0xf0] sm:$0xff] %v1684
          %1749 = vst [vmem:[#allocation2 + $0xf8] sm:$0xff] %v1685
          %1750 = vst [vmem:[#allocation2 + $0x100] sm:$0xff] %v1686
          %1751 = vst [vmem:[#allocation2 + $0x108] sm:$0xff] %v1687
          %1752 = vst [vmem:[#allocation2 + $0x110] sm:$0xff] %v1688
          %1753 = vst [vmem:[#allocation2 + $0x118] sm:$0xff] %v1689
          %1754 = vst [vmem:[#allocation2 + $0x120] sm:$0xff] %v1690
          %1755 = vst [vmem:[#allocation2 + $0x128] sm:$0xff] %v1691
          %1756 = vst [vmem:[#allocation2 + $0x130] sm:$0xff] %v1692
          %1757 = vst [vmem:[#allocation2 + $0x138] sm:$0xff] %v1693
          %1758 = vst [vmem:[#allocation2 + $0x140] sm:$0xff] %v1694
          %1759 = vst [vmem:[#allocation2 + $0x148] sm:$0xff] %v1695
          %1760 = vst [vmem:[#allocation2 + $0x150] sm:$0xff] %v1696
          %1761 = vst [vmem:[#allocation2 + $0x158] sm:$0xff] %v1697
          %1762 = vst [vmem:[#allocation2 + $0x160] sm:$0xff] %v1698
          %1763 = vst [vmem:[#allocation2 + $0x168] sm:$0xff] %v1699
          %1764 = vst [vmem:[#allocation2 + $0x170] sm:$0xff] %v1700
          %1765 = vst [vmem:[#allocation2 + $0x178] sm:$0xff] %v1701
          %1766 = vst [vmem:[#allocation2 + $0x180] sm:$0xff] %v1702
          %1767 = vst [vmem:[#allocation2 + $0x188] sm:$0xff] %v1703
          %1768 = vst [vmem:[#allocation2 + $0x190] sm:$0xff] %v1704
          %1769 = vst [vmem:[#allocation2 + $0x198] sm:$0xff] %v1705
          %1770 = vst [vmem:[#allocation2 + $0x1a0] sm:$0xff] %v1706
          %1771 = vst [vmem:[#allocation2 + $0x1a8] sm:$0xff] %v1707
          %1772 = vst [vmem:[#allocation2 + $0x1b0] sm:$0xff] %v1708
          %1773 = vst [vmem:[#allocation2 + $0x1b8] sm:$0xff] %v1709
          %1774 = vst [vmem:[#allocation2 + $0x1c0] sm:$0xff] %v1710
          %1775 = vst [vmem:[#allocation2 + $0x1c8] sm:$0xff] %v1711
          %1776 = vst [vmem:[#allocation2 + $0x1d0] sm:$0xff] %v1712
          %1777 = vst [vmem:[#allocation2 + $0x1d8] sm:$0xff] %v1713
          %1778 = vst [vmem:[#allocation2 + $0x1e0] sm:$0xff] %v1714
          %1779 = vst [vmem:[#allocation2 + $0x1e8] sm:$0xff] %v1715
          %1780 = vst [vmem:[#allocation2 + $0x1f0] sm:$0xff] %v1716
          %1781 = vst [vmem:[#allocation2 + $0x1f8] sm:$0xff] %v1717
          %v1782 = vld [vmem:[#allocation3] sm:$0xff]
          %v1783 = vld [vmem:[#allocation3 + $0x8] sm:$0xff]
          %v1784 = vld [vmem:[#allocation3 + $0x10] sm:$0xff]
          %v1785 = vld [vmem:[#allocation3 + $0x18] sm:$0xff]
          %v1786 = vld [vmem:[#allocation3 + $0x20] sm:$0xff]
          %v1787 = vld [vmem:[#allocation3 + $0x28] sm:$0xff]
          %v1788 = vld [vmem:[#allocation3 + $0x30] sm:$0xff]
          %v1789 = vld [vmem:[#allocation3 + $0x38] sm:$0xff]
          %v1790 = vadd.f32 %v1782, %v1454
          %v1791 = vadd.f32 %v1783, %v1455
          %v1792 = vadd.f32 %v1784, %v1456
          %v1793 = vadd.f32 %v1785, %v1457
          %v1794 = vadd.f32 %v1786, %v1458
          %v1795 = vadd.f32 %v1787, %v1459
          %v1796 = vadd.f32 %v1788, %v1460
          %v1797 = vadd.f32 %v1789, %v1461
          %1798 = vst [vmem:[#allocation3] sm:$0xff] %v1790
          %1799 = vst [vmem:[#allocation3 + $0x8] sm:$0xff] %v1791
          %1800 = vst [vmem:[#allocation3 + $0x10] sm:$0xff] %v1792
          %1801 = vst [vmem:[#allocation3 + $0x18] sm:$0xff] %v1793
          %1802 = vst [vmem:[#allocation3 + $0x20] sm:$0xff] %v1794
          %1803 = vst [vmem:[#allocation3 + $0x28] sm:$0xff] %v1795
          %1804 = vst [vmem:[#allocation3 + $0x30] sm:$0xff] %v1796
          %1805 = vst [vmem:[#allocation3 + $0x38] sm:$0xff] %v1797
          %v1806 = vld [vmem:[#allocation4] sm:$0xff]
          %v1807 = vld [vmem:[#allocation4 + $0x8] sm:$0xff]
          %v1808 = vld [vmem:[#allocation4 + $0x10] sm:$0xff]
          %v1809 = vld [vmem:[#allocation4 + $0x18] sm:$0xff]
          %v1810 = vld [vmem:[#allocation4 + $0x20] sm:$0xff]
          %v1811 = vld [vmem:[#allocation4 + $0x28] sm:$0xff]
          %v1812 = vld [vmem:[#allocation4 + $0x30] sm:$0xff]
          %v1813 = vld [vmem:[#allocation4 + $0x38] sm:$0xff]
          %v1814 = vld [vmem:[#allocation4 + $0x40] sm:$0xff]
          %v1815 = vld [vmem:[#allocation4 + $0x48] sm:$0xff]
          %v1816 = vld [vmem:[#allocation4 + $0x50] sm:$0xff]
          %v1817 = vld [vmem:[#allocation4 + $0x58] sm:$0xff]
          %v1818 = vld [vmem:[#allocation4 + $0x60] sm:$0xff]
          %v1819 = vld [vmem:[#allocation4 + $0x68] sm:$0xff]
          %v1820 = vld [vmem:[#allocation4 + $0x70] sm:$0xff]
          %v1821 = vld [vmem:[#allocation4 + $0x78] sm:$0xff]
          %v1822 = vld [vmem:[#allocation4 + $0x80] sm:$0xff]
          %v1823 = vld [vmem:[#allocation4 + $0x88] sm:$0xff]
          %v1824 = vld [vmem:[#allocation4 + $0x90] sm:$0xff]
          %v1825 = vld [vmem:[#allocation4 + $0x98] sm:$0xff]
          %v1826 = vld [vmem:[#allocation4 + $0xa0] sm:$0xff]
          %v1827 = vld [vmem:[#allocation4 + $0xa8] sm:$0xff]
          %v1828 = vld [vmem:[#allocation4 + $0xb0] sm:$0xff]
          %v1829 = vld [vmem:[#allocation4 + $0xb8] sm:$0xff]
          %v1830 = vld [vmem:[#allocation4 + $0xc0] sm:$0xff]
          %v1831 = vld [vmem:[#allocation4 + $0xc8] sm:$0xff]
          %v1832 = vld [vmem:[#allocation4 + $0xd0] sm:$0xff]
          %v1833 = vld [vmem:[#allocation4 + $0xd8] sm:$0xff]
          %v1834 = vld [vmem:[#allocation4 + $0xe0] sm:$0xff]
          %v1835 = vld [vmem:[#allocation4 + $0xe8] sm:$0xff]
          %v1836 = vld [vmem:[#allocation4 + $0xf0] sm:$0xff]
          %v1837 = vld [vmem:[#allocation4 + $0xf8] sm:$0xff]
          %v1838 = vadd.f32 %v1806, %v1246
          %v1839 = vadd.f32 %v1807, %v1247
          %v1840 = vadd.f32 %v1808, %v1248
          %v1841 = vadd.f32 %v1809, %v1249
          %v1842 = vadd.f32 %v1810, %v1250
          %v1843 = vadd.f32 %v1811, %v1251
          %v1844 = vadd.f32 %v1812, %v1252
          %v1845 = vadd.f32 %v1813, %v1253
          %v1846 = vadd.f32 %v1814, %v1254
          %v1847 = vadd.f32 %v1815, %v1255
          %v1848 = vadd.f32 %v1816, %v1256
          %v1849 = vadd.f32 %v1817, %v1257
          %v1850 = vadd.f32 %v1818, %v1258
          %v1851 = vadd.f32 %v1819, %v1259
          %v1852 = vadd.f32 %v1820, %v1260
          %v1853 = vadd.f32 %v1821, %v1261
          %v1854 = vadd.f32 %v1822, %v1262
          %v1855 = vadd.f32 %v1823, %v1263
          %v1856 = vadd.f32 %v1824, %v1264
          %v1857 = vadd.f32 %v1825, %v1265
          %v1858 = vadd.f32 %v1826, %v1266
          %v1859 = vadd.f32 %v1827, %v1267
          %v1860 = vadd.f32 %v1828, %v1268
          %v1861 = vadd.f32 %v1829, %v1269
          %v1862 = vadd.f32 %v1830, %v1270
          %v1863 = vadd.f32 %v1831, %v1271
          %v1864 = vadd.f32 %v1832, %v1272
          %v1865 = vadd.f32 %v1833, %v1273
          %v1866 = vadd.f32 %v1834, %v1274
          %v1867 = vadd.f32 %v1835, %v1275
          %v1868 = vadd.f32 %v1836, %v1276
          %v1869 = vadd.f32 %v1837, %v1277
          %1870 = vst [vmem:[#allocation4] sm:$0xff] %v1838
          %1871 = vst [vmem:[#allocation4 + $0x8] sm:$0xff] %v1839
          %1872 = vst [vmem:[#allocation4 + $0x10] sm:$0xff] %v1840
          %1873 = vst [vmem:[#allocation4 + $0x18] sm:$0xff] %v1841
          %1874 = vst [vmem:[#allocation4 + $0x20] sm:$0xff] %v1842
          %1875 = vst [vmem:[#allocation4 + $0x28] sm:$0xff] %v1843
          %1876 = vst [vmem:[#allocation4 + $0x30] sm:$0xff] %v1844
          %1877 = vst [vmem:[#allocation4 + $0x38] sm:$0xff] %v1845
          %1878 = vst [vmem:[#allocation4 + $0x40] sm:$0xff] %v1846
          %1879 = vst [vmem:[#allocation4 + $0x48] sm:$0xff] %v1847
          %1880 = vst [vmem:[#allocation4 + $0x50] sm:$0xff] %v1848
          %1881 = vst [vmem:[#allocation4 + $0x58] sm:$0xff] %v1849
          %1882 = vst [vmem:[#allocation4 + $0x60] sm:$0xff] %v1850
          %1883 = vst [vmem:[#allocation4 + $0x68] sm:$0xff] %v1851
          %1884 = vst [vmem:[#allocation4 + $0x70] sm:$0xff] %v1852
          %1885 = vst [vmem:[#allocation4 + $0x78] sm:$0xff] %v1853
          %1886 = vst [vmem:[#allocation4 + $0x80] sm:$0xff] %v1854
          %1887 = vst [vmem:[#allocation4 + $0x88] sm:$0xff] %v1855
          %1888 = vst [vmem:[#allocation4 + $0x90] sm:$0xff] %v1856
          %1889 = vst [vmem:[#allocation4 + $0x98] sm:$0xff] %v1857
          %1890 = vst [vmem:[#allocation4 + $0xa0] sm:$0xff] %v1858
          %1891 = vst [vmem:[#allocation4 + $0xa8] sm:$0xff] %v1859
          %1892 = vst [vmem:[#allocation4 + $0xb0] sm:$0xff] %v1860
          %1893 = vst [vmem:[#allocation4 + $0xb8] sm:$0xff] %v1861
          %1894 = vst [vmem:[#allocation4 + $0xc0] sm:$0xff] %v1862
          %1895 = vst [vmem:[#allocation4 + $0xc8] sm:$0xff] %v1863
          %1896 = vst [vmem:[#allocation4 + $0xd0] sm:$0xff] %v1864
          %1897 = vst [vmem:[#allocation4 + $0xd8] sm:$0xff] %v1865
          %1898 = vst [vmem:[#allocation4 + $0xe0] sm:$0xff] %v1866
          %1899 = vst [vmem:[#allocation4 + $0xe8] sm:$0xff] %v1867
          %1900 = vst [vmem:[#allocation4 + $0xf0] sm:$0xff] %v1868
          %1901 = vst [vmem:[#allocation4 + $0xf8] sm:$0xff] %v1869
          %v1902 = vld [vmem:[#allocation5] sm:$0xff]
          %v1903 = vld [vmem:[#allocation5 + $0x8] sm:$0xff]
          %v1904 = vld [vmem:[#allocation5 + $0x10] sm:$0xff]
          %v1905 = vld [vmem:[#allocation5 + $0x18] sm:$0xff]
          %v1906 = vld [vmem:[#allocation5 + $0x20] sm:$0xff]
          %v1907 = vld [vmem:[#allocation5 + $0x28] sm:$0xff]
          %v1908 = vld [vmem:[#allocation5 + $0x30] sm:$0xff]
          %v1909 = vld [vmem:[#allocation5 + $0x38] sm:$0xff]
          %v1910 = vadd.f32 %v1902, %v1231
          %v1911 = vadd.f32 %v1903, %v1233
          %v1912 = vadd.f32 %v1904, %v1235
          %v1913 = vadd.f32 %v1905, %v1237
          %v1914 = vadd.f32 %v1906, %v1239
          %v1915 = vadd.f32 %v1907, %v1241
          %v1916 = vadd.f32 %v1908, %v1243
          %v1917 = vadd.f32 %v1909, %v1245
          %1918 = vst [vmem:[#allocation5] sm:$0xff] %v1910
          %1919 = vst [vmem:[#allocation5 + $0x8] sm:$0xff] %v1911
          %1920 = vst [vmem:[#allocation5 + $0x10] sm:$0xff] %v1912
          %1921 = vst [vmem:[#allocation5 + $0x18] sm:$0xff] %v1913
          %1922 = vst [vmem:[#allocation5 + $0x20] sm:$0xff] %v1914
          %1923 = vst [vmem:[#allocation5 + $0x28] sm:$0xff] %v1915
          %1924 = vst [vmem:[#allocation5 + $0x30] sm:$0xff] %v1916
          %1925 = vst [vmem:[#allocation5 + $0x38] sm:$0xff] %v1917
        $region52: #{tpu_custom_call.1} parent=35 // pred_fallthru
          _
        %p1926 = scmp.eq.s32.totalorder %s36, 1
        // Predicated region
        $region53: #{tpu_custom_call.1} parent=35 // pred_check
          %p1927 = pneg %p1926
        $region54: #{tpu_custom_call.1} parent=35 // pred_check_branch
          %1929 = sbr.rel (%p1927) target = $region56
        $region55: #{tpu_custom_call.1} parent=35 // pred_region
          %v1930 = vld [vmem:[#allocation5] sm:$0xff]
          %v1931 = vld [vmem:[#allocation5 + $0x8] sm:$0xff]
          %v1932 = vld [vmem:[#allocation5 + $0x10] sm:$0xff]
          %v1933 = vld [vmem:[#allocation5 + $0x18] sm:$0xff]
          %v1934 = vld [vmem:[#allocation5 + $0x20] sm:$0xff]
          %v1935 = vld [vmem:[#allocation5 + $0x28] sm:$0xff]
          %v1936 = vld [vmem:[#allocation5 + $0x30] sm:$0xff]
          %v1937 = vld [vmem:[#allocation5 + $0x38] sm:$0xff]
          %v1938 = vrcp.pop %v1930
          %v1939 = vrcp.pop %v1931
          %v1940 = vrcp.pop %v1932
          %v1941 = vrcp.pop %v1933
          %v1942 = vrcp.pop %v1934
          %v1943 = vrcp.pop %v1935
          %v1944 = vrcp.pop %v1936
          %v1945 = vrcp.pop %v1937
          %v1946 = vld [vmem:[#allocation4] sm:$0xff]
          %v1947 = vld [vmem:[#allocation4 + $0x8] sm:$0xff]
          %v1948 = vld [vmem:[#allocation4 + $0x10] sm:$0xff]
          %v1949 = vld [vmem:[#allocation4 + $0x18] sm:$0xff]
          %v1950 = vld [vmem:[#allocation4 + $0x20] sm:$0xff]
          %v1951 = vld [vmem:[#allocation4 + $0x28] sm:$0xff]
          %v1952 = vld [vmem:[#allocation4 + $0x30] sm:$0xff]
          %v1953 = vld [vmem:[#allocation4 + $0x38] sm:$0xff]
          %v1954 = vmul.f32 %v1946, 1.2956359
          %v1955 = vmul.f32 %v1947, 1.2956359
          %v1956 = vmul.f32 %v1948, 1.2956359
          %v1957 = vmul.f32 %v1949, 1.2956359
          %v1958 = vmul.f32 %v1950, 1.2956359
          %v1959 = vmul.f32 %v1951, 1.2956359
          %v1960 = vmul.f32 %v1952, 1.2956359
          %v1961 = vmul.f32 %v1953, 1.2956359
          %s1962 = scalar_lea.vmem [#allocation4], 64
          %v1963 = vld [vmem:[%s1962] sm:$0xff]
          %v1964 = vld [vmem:[%s1962 + $0x8] sm:$0xff]
          %v1965 = vld [vmem:[%s1962 + $0x10] sm:$0xff]
          %v1966 = vld [vmem:[%s1962 + $0x18] sm:$0xff]
          %v1967 = vld [vmem:[%s1962 + $0x20] sm:$0xff]
          %v1968 = vld [vmem:[%s1962 + $0x28] sm:$0xff]
          %v1969 = vld [vmem:[%s1962 + $0x30] sm:$0xff]
          %v1970 = vld [vmem:[%s1962 + $0x38] sm:$0xff]
          %v1971 = vmul.f32 %v1963, 1.3550105
          %v1972 = vmul.f32 %v1964, 1.3550105
          %v1973 = vmul.f32 %v1965, 1.3550105
          %v1974 = vmul.f32 %v1966, 1.3550105
          %v1975 = vmul.f32 %v1967, 1.3550105
          %v1976 = vmul.f32 %v1968, 1.3550105
          %v1977 = vmul.f32 %v1969, 1.3550105
          %v1978 = vmul.f32 %v1970, 1.3550105
          %v1979 = vadd.f32 %v1954, %v1971
          %v1980 = vadd.f32 %v1955, %v1972
          %v1981 = vadd.f32 %v1956, %v1973
          %v1982 = vadd.f32 %v1957, %v1974
          %v1983 = vadd.f32 %v1958, %v1975
          %v1984 = vadd.f32 %v1959, %v1976
          %v1985 = vadd.f32 %v1960, %v1977
          %v1986 = vadd.f32 %v1961, %v1978
          %s1987 = scalar_lea.vmem [#allocation4], 128
          %v1988 = vld [vmem:[%s1987] sm:$0xff]
          %v1989 = vld [vmem:[%s1987 + $0x8] sm:$0xff]
          %v1990 = vld [vmem:[%s1987 + $0x10] sm:$0xff]
          %v1991 = vld [vmem:[%s1987 + $0x18] sm:$0xff]
          %v1992 = vld [vmem:[%s1987 + $0x20] sm:$0xff]
          %v1993 = vld [vmem:[%s1987 + $0x28] sm:$0xff]
          %v1994 = vld [vmem:[%s1987 + $0x30] sm:$0xff]
          %v1995 = vld [vmem:[%s1987 + $0x38] sm:$0xff]
          %v1996 = vmul.f32 %v1988, -0.40960556
          %v1997 = vmul.f32 %v1989, -0.40960556
          %v1998 = vmul.f32 %v1990, -0.40960556
          %v1999 = vmul.f32 %v1991, -0.40960556
          %v2000 = vmul.f32 %v1992, -0.40960556
          %v2001 = vmul.f32 %v1993, -0.40960556
          %v2002 = vmul.f32 %v1994, -0.40960556
          %v2003 = vmul.f32 %v1995, -0.40960556
          %v2004 = vadd.f32 %v1979, %v1996
          %v2005 = vadd.f32 %v1980, %v1997
          %v2006 = vadd.f32 %v1981, %v1998
          %v2007 = vadd.f32 %v1982, %v1999
          %v2008 = vadd.f32 %v1983, %v2000
          %v2009 = vadd.f32 %v1984, %v2001
          %v2010 = vadd.f32 %v1985, %v2002
          %v2011 = vadd.f32 %v1986, %v2003
          %s2012 = scalar_lea.vmem [#allocation4], 192
          %v2013 = vld [vmem:[%s2012] sm:$0xff]
          %v2014 = vld [vmem:[%s2012 + $0x8] sm:$0xff]
          %v2015 = vld [vmem:[%s2012 + $0x10] sm:$0xff]
          %v2016 = vld [vmem:[%s2012 + $0x18] sm:$0xff]
          %v2017 = vld [vmem:[%s2012 + $0x20] sm:$0xff]
          %v2018 = vld [vmem:[%s2012 + $0x28] sm:$0xff]
          %v2019 = vld [vmem:[%s2012 + $0x30] sm:$0xff]
          %v2020 = vld [vmem:[%s2012 + $0x38] sm:$0xff]
          %v2021 = vmul.f32 %v2013, -0.77188545
          %v2022 = vmul.f32 %v2014, -0.77188545
          %v2023 = vmul.f32 %v2015, -0.77188545
          %v2024 = vmul.f32 %v2016, -0.77188545
          %v2025 = vmul.f32 %v2017, -0.77188545
          %v2026 = vmul.f32 %v2018, -0.77188545
          %v2027 = vmul.f32 %v2019, -0.77188545
          %v2028 = vmul.f32 %v2020, -0.77188545
          %v2029 = vadd.f32 %v2004, %v2021
          %v2030 = vadd.f32 %v2005, %v2022
          %v2031 = vadd.f32 %v2006, %v2023
          %v2032 = vadd.f32 %v2007, %v2024
          %v2033 = vadd.f32 %v2008, %v2025
          %v2034 = vadd.f32 %v2009, %v2026
          %v2035 = vadd.f32 %v2010, %v2027
          %v2036 = vadd.f32 %v2011, %v2028
          %v2037 = vmul.f32 %v2029, %v1938
          %v2038 = vmul.f32 %v2030, %v1939
          %v2039 = vmul.f32 %v2031, %v1940
          %v2040 = vmul.f32 %v2032, %v1941
          %v2041 = vmul.f32 %v2033, %v1942
          %v2042 = vmul.f32 %v2034, %v1943
          %v2043 = vmul.f32 %v2035, %v1944
          %v2044 = vmul.f32 %v2036, %v1945
          %v2045 = vmul.f32 %v381, %v381
          %v2046 = vmul.f32 %v382, %v382
          %v2047 = vmul.f32 %v383, %v383
          %v2048 = vmul.f32 %v384, %v384
          %v2049 = vmul.f32 %v385, %v385
          %v2050 = vmul.f32 %v386, %v386
          %v2051 = vmul.f32 %v387, %v387
          %v2052 = vmul.f32 %v388, %v388
          %v2053 = vmul.f32 %v2045, -0.6219436
          %v2054 = vmul.f32 %v2046, -0.6219436
          %v2055 = vmul.f32 %v2047, -0.6219436
          %v2056 = vmul.f32 %v2048, -0.6219436
          %v2057 = vmul.f32 %v2049, -0.6219436
          %v2058 = vmul.f32 %v2050, -0.6219436
          %v2059 = vmul.f32 %v2051, -0.6219436
          %v2060 = vmul.f32 %v2052, -0.6219436
          %v2061 = vld [vmem:[#allocation2] sm:$0xff]
          %v2062 = vld [vmem:[#allocation2 + $0x8] sm:$0xff]
          %v2063 = vld [vmem:[#allocation2 + $0x10] sm:$0xff]
          %v2064 = vld [vmem:[#allocation2 + $0x18] sm:$0xff]
          %v2065 = vld [vmem:[#allocation2 + $0x20] sm:$0xff]
          %v2066 = vld [vmem:[#allocation2 + $0x28] sm:$0xff]
          %v2067 = vld [vmem:[#allocation2 + $0x30] sm:$0xff]
          %v2068 = vld [vmem:[#allocation2 + $0x38] sm:$0xff]
          %v2069 = vlaneseq
          %v2070 = vshrl.u32 %v2069, 7
          %v2071 = vsub.s32 0, %v2070
          %v2072 = vrot.slane %v381, %v2071
          %v2073 = vlaneseq
          %v2074 = vshrl.u32 %v2073, 7
          %v2075 = vsub.s32 0, %v2074
          %v2076 = vrot.slane %v382, %v2075
          %v2077 = vlaneseq
          %v2078 = vshrl.u32 %v2077, 7
          %v2079 = vsub.s32 0, %v2078
          %v2080 = vrot.slane %v383, %v2079
          %v2081 = vlaneseq
          %v2082 = vshrl.u32 %v2081, 7
          %v2083 = vsub.s32 0, %v2082
          %v2084 = vrot.slane %v384, %v2083
          %v2085 = vlaneseq
          %v2086 = vshrl.u32 %v2085, 7
          %v2087 = vsub.s32 0, %v2086
          %v2088 = vrot.slane %v385, %v2087
          %v2089 = vlaneseq
          %v2090 = vshrl.u32 %v2089, 7
          %v2091 = vsub.s32 0, %v2090
          %v2092 = vrot.slane %v386, %v2091
          %v2093 = vlaneseq
          %v2094 = vshrl.u32 %v2093, 7
          %v2095 = vsub.s32 0, %v2094
          %v2096 = vrot.slane %v387, %v2095
          %v2097 = vlaneseq
          %v2098 = vshrl.u32 %v2097, 7
          %v2099 = vsub.s32 0, %v2098
          %v2100 = vrot.slane %v388, %v2099
          %v2101 = vadd.f32 %v2061, %v2072
          %v2102 = vadd.f32 %v2062, %v2076
          %v2103 = vadd.f32 %v2063, %v2080
          %v2104 = vadd.f32 %v2064, %v2084
          %v2105 = vadd.f32 %v2065, %v2088
          %v2106 = vadd.f32 %v2066, %v2092
          %v2107 = vadd.f32 %v2067, %v2096
          %v2108 = vadd.f32 %v2068, %v2100
          %v2109 = vmul.f32 %v2101, 0.33333334
          %v2110 = vmul.f32 %v2102, 0.33333334
          %v2111 = vmul.f32 %v2103, 0.33333334
          %v2112 = vmul.f32 %v2104, 0.33333334
          %v2113 = vmul.f32 %v2105, 0.33333334
          %v2114 = vmul.f32 %v2106, 0.33333334
          %v2115 = vmul.f32 %v2107, 0.33333334
          %v2116 = vmul.f32 %v2108, 0.33333334
          %v2117 = vmul.f32 %v2109, %v2109
          %v2118 = vmul.f32 %v2110, %v2110
          %v2119 = vmul.f32 %v2111, %v2111
          %v2120 = vmul.f32 %v2112, %v2112
          %v2121 = vmul.f32 %v2113, %v2113
          %v2122 = vmul.f32 %v2114, %v2114
          %v2123 = vmul.f32 %v2115, %v2115
          %v2124 = vmul.f32 %v2116, %v2116
          %v2125 = vmul.f32 %v2117, -0.6219436
          %v2126 = vmul.f32 %v2118, -0.6219436
          %v2127 = vmul.f32 %v2119, -0.6219436
          %v2128 = vmul.f32 %v2120, -0.6219436
          %v2129 = vmul.f32 %v2121, -0.6219436
          %v2130 = vmul.f32 %v2122, -0.6219436
          %v2131 = vmul.f32 %v2123, -0.6219436
          %v2132 = vmul.f32 %v2124, -0.6219436
          %v2133 = vmul.f32 %v2045, 0.6248041
          %v2134 = vmul.f32 %v2046, 0.6248041
          %v2135 = vmul.f32 %v2047, 0.6248041
          %v2136 = vmul.f32 %v2048, 0.6248041
          %v2137 = vmul.f32 %v2049, 0.6248041
          %v2138 = vmul.f32 %v2050, 0.6248041
          %v2139 = vmul.f32 %v2051, 0.6248041
          %v2140 = vmul.f32 %v2052, 0.6248041
          %v2149 = vrot.slane %v2133, 1
          %v2150 = vrot.slane %v2134, 1
          %v2151 = vrot.slane %v2135, 1
          %v2152 = vrot.slane %v2136, 1
          %v2153 = vrot.slane %v2137, 1
          %v2154 = vrot.slane %v2138, 1
          %v2155 = vrot.slane %v2139, 1
          %v2156 = vrot.slane %v2140, 1
          %v2165 = vadd.f32 %v2053, %v2149
          %v2166 = vadd.f32 %v2054, %v2150
          %v2167 = vadd.f32 %v2055, %v2151
          %v2168 = vadd.f32 %v2056, %v2152
          %v2169 = vadd.f32 %v2057, %v2153
          %v2170 = vadd.f32 %v2058, %v2154
          %v2171 = vadd.f32 %v2059, %v2155
          %v2172 = vadd.f32 %v2060, %v2156
          %s2173 = scalar_lea.vmem [#allocation2], 64
          %v2174 = vld [vmem:[%s2173] sm:$0xff]
          %v2175 = vld [vmem:[%s2173 + $0x8] sm:$0xff]
          %v2176 = vld [vmem:[%s2173 + $0x10] sm:$0xff]
          %v2177 = vld [vmem:[%s2173 + $0x18] sm:$0xff]
          %v2178 = vld [vmem:[%s2173 + $0x20] sm:$0xff]
          %v2179 = vld [vmem:[%s2173 + $0x28] sm:$0xff]
          %v2180 = vld [vmem:[%s2173 + $0x30] sm:$0xff]
          %v2181 = vld [vmem:[%s2173 + $0x38] sm:$0xff]
          %v2182 = vlaneseq
          %v2183 = vshrl.u32 %v2182, 7
          %v2184 = vsub.s32 1, %v2183
          %v2185 = vrot.slane %v381, %v2184
          %v2186 = vlaneseq
          %v2187 = vshrl.u32 %v2186, 7
          %v2188 = vsub.s32 1, %v2187
          %v2189 = vrot.slane %v382, %v2188
          %v2190 = vlaneseq
          %v2191 = vshrl.u32 %v2190, 7
          %v2192 = vsub.s32 1, %v2191
          %v2193 = vrot.slane %v383, %v2192
          %v2194 = vlaneseq
          %v2195 = vshrl.u32 %v2194, 7
          %v2196 = vsub.s32 1, %v2195
          %v2197 = vrot.slane %v384, %v2196
          %v2198 = vlaneseq
          %v2199 = vshrl.u32 %v2198, 7
          %v2200 = vsub.s32 1, %v2199
          %v2201 = vrot.slane %v385, %v2200
          %v2202 = vlaneseq
          %v2203 = vshrl.u32 %v2202, 7
          %v2204 = vsub.s32 1, %v2203
          %v2205 = vrot.slane %v386, %v2204
          %v2206 = vlaneseq
          %v2207 = vshrl.u32 %v2206, 7
          %v2208 = vsub.s32 1, %v2207
          %v2209 = vrot.slane %v387, %v2208
          %v2210 = vlaneseq
          %v2211 = vshrl.u32 %v2210, 7
          %v2212 = vsub.s32 1, %v2211
          %v2213 = vrot.slane %v388, %v2212
          %v2214 = vadd.f32 %v2174, %v2185
          %v2215 = vadd.f32 %v2175, %v2189
          %v2216 = vadd.f32 %v2176, %v2193
          %v2217 = vadd.f32 %v2177, %v2197
          %v2218 = vadd.f32 %v2178, %v2201
          %v2219 = vadd.f32 %v2179, %v2205
          %v2220 = vadd.f32 %v2180, %v2209
          %v2221 = vadd.f32 %v2181, %v2213
          %v2222 = vmul.f32 %v2214, 0.33333334
          %v2223 = vmul.f32 %v2215, 0.33333334
          %v2224 = vmul.f32 %v2216, 0.33333334
          %v2225 = vmul.f32 %v2217, 0.33333334
          %v2226 = vmul.f32 %v2218, 0.33333334
          %v2227 = vmul.f32 %v2219, 0.33333334
          %v2228 = vmul.f32 %v2220, 0.33333334
          %v2229 = vmul.f32 %v2221, 0.33333334
          %v2230 = vmul.f32 %v2222, %v2222
          %v2231 = vmul.f32 %v2223, %v2223
          %v2232 = vmul.f32 %v2224, %v2224
          %v2233 = vmul.f32 %v2225, %v2225
          %v2234 = vmul.f32 %v2226, %v2226
          %v2235 = vmul.f32 %v2227, %v2227
          %v2236 = vmul.f32 %v2228, %v2228
          %v2237 = vmul.f32 %v2229, %v2229
          %v2238 = vmul.f32 %v2230, 0.6248041
          %v2239 = vmul.f32 %v2231, 0.6248041
          %v2240 = vmul.f32 %v2232, 0.6248041
          %v2241 = vmul.f32 %v2233, 0.6248041
          %v2242 = vmul.f32 %v2234, 0.6248041
          %v2243 = vmul.f32 %v2235, 0.6248041
          %v2244 = vmul.f32 %v2236, 0.6248041
          %v2245 = vmul.f32 %v2237, 0.6248041
          %v2246 = vadd.f32 %v2125, %v2238
          %v2247 = vadd.f32 %v2126, %v2239
          %v2248 = vadd.f32 %v2127, %v2240
          %v2249 = vadd.f32 %v2128, %v2241
          %v2250 = vadd.f32 %v2129, %v2242
          %v2251 = vadd.f32 %v2130, %v2243
          %v2252 = vadd.f32 %v2131, %v2244
          %v2253 = vadd.f32 %v2132, %v2245
          %v2254 = vmul.f32 %v2045, 1.6820775
          %v2255 = vmul.f32 %v2046, 1.6820775
          %v2256 = vmul.f32 %v2047, 1.6820775
          %v2257 = vmul.f32 %v2048, 1.6820775
          %v2258 = vmul.f32 %v2049, 1.6820775
          %v2259 = vmul.f32 %v2050, 1.6820775
          %v2260 = vmul.f32 %v2051, 1.6820775
          %v2261 = vmul.f32 %v2052, 1.6820775
          %v2270 = vrot.slane %v2254, 2
          %v2271 = vrot.slane %v2255, 2
          %v2272 = vrot.slane %v2256, 2
          %v2273 = vrot.slane %v2257, 2
          %v2274 = vrot.slane %v2258, 2
          %v2275 = vrot.slane %v2259, 2
          %v2276 = vrot.slane %v2260, 2
          %v2277 = vrot.slane %v2261, 2
          %v2286 = vadd.f32 %v2165, %v2270
          %v2287 = vadd.f32 %v2166, %v2271
          %v2288 = vadd.f32 %v2167, %v2272
          %v2289 = vadd.f32 %v2168, %v2273
          %v2290 = vadd.f32 %v2169, %v2274
          %v2291 = vadd.f32 %v2170, %v2275
          %v2292 = vadd.f32 %v2171, %v2276
          %v2293 = vadd.f32 %v2172, %v2277
          %s2294 = scalar_lea.vmem [#allocation2], 128
          %v2295 = vld [vmem:[%s2294] sm:$0xff]
          %v2296 = vld [vmem:[%s2294 + $0x8] sm:$0xff]
          %v2297 = vld [vmem:[%s2294 + $0x10] sm:$0xff]
          %v2298 = vld [vmem:[%s2294 + $0x18] sm:$0xff]
          %v2299 = vld [vmem:[%s2294 + $0x20] sm:$0xff]
          %v2300 = vld [vmem:[%s2294 + $0x28] sm:$0xff]
          %v2301 = vld [vmem:[%s2294 + $0x30] sm:$0xff]
          %v2302 = vld [vmem:[%s2294 + $0x38] sm:$0xff]
          %v2303 = vlaneseq
          %v2304 = vshrl.u32 %v2303, 7
          %v2305 = vsub.s32 2, %v2304
          %v2306 = vrot.slane %v381, %v2305
          %v2307 = vlaneseq
          %v2308 = vshrl.u32 %v2307, 7
          %v2309 = vsub.s32 2, %v2308
          %v2310 = vrot.slane %v382, %v2309
          %v2311 = vlaneseq
          %v2312 = vshrl.u32 %v2311, 7
          %v2313 = vsub.s32 2, %v2312
          %v2314 = vrot.slane %v383, %v2313
          %v2315 = vlaneseq
          %v2316 = vshrl.u32 %v2315, 7
          %v2317 = vsub.s32 2, %v2316
          %v2318 = vrot.slane %v384, %v2317
          %v2319 = vlaneseq
          %v2320 = vshrl.u32 %v2319, 7
          %v2321 = vsub.s32 2, %v2320
          %v2322 = vrot.slane %v385, %v2321
          %v2323 = vlaneseq
          %v2324 = vshrl.u32 %v2323, 7
          %v2325 = vsub.s32 2, %v2324
          %v2326 = vrot.slane %v386, %v2325
          %v2327 = vlaneseq
          %v2328 = vshrl.u32 %v2327, 7
          %v2329 = vsub.s32 2, %v2328
          %v2330 = vrot.slane %v387, %v2329
          %v2331 = vlaneseq
          %v2332 = vshrl.u32 %v2331, 7
          %v2333 = vsub.s32 2, %v2332
          %v2334 = vrot.slane %v388, %v2333
          %v2335 = vadd.f32 %v2295, %v2306
          %v2336 = vadd.f32 %v2296, %v2310
          %v2337 = vadd.f32 %v2297, %v2314
          %v2338 = vadd.f32 %v2298, %v2318
          %v2339 = vadd.f32 %v2299, %v2322
          %v2340 = vadd.f32 %v2300, %v2326
          %v2341 = vadd.f32 %v2301, %v2330
          %v2342 = vadd.f32 %v2302, %v2334
          %v2343 = vmul.f32 %v2335, 0.33333334
          %v2344 = vmul.f32 %v2336, 0.33333334
          %v2345 = vmul.f32 %v2337, 0.33333334
          %v2346 = vmul.f32 %v2338, 0.33333334
          %v2347 = vmul.f32 %v2339, 0.33333334
          %v2348 = vmul.f32 %v2340, 0.33333334
          %v2349 = vmul.f32 %v2341, 0.33333334
          %v2350 = vmul.f32 %v2342, 0.33333334
          %v2351 = vmul.f32 %v2343, %v2343
          %v2352 = vmul.f32 %v2344, %v2344
          %v2353 = vmul.f32 %v2345, %v2345
          %v2354 = vmul.f32 %v2346, %v2346
          %v2355 = vmul.f32 %v2347, %v2347
          %v2356 = vmul.f32 %v2348, %v2348
          %v2357 = vmul.f32 %v2349, %v2349
          %v2358 = vmul.f32 %v2350, %v2350
          %v2359 = vmul.f32 %v2351, 1.6820775
          %v2360 = vmul.f32 %v2352, 1.6820775
          %v2361 = vmul.f32 %v2353, 1.6820775
          %v2362 = vmul.f32 %v2354, 1.6820775
          %v2363 = vmul.f32 %v2355, 1.6820775
          %v2364 = vmul.f32 %v2356, 1.6820775
          %v2365 = vmul.f32 %v2357, 1.6820775
          %v2366 = vmul.f32 %v2358, 1.6820775
          %v2367 = vadd.f32 %v2246, %v2359
          %v2368 = vadd.f32 %v2247, %v2360
          %v2369 = vadd.f32 %v2248, %v2361
          %v2370 = vadd.f32 %v2249, %v2362
          %v2371 = vadd.f32 %v2250, %v2363
          %v2372 = vadd.f32 %v2251, %v2364
          %v2373 = vadd.f32 %v2252, %v2365
          %v2374 = vadd.f32 %v2253, %v2366
          %v2375 = vmul.f32 %v2045, -0.8080128
          %v2376 = vmul.f32 %v2046, -0.8080128
          %v2377 = vmul.f32 %v2047, -0.8080128
          %v2378 = vmul.f32 %v2048, -0.8080128
          %v2379 = vmul.f32 %v2049, -0.8080128
          %v2380 = vmul.f32 %v2050, -0.8080128
          %v2381 = vmul.f32 %v2051, -0.8080128
          %v2382 = vmul.f32 %v2052, -0.8080128
          %v2391 = vrot.slane %v2375, 3
          %v2392 = vrot.slane %v2376, 3
          %v2393 = vrot.slane %v2377, 3
          %v2394 = vrot.slane %v2378, 3
          %v2395 = vrot.slane %v2379, 3
          %v2396 = vrot.slane %v2380, 3
          %v2397 = vrot.slane %v2381, 3
          %v2398 = vrot.slane %v2382, 3
          %v2407 = vadd.f32 %v2286, %v2391
          %v2408 = vadd.f32 %v2287, %v2392
          %v2409 = vadd.f32 %v2288, %v2393
          %v2410 = vadd.f32 %v2289, %v2394
          %v2411 = vadd.f32 %v2290, %v2395
          %v2412 = vadd.f32 %v2291, %v2396
          %v2413 = vadd.f32 %v2292, %v2397
          %v2414 = vadd.f32 %v2293, %v2398
          %s2415 = scalar_lea.vmem [#allocation2], 192
          %v2416 = vld [vmem:[%s2415] sm:$0xff]
          %v2417 = vld [vmem:[%s2415 + $0x8] sm:$0xff]
          %v2418 = vld [vmem:[%s2415 + $0x10] sm:$0xff]
          %v2419 = vld [vmem:[%s2415 + $0x18] sm:$0xff]
          %v2420 = vld [vmem:[%s2415 + $0x20] sm:$0xff]
          %v2421 = vld [vmem:[%s2415 + $0x28] sm:$0xff]
          %v2422 = vld [vmem:[%s2415 + $0x30] sm:$0xff]
          %v2423 = vld [vmem:[%s2415 + $0x38] sm:$0xff]
          %v2424 = vlaneseq
          %v2425 = vshrl.u32 %v2424, 7
          %v2426 = vsub.s32 3, %v2425
          %v2427 = vrot.slane %v381, %v2426
          %v2428 = vlaneseq
          %v2429 = vshrl.u32 %v2428, 7
          %v2430 = vsub.s32 3, %v2429
          %v2431 = vrot.slane %v382, %v2430
          %v2432 = vlaneseq
          %v2433 = vshrl.u32 %v2432, 7
          %v2434 = vsub.s32 3, %v2433
          %v2435 = vrot.slane %v383, %v2434
          %v2436 = vlaneseq
          %v2437 = vshrl.u32 %v2436, 7
          %v2438 = vsub.s32 3, %v2437
          %v2439 = vrot.slane %v384, %v2438
          %v2440 = vlaneseq
          %v2441 = vshrl.u32 %v2440, 7
          %v2442 = vsub.s32 3, %v2441
          %v2443 = vrot.slane %v385, %v2442
          %v2444 = vlaneseq
          %v2445 = vshrl.u32 %v2444, 7
          %v2446 = vsub.s32 3, %v2445
          %v2447 = vrot.slane %v386, %v2446
          %v2448 = vlaneseq
          %v2449 = vshrl.u32 %v2448, 7
          %v2450 = vsub.s32 3, %v2449
          %v2451 = vrot.slane %v387, %v2450
          %v2452 = vlaneseq
          %v2453 = vshrl.u32 %v2452, 7
          %v2454 = vsub.s32 3, %v2453
          %v2455 = vrot.slane %v388, %v2454
          %v2456 = vadd.f32 %v2416, %v2427
          %v2457 = vadd.f32 %v2417, %v2431
          %v2458 = vadd.f32 %v2418, %v2435
          %v2459 = vadd.f32 %v2419, %v2439
          %v2460 = vadd.f32 %v2420, %v2443
          %v2461 = vadd.f32 %v2421, %v2447
          %v2462 = vadd.f32 %v2422, %v2451
          %v2463 = vadd.f32 %v2423, %v2455
          %v2464 = vmul.f32 %v2456, 0.33333334
          %v2465 = vmul.f32 %v2457, 0.33333334
          %v2466 = vmul.f32 %v2458, 0.33333334
          %v2467 = vmul.f32 %v2459, 0.33333334
          %v2468 = vmul.f32 %v2460, 0.33333334
          %v2469 = vmul.f32 %v2461, 0.33333334
          %v2470 = vmul.f32 %v2462, 0.33333334
          %v2471 = vmul.f32 %v2463, 0.33333334
          %v2472 = vmul.f32 %v2464, %v2464
          %v2473 = vmul.f32 %v2465, %v2465
          %v2474 = vmul.f32 %v2466, %v2466
          %v2475 = vmul.f32 %v2467, %v2467
          %v2476 = vmul.f32 %v2468, %v2468
          %v2477 = vmul.f32 %v2469, %v2469
          %v2478 = vmul.f32 %v2470, %v2470
          %v2479 = vmul.f32 %v2471, %v2471
          %v2480 = vmul.f32 %v2472, -0.8080128
          %v2481 = vmul.f32 %v2473, -0.8080128
          %v2482 = vmul.f32 %v2474, -0.8080128
          %v2483 = vmul.f32 %v2475, -0.8080128
          %v2484 = vmul.f32 %v2476, -0.8080128
          %v2485 = vmul.f32 %v2477, -0.8080128
          %v2486 = vmul.f32 %v2478, -0.8080128
          %v2487 = vmul.f32 %v2479, -0.8080128
          %v2488 = vadd.f32 %v2367, %v2480
          %v2489 = vadd.f32 %v2368, %v2481
          %v2490 = vadd.f32 %v2369, %v2482
          %v2491 = vadd.f32 %v2370, %v2483
          %v2492 = vadd.f32 %v2371, %v2484
          %v2493 = vadd.f32 %v2372, %v2485
          %v2494 = vadd.f32 %v2373, %v2486
          %v2495 = vadd.f32 %v2374, %v2487
          %v2496 = vmul.f32 %v2045, -2.3662179
          %v2497 = vmul.f32 %v2046, -2.3662179
          %v2498 = vmul.f32 %v2047, -2.3662179
          %v2499 = vmul.f32 %v2048, -2.3662179
          %v2500 = vmul.f32 %v2049, -2.3662179
          %v2501 = vmul.f32 %v2050, -2.3662179
          %v2502 = vmul.f32 %v2051, -2.3662179
          %v2503 = vmul.f32 %v2052, -2.3662179
          %v2512 = vrot.slane %v2496, 4
          %v2513 = vrot.slane %v2497, 4
          %v2514 = vrot.slane %v2498, 4
          %v2515 = vrot.slane %v2499, 4
          %v2516 = vrot.slane %v2500, 4
          %v2517 = vrot.slane %v2501, 4
          %v2518 = vrot.slane %v2502, 4
          %v2519 = vrot.slane %v2503, 4
          %v2528 = vadd.f32 %v2407, %v2512
          %v2529 = vadd.f32 %v2408, %v2513
          %v2530 = vadd.f32 %v2409, %v2514
          %v2531 = vadd.f32 %v2410, %v2515
          %v2532 = vadd.f32 %v2411, %v2516
          %v2533 = vadd.f32 %v2412, %v2517
          %v2534 = vadd.f32 %v2413, %v2518
          %v2535 = vadd.f32 %v2414, %v2519
          %s2536 = scalar_lea.vmem [#allocation2], 256
          %v2537 = vld [vmem:[%s2536] sm:$0xff]
          %v2538 = vld [vmem:[%s2536 + $0x8] sm:$0xff]
          %v2539 = vld [vmem:[%s2536 + $0x10] sm:$0xff]
          %v2540 = vld [vmem:[%s2536 + $0x18] sm:$0xff]
          %v2541 = vld [vmem:[%s2536 + $0x20] sm:$0xff]
          %v2542 = vld [vmem:[%s2536 + $0x28] sm:$0xff]
          %v2543 = vld [vmem:[%s2536 + $0x30] sm:$0xff]
          %v2544 = vld [vmem:[%s2536 + $0x38] sm:$0xff]
          %v2545 = vlaneseq
          %v2546 = vshrl.u32 %v2545, 7
          %v2547 = vsub.s32 4, %v2546
          %v2548 = vrot.slane %v381, %v2547
          %v2549 = vlaneseq
          %v2550 = vshrl.u32 %v2549, 7
          %v2551 = vsub.s32 4, %v2550
          %v2552 = vrot.slane %v382, %v2551
          %v2553 = vlaneseq
          %v2554 = vshrl.u32 %v2553, 7
          %v2555 = vsub.s32 4, %v2554
          %v2556 = vrot.slane %v383, %v2555
          %v2557 = vlaneseq
          %v2558 = vshrl.u32 %v2557, 7
          %v2559 = vsub.s32 4, %v2558
          %v2560 = vrot.slane %v384, %v2559
          %v2561 = vlaneseq
          %v2562 = vshrl.u32 %v2561, 7
          %v2563 = vsub.s32 4, %v2562
          %v2564 = vrot.slane %v385, %v2563
          %v2565 = vlaneseq
          %v2566 = vshrl.u32 %v2565, 7
          %v2567 = vsub.s32 4, %v2566
          %v2568 = vrot.slane %v386, %v2567
          %v2569 = vlaneseq
          %v2570 = vshrl.u32 %v2569, 7
          %v2571 = vsub.s32 4, %v2570
          %v2572 = vrot.slane %v387, %v2571
          %v2573 = vlaneseq
          %v2574 = vshrl.u32 %v2573, 7
          %v2575 = vsub.s32 4, %v2574
          %v2576 = vrot.slane %v388, %v2575
          %v2577 = vadd.f32 %v2537, %v2548
          %v2578 = vadd.f32 %v2538, %v2552
          %v2579 = vadd.f32 %v2539, %v2556
          %v2580 = vadd.f32 %v2540, %v2560
          %v2581 = vadd.f32 %v2541, %v2564
          %v2582 = vadd.f32 %v2542, %v2568
          %v2583 = vadd.f32 %v2543, %v2572
          %v2584 = vadd.f32 %v2544, %v2576
          %v2585 = vmul.f32 %v2577, 0.33333334
          %v2586 = vmul.f32 %v2578, 0.33333334
          %v2587 = vmul.f32 %v2579, 0.33333334
          %v2588 = vmul.f32 %v2580, 0.33333334
          %v2589 = vmul.f32 %v2581, 0.33333334
          %v2590 = vmul.f32 %v2582, 0.33333334
          %v2591 = vmul.f32 %v2583, 0.33333334
          %v2592 = vmul.f32 %v2584, 0.33333334
          %v2593 = vmul.f32 %v2585, %v2585
          %v2594 = vmul.f32 %v2586, %v2586
          %v2595 = vmul.f32 %v2587, %v2587
          %v2596 = vmul.f32 %v2588, %v2588
          %v2597 = vmul.f32 %v2589, %v2589
          %v2598 = vmul.f32 %v2590, %v2590
          %v2599 = vmul.f32 %v2591, %v2591
          %v2600 = vmul.f32 %v2592, %v2592
          %v2601 = vmul.f32 %v2593, -2.3662179
          %v2602 = vmul.f32 %v2594, -2.3662179
          %v2603 = vmul.f32 %v2595, -2.3662179
          %v2604 = vmul.f32 %v2596, -2.3662179
          %v2605 = vmul.f32 %v2597, -2.3662179
          %v2606 = vmul.f32 %v2598, -2.3662179
          %v2607 = vmul.f32 %v2599, -2.3662179
          %v2608 = vmul.f32 %v2600, -2.3662179
          %v2609 = vadd.f32 %v2488, %v2601
          %v2610 = vadd.f32 %v2489, %v2602
          %v2611 = vadd.f32 %v2490, %v2603
          %v2612 = vadd.f32 %v2491, %v2604
          %v2613 = vadd.f32 %v2492, %v2605
          %v2614 = vadd.f32 %v2493, %v2606
          %v2615 = vadd.f32 %v2494, %v2607
          %v2616 = vadd.f32 %v2495, %v2608
          %v2617 = vmul.f32 %v2045, 0.8959463
          %v2618 = vmul.f32 %v2046, 0.8959463
          %v2619 = vmul.f32 %v2047, 0.8959463
          %v2620 = vmul.f32 %v2048, 0.8959463
          %v2621 = vmul.f32 %v2049, 0.8959463
          %v2622 = vmul.f32 %v2050, 0.8959463
          %v2623 = vmul.f32 %v2051, 0.8959463
          %v2624 = vmul.f32 %v2052, 0.8959463
          %v2633 = vrot.slane %v2617, 5
          %v2634 = vrot.slane %v2618, 5
          %v2635 = vrot.slane %v2619, 5
          %v2636 = vrot.slane %v2620, 5
          %v2637 = vrot.slane %v2621, 5
          %v2638 = vrot.slane %v2622, 5
          %v2639 = vrot.slane %v2623, 5
          %v2640 = vrot.slane %v2624, 5
          %v2649 = vadd.f32 %v2528, %v2633
          %v2650 = vadd.f32 %v2529, %v2634
          %v2651 = vadd.f32 %v2530, %v2635
          %v2652 = vadd.f32 %v2531, %v2636
          %v2653 = vadd.f32 %v2532, %v2637
          %v2654 = vadd.f32 %v2533, %v2638
          %v2655 = vadd.f32 %v2534, %v2639
          %v2656 = vadd.f32 %v2535, %v2640
          %s2657 = scalar_lea.vmem [#allocation2], 320
          %v2658 = vld [vmem:[%s2657] sm:$0xff]
          %v2659 = vld [vmem:[%s2657 + $0x8] sm:$0xff]
          %v2660 = vld [vmem:[%s2657 + $0x10] sm:$0xff]
          %v2661 = vld [vmem:[%s2657 + $0x18] sm:$0xff]
          %v2662 = vld [vmem:[%s2657 + $0x20] sm:$0xff]
          %v2663 = vld [vmem:[%s2657 + $0x28] sm:$0xff]
          %v2664 = vld [vmem:[%s2657 + $0x30] sm:$0xff]
          %v2665 = vld [vmem:[%s2657 + $0x38] sm:$0xff]
          %v2666 = vlaneseq
          %v2667 = vshrl.u32 %v2666, 7
          %v2668 = vsub.s32 5, %v2667
          %v2669 = vrot.slane %v381, %v2668
          %v2670 = vlaneseq
          %v2671 = vshrl.u32 %v2670, 7
          %v2672 = vsub.s32 5, %v2671
          %v2673 = vrot.slane %v382, %v2672
          %v2674 = vlaneseq
          %v2675 = vshrl.u32 %v2674, 7
          %v2676 = vsub.s32 5, %v2675
          %v2677 = vrot.slane %v383, %v2676
          %v2678 = vlaneseq
          %v2679 = vshrl.u32 %v2678, 7
          %v2680 = vsub.s32 5, %v2679
          %v2681 = vrot.slane %v384, %v2680
          %v2682 = vlaneseq
          %v2683 = vshrl.u32 %v2682, 7
          %v2684 = vsub.s32 5, %v2683
          %v2685 = vrot.slane %v385, %v2684
          %v2686 = vlaneseq
          %v2687 = vshrl.u32 %v2686, 7
          %v2688 = vsub.s32 5, %v2687
          %v2689 = vrot.slane %v386, %v2688
          %v2690 = vlaneseq
          %v2691 = vshrl.u32 %v2690, 7
          %v2692 = vsub.s32 5, %v2691
          %v2693 = vrot.slane %v387, %v2692
          %v2694 = vlaneseq
          %v2695 = vshrl.u32 %v2694, 7
          %v2696 = vsub.s32 5, %v2695
          %v2697 = vrot.slane %v388, %v2696
          %v2698 = vadd.f32 %v2658, %v2669
          %v2699 = vadd.f32 %v2659, %v2673
          %v2700 = vadd.f32 %v2660, %v2677
          %v2701 = vadd.f32 %v2661, %v2681
          %v2702 = vadd.f32 %v2662, %v2685
          %v2703 = vadd.f32 %v2663, %v2689
          %v2704 = vadd.f32 %v2664, %v2693
          %v2705 = vadd.f32 %v2665, %v2697
          %v2706 = vmul.f32 %v2698, 0.33333334
          %v2707 = vmul.f32 %v2699, 0.33333334
          %v2708 = vmul.f32 %v2700, 0.33333334
          %v2709 = vmul.f32 %v2701, 0.33333334
          %v2710 = vmul.f32 %v2702, 0.33333334
          %v2711 = vmul.f32 %v2703, 0.33333334
          %v2712 = vmul.f32 %v2704, 0.33333334
          %v2713 = vmul.f32 %v2705, 0.33333334
          %v2714 = vmul.f32 %v2706, %v2706
          %v2715 = vmul.f32 %v2707, %v2707
          %v2716 = vmul.f32 %v2708, %v2708
          %v2717 = vmul.f32 %v2709, %v2709
          %v2718 = vmul.f32 %v2710, %v2710
          %v2719 = vmul.f32 %v2711, %v2711
          %v2720 = vmul.f32 %v2712, %v2712
          %v2721 = vmul.f32 %v2713, %v2713
          %v2722 = vmul.f32 %v2714, 0.8959463
          %v2723 = vmul.f32 %v2715, 0.8959463
          %v2724 = vmul.f32 %v2716, 0.8959463
          %v2725 = vmul.f32 %v2717, 0.8959463
          %v2726 = vmul.f32 %v2718, 0.8959463
          %v2727 = vmul.f32 %v2719, 0.8959463
          %v2728 = vmul.f32 %v2720, 0.8959463
          %v2729 = vmul.f32 %v2721, 0.8959463
          %v2730 = vadd.f32 %v2609, %v2722
          %v2731 = vadd.f32 %v2610, %v2723
          %v2732 = vadd.f32 %v2611, %v2724
          %v2733 = vadd.f32 %v2612, %v2725
          %v2734 = vadd.f32 %v2613, %v2726
          %v2735 = vadd.f32 %v2614, %v2727
          %v2736 = vadd.f32 %v2615, %v2728
          %v2737 = vadd.f32 %v2616, %v2729
          %v2738 = vmul.f32 %v2045, 1.4628075
          %v2739 = vmul.f32 %v2046, 1.4628075
          %v2740 = vmul.f32 %v2047, 1.4628075
          %v2741 = vmul.f32 %v2048, 1.4628075
          %v2742 = vmul.f32 %v2049, 1.4628075
          %v2743 = vmul.f32 %v2050, 1.4628075
          %v2744 = vmul.f32 %v2051, 1.4628075
          %v2745 = vmul.f32 %v2052, 1.4628075
          %v2754 = vrot.slane %v2738, 6
          %v2755 = vrot.slane %v2739, 6
          %v2756 = vrot.slane %v2740, 6
          %v2757 = vrot.slane %v2741, 6
          %v2758 = vrot.slane %v2742, 6
          %v2759 = vrot.slane %v2743, 6
          %v2760 = vrot.slane %v2744, 6
          %v2761 = vrot.slane %v2745, 6
          %v2770 = vadd.f32 %v2649, %v2754
          %v2771 = vadd.f32 %v2650, %v2755
          %v2772 = vadd.f32 %v2651, %v2756
          %v2773 = vadd.f32 %v2652, %v2757
          %v2774 = vadd.f32 %v2653, %v2758
          %v2775 = vadd.f32 %v2654, %v2759
          %v2776 = vadd.f32 %v2655, %v2760
          %v2777 = vadd.f32 %v2656, %v2761
          %s2778 = scalar_lea.vmem [#allocation2], 384
          %v2779 = vld [vmem:[%s2778] sm:$0xff]
          %v2780 = vld [vmem:[%s2778 + $0x8] sm:$0xff]
          %v2781 = vld [vmem:[%s2778 + $0x10] sm:$0xff]
          %v2782 = vld [vmem:[%s2778 + $0x18] sm:$0xff]
          %v2783 = vld [vmem:[%s2778 + $0x20] sm:$0xff]
          %v2784 = vld [vmem:[%s2778 + $0x28] sm:$0xff]
          %v2785 = vld [vmem:[%s2778 + $0x30] sm:$0xff]
          %v2786 = vld [vmem:[%s2778 + $0x38] sm:$0xff]
          %v2787 = vlaneseq
          %v2788 = vshrl.u32 %v2787, 7
          %v2789 = vsub.s32 6, %v2788
          %v2790 = vrot.slane %v381, %v2789
          %v2791 = vlaneseq
          %v2792 = vshrl.u32 %v2791, 7
          %v2793 = vsub.s32 6, %v2792
          %v2794 = vrot.slane %v382, %v2793
          %v2795 = vlaneseq
          %v2796 = vshrl.u32 %v2795, 7
          %v2797 = vsub.s32 6, %v2796
          %v2798 = vrot.slane %v383, %v2797
          %v2799 = vlaneseq
          %v2800 = vshrl.u32 %v2799, 7
          %v2801 = vsub.s32 6, %v2800
          %v2802 = vrot.slane %v384, %v2801
          %v2803 = vlaneseq
          %v2804 = vshrl.u32 %v2803, 7
          %v2805 = vsub.s32 6, %v2804
          %v2806 = vrot.slane %v385, %v2805
          %v2807 = vlaneseq
          %v2808 = vshrl.u32 %v2807, 7
          %v2809 = vsub.s32 6, %v2808
          %v2810 = vrot.slane %v386, %v2809
          %v2811 = vlaneseq
          %v2812 = vshrl.u32 %v2811, 7
          %v2813 = vsub.s32 6, %v2812
          %v2814 = vrot.slane %v387, %v2813
          %v2815 = vlaneseq
          %v2816 = vshrl.u32 %v2815, 7
          %v2817 = vsub.s32 6, %v2816
          %v2818 = vrot.slane %v388, %v2817
          %v2819 = vadd.f32 %v2779, %v2790
          %v2820 = vadd.f32 %v2780, %v2794
          %v2821 = vadd.f32 %v2781, %v2798
          %v2822 = vadd.f32 %v2782, %v2802
          %v2823 = vadd.f32 %v2783, %v2806
          %v2824 = vadd.f32 %v2784, %v2810
          %v2825 = vadd.f32 %v2785, %v2814
          %v2826 = vadd.f32 %v2786, %v2818
          %v2827 = vmul.f32 %v2819, 0.33333334
          %v2828 = vmul.f32 %v2820, 0.33333334
          %v2829 = vmul.f32 %v2821, 0.33333334
          %v2830 = vmul.f32 %v2822, 0.33333334
          %v2831 = vmul.f32 %v2823, 0.33333334
          %v2832 = vmul.f32 %v2824, 0.33333334
          %v2833 = vmul.f32 %v2825, 0.33333334
          %v2834 = vmul.f32 %v2826, 0.33333334
          %v2835 = vmul.f32 %v2827, %v2827
          %v2836 = vmul.f32 %v2828, %v2828
          %v2837 = vmul.f32 %v2829, %v2829
          %v2838 = vmul.f32 %v2830, %v2830
          %v2839 = vmul.f32 %v2831, %v2831
          %v2840 = vmul.f32 %v2832, %v2832
          %v2841 = vmul.f32 %v2833, %v2833
          %v2842 = vmul.f32 %v2834, %v2834
          %v2843 = vmul.f32 %v2835, 1.4628075
          %v2844 = vmul.f32 %v2836, 1.4628075
          %v2845 = vmul.f32 %v2837, 1.4628075
          %v2846 = vmul.f32 %v2838, 1.4628075
          %v2847 = vmul.f32 %v2839, 1.4628075
          %v2848 = vmul.f32 %v2840, 1.4628075
          %v2849 = vmul.f32 %v2841, 1.4628075
          %v2850 = vmul.f32 %v2842, 1.4628075
          %v2851 = vadd.f32 %v2730, %v2843
          %v2852 = vadd.f32 %v2731, %v2844
          %v2853 = vadd.f32 %v2732, %v2845
          %v2854 = vadd.f32 %v2733, %v2846
          %v2855 = vadd.f32 %v2734, %v2847
          %v2856 = vadd.f32 %v2735, %v2848
          %v2857 = vadd.f32 %v2736, %v2849
          %v2858 = vadd.f32 %v2737, %v2850
          %v2859 = vmul.f32 %v2045, -0.5955287
          %v2860 = vmul.f32 %v2046, -0.5955287
          %v2861 = vmul.f32 %v2047, -0.5955287
          %v2862 = vmul.f32 %v2048, -0.5955287
          %v2863 = vmul.f32 %v2049, -0.5955287
          %v2864 = vmul.f32 %v2050, -0.5955287
          %v2865 = vmul.f32 %v2051, -0.5955287
          %v2866 = vmul.f32 %v2052, -0.5955287
          %v2875 = vrot.slane %v2859, 7
          %v2876 = vrot.slane %v2860, 7
          %v2877 = vrot.slane %v2861, 7
          %v2878 = vrot.slane %v2862, 7
          %v2879 = vrot.slane %v2863, 7
          %v2880 = vrot.slane %v2864, 7
          %v2881 = vrot.slane %v2865, 7
          %v2882 = vrot.slane %v2866, 7
          %v2891 = vadd.f32 %v2770, %v2875
          %v2892 = vadd.f32 %v2771, %v2876
          %v2893 = vadd.f32 %v2772, %v2877
          %v2894 = vadd.f32 %v2773, %v2878
          %v2895 = vadd.f32 %v2774, %v2879
          %v2896 = vadd.f32 %v2775, %v2880
          %v2897 = vadd.f32 %v2776, %v2881
          %v2898 = vadd.f32 %v2777, %v2882
          %s2899 = scalar_lea.vmem [#allocation2], 448
          %v2900 = vld [vmem:[%s2899] sm:$0xff]
          %v2901 = vld [vmem:[%s2899 + $0x8] sm:$0xff]
          %v2902 = vld [vmem:[%s2899 + $0x10] sm:$0xff]
          %v2903 = vld [vmem:[%s2899 + $0x18] sm:$0xff]
          %v2904 = vld [vmem:[%s2899 + $0x20] sm:$0xff]
          %v2905 = vld [vmem:[%s2899 + $0x28] sm:$0xff]
          %v2906 = vld [vmem:[%s2899 + $0x30] sm:$0xff]
          %v2907 = vld [vmem:[%s2899 + $0x38] sm:$0xff]
          %v2908 = vlaneseq
          %v2909 = vshrl.u32 %v2908, 7
          %v2910 = vsub.s32 7, %v2909
          %v2911 = vrot.slane %v381, %v2910
          %v2912 = vlaneseq
          %v2913 = vshrl.u32 %v2912, 7
          %v2914 = vsub.s32 7, %v2913
          %v2915 = vrot.slane %v382, %v2914
          %v2916 = vlaneseq
          %v2917 = vshrl.u32 %v2916, 7
          %v2918 = vsub.s32 7, %v2917
          %v2919 = vrot.slane %v383, %v2918
          %v2920 = vlaneseq
          %v2921 = vshrl.u32 %v2920, 7
          %v2922 = vsub.s32 7, %v2921
          %v2923 = vrot.slane %v384, %v2922
          %v2924 = vlaneseq
          %v2925 = vshrl.u32 %v2924, 7
          %v2926 = vsub.s32 7, %v2925
          %v2927 = vrot.slane %v385, %v2926
          %v2928 = vlaneseq
          %v2929 = vshrl.u32 %v2928, 7
          %v2930 = vsub.s32 7, %v2929
          %v2931 = vrot.slane %v386, %v2930
          %v2932 = vlaneseq
          %v2933 = vshrl.u32 %v2932, 7
          %v2934 = vsub.s32 7, %v2933
          %v2935 = vrot.slane %v387, %v2934
          %v2936 = vlaneseq
          %v2937 = vshrl.u32 %v2936, 7
          %v2938 = vsub.s32 7, %v2937
          %v2939 = vrot.slane %v388, %v2938
          %v2940 = vadd.f32 %v2900, %v2911
          %v2941 = vadd.f32 %v2901, %v2915
          %v2942 = vadd.f32 %v2902, %v2919
          %v2943 = vadd.f32 %v2903, %v2923
          %v2944 = vadd.f32 %v2904, %v2927
          %v2945 = vadd.f32 %v2905, %v2931
          %v2946 = vadd.f32 %v2906, %v2935
          %v2947 = vadd.f32 %v2907, %v2939
          %v2948 = vmul.f32 %v2940, 0.33333334
          %v2949 = vmul.f32 %v2941, 0.33333334
          %v2950 = vmul.f32 %v2942, 0.33333334
          %v2951 = vmul.f32 %v2943, 0.33333334
          %v2952 = vmul.f32 %v2944, 0.33333334
          %v2953 = vmul.f32 %v2945, 0.33333334
          %v2954 = vmul.f32 %v2946, 0.33333334
          %v2955 = vmul.f32 %v2947, 0.33333334
          %v2956 = vmul.f32 %v2948, %v2948
          %v2957 = vmul.f32 %v2949, %v2949
          %v2958 = vmul.f32 %v2950, %v2950
          %v2959 = vmul.f32 %v2951, %v2951
          %v2960 = vmul.f32 %v2952, %v2952
          %v2961 = vmul.f32 %v2953, %v2953
          %v2962 = vmul.f32 %v2954, %v2954
          %v2963 = vmul.f32 %v2955, %v2955
          %v2964 = vmul.f32 %v2956, -0.5955287
          %v2965 = vmul.f32 %v2957, -0.5955287
          %v2966 = vmul.f32 %v2958, -0.5955287
          %v2967 = vmul.f32 %v2959, -0.5955287
          %v2968 = vmul.f32 %v2960, -0.5955287
          %v2969 = vmul.f32 %v2961, -0.5955287
          %v2970 = vmul.f32 %v2962, -0.5955287
          %v2971 = vmul.f32 %v2963, -0.5955287
          %v2972 = vadd.f32 %v2851, %v2964
          %v2973 = vadd.f32 %v2852, %v2965
          %v2974 = vadd.f32 %v2853, %v2966
          %v2975 = vadd.f32 %v2854, %v2967
          %v2976 = vadd.f32 %v2855, %v2968
          %v2977 = vadd.f32 %v2856, %v2969
          %v2978 = vadd.f32 %v2857, %v2970
          %v2979 = vadd.f32 %v2858, %v2971
          %v2980 = vld [vmem:[#allocation3] sm:$0xff]
          %v2981 = vld [vmem:[#allocation3 + $0x8] sm:$0xff]
          %v2982 = vld [vmem:[#allocation3 + $0x10] sm:$0xff]
          %v2983 = vld [vmem:[#allocation3 + $0x18] sm:$0xff]
          %v2984 = vld [vmem:[#allocation3 + $0x20] sm:$0xff]
          %v2985 = vld [vmem:[#allocation3 + $0x28] sm:$0xff]
          %v2986 = vld [vmem:[#allocation3 + $0x30] sm:$0xff]
          %v2987 = vld [vmem:[#allocation3 + $0x38] sm:$0xff]
          %v2988 = vlaneseq
          %v2989 = vshrl.u32 %v2988, 7
          %v2990 = vsub.s32 0, %v2989
          %v2991 = vrot.slane %v2891, %v2990
          %v2992 = vlaneseq
          %v2993 = vshrl.u32 %v2992, 7
          %v2994 = vsub.s32 0, %v2993
          %v2995 = vrot.slane %v2892, %v2994
          %v2996 = vlaneseq
          %v2997 = vshrl.u32 %v2996, 7
          %v2998 = vsub.s32 0, %v2997
          %v2999 = vrot.slane %v2893, %v2998
          %v3000 = vlaneseq
          %v3001 = vshrl.u32 %v3000, 7
          %v3002 = vsub.s32 0, %v3001
          %v3003 = vrot.slane %v2894, %v3002
          %v3004 = vlaneseq
          %v3005 = vshrl.u32 %v3004, 7
          %v3006 = vsub.s32 0, %v3005
          %v3007 = vrot.slane %v2895, %v3006
          %v3008 = vlaneseq
          %v3009 = vshrl.u32 %v3008, 7
          %v3010 = vsub.s32 0, %v3009
          %v3011 = vrot.slane %v2896, %v3010
          %v3012 = vlaneseq
          %v3013 = vshrl.u32 %v3012, 7
          %v3014 = vsub.s32 0, %v3013
          %v3015 = vrot.slane %v2897, %v3014
          %v3016 = vlaneseq
          %v3017 = vshrl.u32 %v3016, 7
          %v3018 = vsub.s32 0, %v3017
          %v3019 = vrot.slane %v2898, %v3018
          %v3020 = vadd.f32 %v2980, %v2991
          %v3021 = vadd.f32 %v2981, %v2995
          %v3022 = vadd.f32 %v2982, %v2999
          %v3023 = vadd.f32 %v2983, %v3003
          %v3024 = vadd.f32 %v2984, %v3007
          %v3025 = vadd.f32 %v2985, %v3011
          %v3026 = vadd.f32 %v2986, %v3015
          %v3027 = vadd.f32 %v2987, %v3019
          %v3028 = vmul.f32 %v3020, 0.33333334
          %v3029 = vmul.f32 %v3021, 0.33333334
          %v3030 = vmul.f32 %v3022, 0.33333334
          %v3031 = vmul.f32 %v3023, 0.33333334
          %v3032 = vmul.f32 %v3024, 0.33333334
          %v3033 = vmul.f32 %v3025, 0.33333334
          %v3034 = vmul.f32 %v3026, 0.33333334
          %v3035 = vmul.f32 %v3027, 0.33333334
          %v3036 = vsub.f32 %v3028, %v2972
          %v3037 = vsub.f32 %v3029, %v2973
          %v3038 = vsub.f32 %v3030, %v2974
          %v3039 = vsub.f32 %v3031, %v2975
          %v3040 = vsub.f32 %v3032, %v2976
          %v3041 = vsub.f32 %v3033, %v2977
          %v3042 = vsub.f32 %v3034, %v2978
          %v3043 = vsub.f32 %v3035, %v2979
          %v3044 = vrot.slane %v2037, 4
          %v3045 = vmax.f32 %v2037, %v3044
          %v3046 = vrot.slane %v3045, 2
          %v3047 = vmax.f32 %v3045, %v3046
          %v3048 = vrot.slane %v3047, 1
          %v3049 = vmax.f32 %v3047, %v3048
          %v3050 = vrot.slane %v2038, 4
          %v3051 = vmax.f32 %v2038, %v3050
          %v3052 = vrot.slane %v3051, 2
          %v3053 = vmax.f32 %v3051, %v3052
          %v3054 = vrot.slane %v3053, 1
          %v3055 = vmax.f32 %v3053, %v3054
          %v3056 = vrot.slane %v2039, 4
          %v3057 = vmax.f32 %v2039, %v3056
          %v3058 = vrot.slane %v3057, 2
          %v3059 = vmax.f32 %v3057, %v3058
          %v3060 = vrot.slane %v3059, 1
          %v3061 = vmax.f32 %v3059, %v3060
          %v3062 = vrot.slane %v2040, 4
          %v3063 = vmax.f32 %v2040, %v3062
          %v3064 = vrot.slane %v3063, 2
          %v3065 = vmax.f32 %v3063, %v3064
          %v3066 = vrot.slane %v3065, 1
          %v3067 = vmax.f32 %v3065, %v3066
          %v3068 = vrot.slane %v2041, 4
          %v3069 = vmax.f32 %v2041, %v3068
          %v3070 = vrot.slane %v3069, 2
          %v3071 = vmax.f32 %v3069, %v3070
          %v3072 = vrot.slane %v3071, 1
          %v3073 = vmax.f32 %v3071, %v3072
          %v3074 = vrot.slane %v2042, 4
          %v3075 = vmax.f32 %v2042, %v3074
          %v3076 = vrot.slane %v3075, 2
          %v3077 = vmax.f32 %v3075, %v3076
          %v3078 = vrot.slane %v3077, 1
          %v3079 = vmax.f32 %v3077, %v3078
          %v3080 = vrot.slane %v2043, 4
          %v3081 = vmax.f32 %v2043, %v3080
          %v3082 = vrot.slane %v3081, 2
          %v3083 = vmax.f32 %v3081, %v3082
          %v3084 = vrot.slane %v3083, 1
          %v3085 = vmax.f32 %v3083, %v3084
          %v3086 = vrot.slane %v2044, 4
          %v3087 = vmax.f32 %v2044, %v3086
          %v3088 = vrot.slane %v3087, 2
          %v3089 = vmax.f32 %v3087, %v3088
          %v3090 = vrot.slane %v3089, 1
          %v3091 = vmax.f32 %v3089, %v3090
          %v3092 = vsub.f32 %v2037, %v3049
          %v3093 = vsub.f32 %v2038, %v3055
          %v3094 = vsub.f32 %v2039, %v3061
          %v3095 = vsub.f32 %v2040, %v3067
          %v3096 = vsub.f32 %v2041, %v3073
          %v3097 = vsub.f32 %v2042, %v3079
          %v3098 = vsub.f32 %v2043, %v3085
          %v3099 = vsub.f32 %v2044, %v3091
          %v3100 = vmul.f32 %v3092, 1.442695
          %v3101 = vpow.pop %v3100
          %v3102 = vmul.f32 %v3093, 1.442695
          %v3103 = vpow.pop %v3102
          %v3104 = vmul.f32 %v3094, 1.442695
          %v3105 = vpow.pop %v3104
          %v3106 = vmul.f32 %v3095, 1.442695
          %v3107 = vpow.pop %v3106
          %v3108 = vmul.f32 %v3096, 1.442695
          %v3109 = vpow.pop %v3108
          %v3110 = vmul.f32 %v3097, 1.442695
          %v3111 = vpow.pop %v3110
          %v3112 = vmul.f32 %v3098, 1.442695
          %v3113 = vpow.pop %v3112
          %v3114 = vmul.f32 %v3099, 1.442695
          %v3115 = vpow.pop %v3114
          %v3116 = vrot.slane %v3101, 4
          %v3117 = vadd.f32 %v3101, %v3116
          %v3118 = vrot.slane %v3117, 2
          %v3119 = vadd.f32 %v3117, %v3118
          %v3120 = vrot.slane %v3119, 1
          %v3121 = vadd.f32 %v3119, %v3120
          %v3122 = vrot.slane %v3103, 4
          %v3123 = vadd.f32 %v3103, %v3122
          %v3124 = vrot.slane %v3123, 2
          %v3125 = vadd.f32 %v3123, %v3124
          %v3126 = vrot.slane %v3125, 1
          %v3127 = vadd.f32 %v3125, %v3126
          %v3128 = vrot.slane %v3105, 4
          %v3129 = vadd.f32 %v3105, %v3128
          %v3130 = vrot.slane %v3129, 2
          %v3131 = vadd.f32 %v3129, %v3130
          %v3132 = vrot.slane %v3131, 1
          %v3133 = vadd.f32 %v3131, %v3132
          %v3134 = vrot.slane %v3107, 4
          %v3135 = vadd.f32 %v3107, %v3134
          %v3136 = vrot.slane %v3135, 2
          %v3137 = vadd.f32 %v3135, %v3136
          %v3138 = vrot.slane %v3137, 1
          %v3139 = vadd.f32 %v3137, %v3138
          %v3140 = vrot.slane %v3109, 4
          %v3141 = vadd.f32 %v3109, %v3140
          %v3142 = vrot.slane %v3141, 2
          %v3143 = vadd.f32 %v3141, %v3142
          %v3144 = vrot.slane %v3143, 1
          %v3145 = vadd.f32 %v3143, %v3144
          %v3146 = vrot.slane %v3111, 4
          %v3147 = vadd.f32 %v3111, %v3146
          %v3148 = vrot.slane %v3147, 2
          %v3149 = vadd.f32 %v3147, %v3148
          %v3150 = vrot.slane %v3149, 1
          %v3151 = vadd.f32 %v3149, %v3150
          %v3152 = vrot.slane %v3113, 4
          %v3153 = vadd.f32 %v3113, %v3152
          %v3154 = vrot.slane %v3153, 2
          %v3155 = vadd.f32 %v3153, %v3154
          %v3156 = vrot.slane %v3155, 1
          %v3157 = vadd.f32 %v3155, %v3156
          %v3158 = vrot.slane %v3115, 4
          %v3159 = vadd.f32 %v3115, %v3158
          %v3160 = vrot.slane %v3159, 2
          %v3161 = vadd.f32 %v3159, %v3160
          %v3162 = vrot.slane %v3161, 1
          %v3163 = vadd.f32 %v3161, %v3162
          %v3164 = vrcp.pop %v3121
          %v3165 = vmul.f32 %v3101, %v3164
          %v3166 = vrcp.pop %v3127
          %v3167 = vmul.f32 %v3103, %v3166
          %v3168 = vrcp.pop %v3133
          %v3169 = vmul.f32 %v3105, %v3168
          %v3170 = vrcp.pop %v3139
          %v3171 = vmul.f32 %v3107, %v3170
          %v3172 = vrcp.pop %v3145
          %v3173 = vmul.f32 %v3109, %v3172
          %v3174 = vrcp.pop %v3151
          %v3175 = vmul.f32 %v3111, %v3174
          %v3176 = vrcp.pop %v3157
          %v3177 = vmul.f32 %v3113, %v3176
          %v3178 = vrcp.pop %v3163
          %v3179 = vmul.f32 %v3115, %v3178
          %v3180 = vrot.slane %v3036, 4
          %v3181 = vmax.f32 %v3036, %v3180
          %v3182 = vrot.slane %v3181, 2
          %v3183 = vmax.f32 %v3181, %v3182
          %v3184 = vrot.slane %v3183, 1
          %v3185 = vmax.f32 %v3183, %v3184
          %v3186 = vrot.slane %v3037, 4
          %v3187 = vmax.f32 %v3037, %v3186
          %v3188 = vrot.slane %v3187, 2
          %v3189 = vmax.f32 %v3187, %v3188
          %v3190 = vrot.slane %v3189, 1
          %v3191 = vmax.f32 %v3189, %v3190
          %v3192 = vrot.slane %v3038, 4
          %v3193 = vmax.f32 %v3038, %v3192
          %v3194 = vrot.slane %v3193, 2
          %v3195 = vmax.f32 %v3193, %v3194
          %v3196 = vrot.slane %v3195, 1
          %v3197 = vmax.f32 %v3195, %v3196
          %v3198 = vrot.slane %v3039, 4
          %v3199 = vmax.f32 %v3039, %v3198
          %v3200 = vrot.slane %v3199, 2
          %v3201 = vmax.f32 %v3199, %v3200
          %v3202 = vrot.slane %v3201, 1
          %v3203 = vmax.f32 %v3201, %v3202
          %v3204 = vrot.slane %v3040, 4
          %v3205 = vmax.f32 %v3040, %v3204
          %v3206 = vrot.slane %v3205, 2
          %v3207 = vmax.f32 %v3205, %v3206
          %v3208 = vrot.slane %v3207, 1
          %v3209 = vmax.f32 %v3207, %v3208
          %v3210 = vrot.slane %v3041, 4
          %v3211 = vmax.f32 %v3041, %v3210
          %v3212 = vrot.slane %v3211, 2
          %v3213 = vmax.f32 %v3211, %v3212
          %v3214 = vrot.slane %v3213, 1
          %v3215 = vmax.f32 %v3213, %v3214
          %v3216 = vrot.slane %v3042, 4
          %v3217 = vmax.f32 %v3042, %v3216
          %v3218 = vrot.slane %v3217, 2
          %v3219 = vmax.f32 %v3217, %v3218
          %v3220 = vrot.slane %v3219, 1
          %v3221 = vmax.f32 %v3219, %v3220
          %v3222 = vrot.slane %v3043, 4
          %v3223 = vmax.f32 %v3043, %v3222
          %v3224 = vrot.slane %v3223, 2
          %v3225 = vmax.f32 %v3223, %v3224
          %v3226 = vrot.slane %v3225, 1
          %v3227 = vmax.f32 %v3225, %v3226
          %v3228 = vsub.f32 %v3036, %v3185
          %v3229 = vsub.f32 %v3037, %v3191
          %v3230 = vsub.f32 %v3038, %v3197
          %v3231 = vsub.f32 %v3039, %v3203
          %v3232 = vsub.f32 %v3040, %v3209
          %v3233 = vsub.f32 %v3041, %v3215
          %v3234 = vsub.f32 %v3042, %v3221
          %v3235 = vsub.f32 %v3043, %v3227
          %v3236 = vmul.f32 %v3228, 1.442695
          %v3237 = vpow.pop %v3236
          %v3238 = vmul.f32 %v3229, 1.442695
          %v3239 = vpow.pop %v3238
          %v3240 = vmul.f32 %v3230, 1.442695
          %v3241 = vpow.pop %v3240
          %v3242 = vmul.f32 %v3231, 1.442695
          %v3243 = vpow.pop %v3242
          %v3244 = vmul.f32 %v3232, 1.442695
          %v3245 = vpow.pop %v3244
          %v3246 = vmul.f32 %v3233, 1.442695
          %v3247 = vpow.pop %v3246
          %v3248 = vmul.f32 %v3234, 1.442695
          %v3249 = vpow.pop %v3248
          %v3250 = vmul.f32 %v3235, 1.442695
          %v3251 = vpow.pop %v3250
          %v3252 = vrot.slane %v3237, 4
          %v3253 = vadd.f32 %v3237, %v3252
          %v3254 = vrot.slane %v3253, 2
          %v3255 = vadd.f32 %v3253, %v3254
          %v3256 = vrot.slane %v3255, 1
          %v3257 = vadd.f32 %v3255, %v3256
          %v3258 = vrot.slane %v3239, 4
          %v3259 = vadd.f32 %v3239, %v3258
          %v3260 = vrot.slane %v3259, 2
          %v3261 = vadd.f32 %v3259, %v3260
          %v3262 = vrot.slane %v3261, 1
          %v3263 = vadd.f32 %v3261, %v3262
          %v3264 = vrot.slane %v3241, 4
          %v3265 = vadd.f32 %v3241, %v3264
          %v3266 = vrot.slane %v3265, 2
          %v3267 = vadd.f32 %v3265, %v3266
          %v3268 = vrot.slane %v3267, 1
          %v3269 = vadd.f32 %v3267, %v3268
          %v3270 = vrot.slane %v3243, 4
          %v3271 = vadd.f32 %v3243, %v3270
          %v3272 = vrot.slane %v3271, 2
          %v3273 = vadd.f32 %v3271, %v3272
          %v3274 = vrot.slane %v3273, 1
          %v3275 = vadd.f32 %v3273, %v3274
          %v3276 = vrot.slane %v3245, 4
          %v3277 = vadd.f32 %v3245, %v3276
          %v3278 = vrot.slane %v3277, 2
          %v3279 = vadd.f32 %v3277, %v3278
          %v3280 = vrot.slane %v3279, 1
          %v3281 = vadd.f32 %v3279, %v3280
          %v3282 = vrot.slane %v3247, 4
          %v3283 = vadd.f32 %v3247, %v3282
          %v3284 = vrot.slane %v3283, 2
          %v3285 = vadd.f32 %v3283, %v3284
          %v3286 = vrot.slane %v3285, 1
          %v3287 = vadd.f32 %v3285, %v3286
          %v3288 = vrot.slane %v3249, 4
          %v3289 = vadd.f32 %v3249, %v3288
          %v3290 = vrot.slane %v3289, 2
          %v3291 = vadd.f32 %v3289, %v3290
          %v3292 = vrot.slane %v3291, 1
          %v3293 = vadd.f32 %v3291, %v3292
          %v3294 = vrot.slane %v3251, 4
          %v3295 = vadd.f32 %v3251, %v3294
          %v3296 = vrot.slane %v3295, 2
          %v3297 = vadd.f32 %v3295, %v3296
          %v3298 = vrot.slane %v3297, 1
          %v3299 = vadd.f32 %v3297, %v3298
          %v3300 = vrcp.pop %v3257
          %v3301 = vmul.f32 %v3237, %v3300
          %v3302 = vrcp.pop %v3263
          %v3303 = vmul.f32 %v3239, %v3302
          %v3304 = vrcp.pop %v3269
          %v3305 = vmul.f32 %v3241, %v3304
          %v3306 = vrcp.pop %v3275
          %v3307 = vmul.f32 %v3243, %v3306
          %v3308 = vrcp.pop %v3281
          %v3309 = vmul.f32 %v3245, %v3308
          %v3310 = vrcp.pop %v3287
          %v3311 = vmul.f32 %v3247, %v3310
          %v3312 = vrcp.pop %v3293
          %v3313 = vmul.f32 %v3249, %v3312
          %v3314 = vrcp.pop %v3299
          %v3315 = vmul.f32 %v3251, %v3314
          %v3316 = vld [vmem:[%s377] sm:$0xff]
          %v3317 = vsub.f32 1.0, %v3316
          %v3319 = vlaneseq
          %v3320 = vshrl.u32 %v3319, 7
          %v3321 = vsub.s32 0, %v3320
          %v3322 = vrot.slane %v3317, %v3321
          %v3323 = vlaneseq
          %v3324 = vshrl.u32 %v3323, 7
          %v3325 = vsub.s32 1, %v3324
          %v3326 = vrot.slane %v3317, %v3325
          %v3327 = vlaneseq
          %v3328 = vshrl.u32 %v3327, 7
          %v3329 = vsub.s32 2, %v3328
          %v3330 = vrot.slane %v3317, %v3329
          %v3331 = vlaneseq
          %v3332 = vshrl.u32 %v3331, 7
          %v3333 = vsub.s32 3, %v3332
          %v3334 = vrot.slane %v3317, %v3333
          %v3335 = vlaneseq
          %v3336 = vshrl.u32 %v3335, 7
          %v3337 = vsub.s32 4, %v3336
          %v3338 = vrot.slane %v3317, %v3337
          %v3339 = vlaneseq
          %v3340 = vshrl.u32 %v3339, 7
          %v3341 = vsub.s32 5, %v3340
          %v3342 = vrot.slane %v3317, %v3341
          %v3343 = vlaneseq
          %v3344 = vshrl.u32 %v3343, 7
          %v3345 = vsub.s32 6, %v3344
          %v3346 = vrot.slane %v3317, %v3345
          %v3347 = vlaneseq
          %v3348 = vshrl.u32 %v3347, 7
          %v3349 = vsub.s32 7, %v3348
          %v3350 = vrot.slane %v3317, %v3349
          %v3359 = vmul.f32 %v3322, %v3165
          %v3360 = vmul.f32 %v3326, %v3167
          %v3361 = vmul.f32 %v3330, %v3169
          %v3362 = vmul.f32 %v3334, %v3171
          %v3363 = vmul.f32 %v3338, %v3173
          %v3364 = vmul.f32 %v3342, %v3175
          %v3365 = vmul.f32 %v3346, %v3177
          %v3366 = vmul.f32 %v3350, %v3179
          %v3368 = vlaneseq
          %v3369 = vshrl.u32 %v3368, 7
          %v3370 = vsub.s32 0, %v3369
          %v3371 = vrot.slane %v3316, %v3370
          %v3372 = vlaneseq
          %v3373 = vshrl.u32 %v3372, 7
          %v3374 = vsub.s32 1, %v3373
          %v3375 = vrot.slane %v3316, %v3374
          %v3376 = vlaneseq
          %v3377 = vshrl.u32 %v3376, 7
          %v3378 = vsub.s32 2, %v3377
          %v3379 = vrot.slane %v3316, %v3378
          %v3380 = vlaneseq
          %v3381 = vshrl.u32 %v3380, 7
          %v3382 = vsub.s32 3, %v3381
          %v3383 = vrot.slane %v3316, %v3382
          %v3384 = vlaneseq
          %v3385 = vshrl.u32 %v3384, 7
          %v3386 = vsub.s32 4, %v3385
          %v3387 = vrot.slane %v3316, %v3386
          %v3388 = vlaneseq
          %v3389 = vshrl.u32 %v3388, 7
          %v3390 = vsub.s32 5, %v3389
          %v3391 = vrot.slane %v3316, %v3390
          %v3392 = vlaneseq
          %v3393 = vshrl.u32 %v3392, 7
          %v3394 = vsub.s32 6, %v3393
          %v3395 = vrot.slane %v3316, %v3394
          %v3396 = vlaneseq
          %v3397 = vshrl.u32 %v3396, 7
          %v3398 = vsub.s32 7, %v3397
          %v3399 = vrot.slane %v3316, %v3398
          %v3408 = vmul.f32 %v3371, %v3301
          %v3409 = vmul.f32 %v3375, %v3303
          %v3410 = vmul.f32 %v3379, %v3305
          %v3411 = vmul.f32 %v3383, %v3307
          %v3412 = vmul.f32 %v3387, %v3309
          %v3413 = vmul.f32 %v3391, %v3311
          %v3414 = vmul.f32 %v3395, %v3313
          %v3415 = vmul.f32 %v3399, %v3315
          %v3416 = vadd.f32 %v3359, %v3408
          %v3417 = vadd.f32 %v3360, %v3409
          %v3418 = vadd.f32 %v3361, %v3410
          %v3419 = vadd.f32 %v3362, %v3411
          %v3420 = vadd.f32 %v3363, %v3412
          %v3421 = vadd.f32 %v3364, %v3413
          %v3422 = vadd.f32 %v3365, %v3414
          %v3423 = vadd.f32 %v3366, %v3415
          %v3424 = vld [vmem:[%s369] sm:$0xff]
          %v3425 = vrot.slane %v3416, 4
          %v3426 = vmax.f32 %v3416, %v3425
          %v3427 = vrot.slane %v3426, 2
          %v3428 = vmax.f32 %v3426, %v3427
          %v3429 = vrot.slane %v3428, 1
          %v3430 = vmax.f32 %v3428, %v3429
          %v3431 = vrot.slane %v3417, 4
          %v3432 = vmax.f32 %v3417, %v3431
          %v3433 = vrot.slane %v3432, 2
          %v3434 = vmax.f32 %v3432, %v3433
          %v3435 = vrot.slane %v3434, 1
          %v3436 = vmax.f32 %v3434, %v3435
          %v3437 = vrot.slane %v3418, 4
          %v3438 = vmax.f32 %v3418, %v3437
          %v3439 = vrot.slane %v3438, 2
          %v3440 = vmax.f32 %v3438, %v3439
          %v3441 = vrot.slane %v3440, 1
          %v3442 = vmax.f32 %v3440, %v3441
          %v3443 = vrot.slane %v3419, 4
          %v3444 = vmax.f32 %v3419, %v3443
          %v3445 = vrot.slane %v3444, 2
          %v3446 = vmax.f32 %v3444, %v3445
          %v3447 = vrot.slane %v3446, 1
          %v3448 = vmax.f32 %v3446, %v3447
          %v3449 = vrot.slane %v3420, 4
          %v3450 = vmax.f32 %v3420, %v3449
          %v3451 = vrot.slane %v3450, 2
          %v3452 = vmax.f32 %v3450, %v3451
          %v3453 = vrot.slane %v3452, 1
          %v3454 = vmax.f32 %v3452, %v3453
          %v3455 = vrot.slane %v3421, 4
          %v3456 = vmax.f32 %v3421, %v3455
          %v3457 = vrot.slane %v3456, 2
          %v3458 = vmax.f32 %v3456, %v3457
          %v3459 = vrot.slane %v3458, 1
          %v3460 = vmax.f32 %v3458, %v3459
          %v3461 = vrot.slane %v3422, 4
          %v3462 = vmax.f32 %v3422, %v3461
          %v3463 = vrot.slane %v3462, 2
          %v3464 = vmax.f32 %v3462, %v3463
          %v3465 = vrot.slane %v3464, 1
          %v3466 = vmax.f32 %v3464, %v3465
          %v3467 = vrot.slane %v3423, 4
          %v3468 = vmax.f32 %v3423, %v3467
          %v3469 = vrot.slane %v3468, 2
          %v3470 = vmax.f32 %v3468, %v3469
          %v3471 = vrot.slane %v3470, 1
          %v3472 = vmax.f32 %v3470, %v3471
          %v3473 = vlaneseq
          %v3474 = vshrl.u32 %v3473, 7
          %vm3475 = vcmp.eq.f32.partialorder %v3416, %v3430
          %vm3476 = vcmp.eq.f32.partialorder %v3417, %v3436
          %vm3477 = vcmp.eq.f32.partialorder %v3418, %v3442
          %vm3478 = vcmp.eq.f32.partialorder %v3419, %v3448
          %vm3479 = vcmp.eq.f32.partialorder %v3420, %v3454
          %vm3480 = vcmp.eq.f32.partialorder %v3421, %v3460
          %vm3481 = vcmp.eq.f32.partialorder %v3422, %v3466
          %vm3482 = vcmp.eq.f32.partialorder %v3423, %v3472
          %v3483 = vsel %vm3475, %v3474, 8
          %v3484 = vsel %vm3476, %v3474, 8
          %v3485 = vsel %vm3477, %v3474, 8
          %v3486 = vsel %vm3478, %v3474, 8
          %v3487 = vsel %vm3479, %v3474, 8
          %v3488 = vsel %vm3480, %v3474, 8
          %v3489 = vsel %vm3481, %v3474, 8
          %v3490 = vsel %vm3482, %v3474, 8
          %v3491 = vrot.slane %v3483, 4
          %vm3492 = vcmp.lt.s32.totalorder %v3483, %v3491
          %v3493 = vsel %vm3492, %v3483, %v3491
          %v3494 = vrot.slane %v3493, 2
          %vm3495 = vcmp.lt.s32.totalorder %v3493, %v3494
          %v3496 = vsel %vm3495, %v3493, %v3494
          %v3497 = vrot.slane %v3496, 1
          %vm3498 = vcmp.lt.s32.totalorder %v3496, %v3497
          %v3499 = vsel %vm3498, %v3496, %v3497
          %v3500 = vrot.slane %v3484, 4
          %vm3501 = vcmp.lt.s32.totalorder %v3484, %v3500
          %v3502 = vsel %vm3501, %v3484, %v3500
          %v3503 = vrot.slane %v3502, 2
          %vm3504 = vcmp.lt.s32.totalorder %v3502, %v3503
          %v3505 = vsel %vm3504, %v3502, %v3503
          %v3506 = vrot.slane %v3505, 1
          %vm3507 = vcmp.lt.s32.totalorder %v3505, %v3506
          %v3508 = vsel %vm3507, %v3505, %v3506
          %v3509 = vrot.slane %v3485, 4
          %vm3510 = vcmp.lt.s32.totalorder %v3485, %v3509
          %v3511 = vsel %vm3510, %v3485, %v3509
          %v3512 = vrot.slane %v3511, 2
          %vm3513 = vcmp.lt.s32.totalorder %v3511, %v3512
          %v3514 = vsel %vm3513, %v3511, %v3512
          %v3515 = vrot.slane %v3514, 1
          %vm3516 = vcmp.lt.s32.totalorder %v3514, %v3515
          %v3517 = vsel %vm3516, %v3514, %v3515
          %v3518 = vrot.slane %v3486, 4
          %vm3519 = vcmp.lt.s32.totalorder %v3486, %v3518
          %v3520 = vsel %vm3519, %v3486, %v3518
          %v3521 = vrot.slane %v3520, 2
          %vm3522 = vcmp.lt.s32.totalorder %v3520, %v3521
          %v3523 = vsel %vm3522, %v3520, %v3521
          %v3524 = vrot.slane %v3523, 1
          %vm3525 = vcmp.lt.s32.totalorder %v3523, %v3524
          %v3526 = vsel %vm3525, %v3523, %v3524
          %v3527 = vrot.slane %v3487, 4
          %vm3528 = vcmp.lt.s32.totalorder %v3487, %v3527
          %v3529 = vsel %vm3528, %v3487, %v3527
          %v3530 = vrot.slane %v3529, 2
          %vm3531 = vcmp.lt.s32.totalorder %v3529, %v3530
          %v3532 = vsel %vm3531, %v3529, %v3530
          %v3533 = vrot.slane %v3532, 1
          %vm3534 = vcmp.lt.s32.totalorder %v3532, %v3533
          %v3535 = vsel %vm3534, %v3532, %v3533
          %v3536 = vrot.slane %v3488, 4
          %vm3537 = vcmp.lt.s32.totalorder %v3488, %v3536
          %v3538 = vsel %vm3537, %v3488, %v3536
          %v3539 = vrot.slane %v3538, 2
          %vm3540 = vcmp.lt.s32.totalorder %v3538, %v3539
          %v3541 = vsel %vm3540, %v3538, %v3539
          %v3542 = vrot.slane %v3541, 1
          %vm3543 = vcmp.lt.s32.totalorder %v3541, %v3542
          %v3544 = vsel %vm3543, %v3541, %v3542
          %v3545 = vrot.slane %v3489, 4
          %vm3546 = vcmp.lt.s32.totalorder %v3489, %v3545
          %v3547 = vsel %vm3546, %v3489, %v3545
          %v3548 = vrot.slane %v3547, 2
          %vm3549 = vcmp.lt.s32.totalorder %v3547, %v3548
          %v3550 = vsel %vm3549, %v3547, %v3548
          %v3551 = vrot.slane %v3550, 1
          %vm3552 = vcmp.lt.s32.totalorder %v3550, %v3551
          %v3553 = vsel %vm3552, %v3550, %v3551
          %v3554 = vrot.slane %v3490, 4
          %vm3555 = vcmp.lt.s32.totalorder %v3490, %v3554
          %v3556 = vsel %vm3555, %v3490, %v3554
          %v3557 = vrot.slane %v3556, 2
          %vm3558 = vcmp.lt.s32.totalorder %v3556, %v3557
          %v3559 = vsel %vm3558, %v3556, %v3557
          %v3560 = vrot.slane %v3559, 1
          %vm3561 = vcmp.lt.s32.totalorder %v3559, %v3560
          %v3562 = vsel %vm3561, %v3559, %v3560
          %vm3563 = vcmp.eq.s32.totalorder %v3474, %v3499
          %vm3564 = vcmp.eq.s32.totalorder %v3474, %v3508
          %vm3565 = vcmp.eq.s32.totalorder %v3474, %v3517
          %vm3566 = vcmp.eq.s32.totalorder %v3474, %v3526
          %vm3567 = vcmp.eq.s32.totalorder %v3474, %v3535
          %vm3568 = vcmp.eq.s32.totalorder %v3474, %v3544
          %vm3569 = vcmp.eq.s32.totalorder %v3474, %v3553
          %vm3570 = vcmp.eq.s32.totalorder %v3474, %v3562
          %3572 = vset.pattern.permute.xlu0 0
          %3573 = vperm.xlu0 %3572, %v3424
          %v3574 = vpop.permute.xlu0 %3573
          %v3576 = vsel %vm3563, %v3574, 0.0
          %v3577 = vsel %vm3564, %v3574, 0.0
          %v3578 = vsel %vm3565, %v3574, 0.0
          %v3579 = vsel %vm3566, %v3574, 0.0
          %v3580 = vsel %vm3567, %v3574, 0.0
          %v3581 = vsel %vm3568, %v3574, 0.0
          %v3582 = vsel %vm3569, %v3574, 0.0
          %v3583 = vsel %vm3570, %v3574, 0.0
          %v3584 = vrot.slane %v3576, 4
          %v3585 = vadd.f32 %v3576, %v3584
          %v3586 = vrot.slane %v3585, 2
          %v3587 = vadd.f32 %v3585, %v3586
          %v3588 = vrot.slane %v3587, 1
          %v3589 = vadd.f32 %v3587, %v3588
          %v3590 = vrot.slane %v3577, 4
          %v3591 = vadd.f32 %v3577, %v3590
          %v3592 = vrot.slane %v3591, 2
          %v3593 = vadd.f32 %v3591, %v3592
          %v3594 = vrot.slane %v3593, 1
          %v3595 = vadd.f32 %v3593, %v3594
          %v3596 = vrot.slane %v3578, 4
          %v3597 = vadd.f32 %v3578, %v3596
          %v3598 = vrot.slane %v3597, 2
          %v3599 = vadd.f32 %v3597, %v3598
          %v3600 = vrot.slane %v3599, 1
          %v3601 = vadd.f32 %v3599, %v3600
          %v3602 = vrot.slane %v3579, 4
          %v3603 = vadd.f32 %v3579, %v3602
          %v3604 = vrot.slane %v3603, 2
          %v3605 = vadd.f32 %v3603, %v3604
          %v3606 = vrot.slane %v3605, 1
          %v3607 = vadd.f32 %v3605, %v3606
          %v3608 = vrot.slane %v3580, 4
          %v3609 = vadd.f32 %v3580, %v3608
          %v3610 = vrot.slane %v3609, 2
          %v3611 = vadd.f32 %v3609, %v3610
          %v3612 = vrot.slane %v3611, 1
          %v3613 = vadd.f32 %v3611, %v3612
          %v3614 = vrot.slane %v3581, 4
          %v3615 = vadd.f32 %v3581, %v3614
          %v3616 = vrot.slane %v3615, 2
          %v3617 = vadd.f32 %v3615, %v3616
          %v3618 = vrot.slane %v3617, 1
          %v3619 = vadd.f32 %v3617, %v3618
          %v3620 = vrot.slane %v3582, 4
          %v3621 = vadd.f32 %v3582, %v3620
          %v3622 = vrot.slane %v3621, 2
          %v3623 = vadd.f32 %v3621, %v3622
          %v3624 = vrot.slane %v3623, 1
          %v3625 = vadd.f32 %v3623, %v3624
          %v3626 = vrot.slane %v3583, 4
          %v3627 = vadd.f32 %v3583, %v3626
          %v3628 = vrot.slane %v3627, 2
          %v3629 = vadd.f32 %v3627, %v3628
          %v3630 = vrot.slane %v3629, 1
          %v3631 = vadd.f32 %v3629, %v3630
          %v3632 = vrot.slane %v3301, 4
          %v3633 = vmax.f32 %v3301, %v3632
          %v3634 = vrot.slane %v3633, 2
          %v3635 = vmax.f32 %v3633, %v3634
          %v3636 = vrot.slane %v3635, 1
          %v3637 = vmax.f32 %v3635, %v3636
          %v3638 = vrot.slane %v3303, 4
          %v3639 = vmax.f32 %v3303, %v3638
          %v3640 = vrot.slane %v3639, 2
          %v3641 = vmax.f32 %v3639, %v3640
          %v3642 = vrot.slane %v3641, 1
          %v3643 = vmax.f32 %v3641, %v3642
          %v3644 = vrot.slane %v3305, 4
          %v3645 = vmax.f32 %v3305, %v3644
          %v3646 = vrot.slane %v3645, 2
          %v3647 = vmax.f32 %v3645, %v3646
          %v3648 = vrot.slane %v3647, 1
          %v3649 = vmax.f32 %v3647, %v3648
          %v3650 = vrot.slane %v3307, 4
          %v3651 = vmax.f32 %v3307, %v3650
          %v3652 = vrot.slane %v3651, 2
          %v3653 = vmax.f32 %v3651, %v3652
          %v3654 = vrot.slane %v3653, 1
          %v3655 = vmax.f32 %v3653, %v3654
          %v3656 = vrot.slane %v3309, 4
          %v3657 = vmax.f32 %v3309, %v3656
          %v3658 = vrot.slane %v3657, 2
          %v3659 = vmax.f32 %v3657, %v3658
          %v3660 = vrot.slane %v3659, 1
          %v3661 = vmax.f32 %v3659, %v3660
          %v3662 = vrot.slane %v3311, 4
          %v3663 = vmax.f32 %v3311, %v3662
          %v3664 = vrot.slane %v3663, 2
          %v3665 = vmax.f32 %v3663, %v3664
          %v3666 = vrot.slane %v3665, 1
          %v3667 = vmax.f32 %v3665, %v3666
          %v3668 = vrot.slane %v3313, 4
          %v3669 = vmax.f32 %v3313, %v3668
          %v3670 = vrot.slane %v3669, 2
          %v3671 = vmax.f32 %v3669, %v3670
          %v3672 = vrot.slane %v3671, 1
          %v3673 = vmax.f32 %v3671, %v3672
          %v3674 = vrot.slane %v3315, 4
          %v3675 = vmax.f32 %v3315, %v3674
          %v3676 = vrot.slane %v3675, 2
          %v3677 = vmax.f32 %v3675, %v3676
          %v3678 = vrot.slane %v3677, 1
          %v3679 = vmax.f32 %v3677, %v3678
          %v3680 = vrot.slane %v3165, 4
          %v3681 = vmax.f32 %v3165, %v3680
          %v3682 = vrot.slane %v3681, 2
          %v3683 = vmax.f32 %v3681, %v3682
          %v3684 = vrot.slane %v3683, 1
          %v3685 = vmax.f32 %v3683, %v3684
          %v3686 = vrot.slane %v3167, 4
          %v3687 = vmax.f32 %v3167, %v3686
          %v3688 = vrot.slane %v3687, 2
          %v3689 = vmax.f32 %v3687, %v3688
          %v3690 = vrot.slane %v3689, 1
          %v3691 = vmax.f32 %v3689, %v3690
          %v3692 = vrot.slane %v3169, 4
          %v3693 = vmax.f32 %v3169, %v3692
          %v3694 = vrot.slane %v3693, 2
          %v3695 = vmax.f32 %v3693, %v3694
          %v3696 = vrot.slane %v3695, 1
          %v3697 = vmax.f32 %v3695, %v3696
          %v3698 = vrot.slane %v3171, 4
          %v3699 = vmax.f32 %v3171, %v3698
          %v3700 = vrot.slane %v3699, 2
          %v3701 = vmax.f32 %v3699, %v3700
          %v3702 = vrot.slane %v3701, 1
          %v3703 = vmax.f32 %v3701, %v3702
          %v3704 = vrot.slane %v3173, 4
          %v3705 = vmax.f32 %v3173, %v3704
          %v3706 = vrot.slane %v3705, 2
          %v3707 = vmax.f32 %v3705, %v3706
          %v3708 = vrot.slane %v3707, 1
          %v3709 = vmax.f32 %v3707, %v3708
          %v3710 = vrot.slane %v3175, 4
          %v3711 = vmax.f32 %v3175, %v3710
          %v3712 = vrot.slane %v3711, 2
          %v3713 = vmax.f32 %v3711, %v3712
          %v3714 = vrot.slane %v3713, 1
          %v3715 = vmax.f32 %v3713, %v3714
          %v3716 = vrot.slane %v3177, 4
          %v3717 = vmax.f32 %v3177, %v3716
          %v3718 = vrot.slane %v3717, 2
          %v3719 = vmax.f32 %v3717, %v3718
          %v3720 = vrot.slane %v3719, 1
          %v3721 = vmax.f32 %v3719, %v3720
          %v3722 = vrot.slane %v3179, 4
          %v3723 = vmax.f32 %v3179, %v3722
          %v3724 = vrot.slane %v3723, 2
          %v3725 = vmax.f32 %v3723, %v3724
          %v3726 = vrot.slane %v3725, 1
          %v3727 = vmax.f32 %v3725, %v3726
          %v3728 = vrcp.pop %v3424
          %v3729 = vmul.f32 1.0, %v3728
          %v3731 = vrot.slane %v3729, 7
          %v3733 = vsub.f32 %v3729, %v3731
          %3735 = vset.pattern.permute.xlu0 0
          %3736 = vperm.xlu0 %3735, %v3733
          %v3737 = vpop.permute.xlu0 %3736
          %v3739 = vadd.f32 %v3737, 0.0
          %v3740 = vrcp.pop %v3589
          %v3741 = vmul.f32 1.0, %v3740
          %v3742 = vrcp.pop %v3595
          %v3743 = vmul.f32 1.0, %v3742
          %v3744 = vrcp.pop %v3601
          %v3745 = vmul.f32 1.0, %v3744
          %v3746 = vrcp.pop %v3607
          %v3747 = vmul.f32 1.0, %v3746
          %v3748 = vrcp.pop %v3613
          %v3749 = vmul.f32 1.0, %v3748
          %v3750 = vrcp.pop %v3619
          %v3751 = vmul.f32 1.0, %v3750
          %v3752 = vrcp.pop %v3625
          %v3753 = vmul.f32 1.0, %v3752
          %v3754 = vrcp.pop %v3631
          %v3755 = vmul.f32 1.0, %v3754
          %v3756 = vmul.f32 %v3739, 0.5
          %v3757 = vadd.f32 %v3741, %v3756
          %v3758 = vadd.f32 %v3743, %v3756
          %v3759 = vadd.f32 %v3745, %v3756
          %v3760 = vadd.f32 %v3747, %v3756
          %v3761 = vadd.f32 %v3749, %v3756
          %v3762 = vadd.f32 %v3751, %v3756
          %v3763 = vadd.f32 %v3753, %v3756
          %v3764 = vadd.f32 %v3755, %v3756
          %v3765 = vsub.f32 %v3741, %v3756
          %v3766 = vsub.f32 %v3743, %v3756
          %v3767 = vsub.f32 %v3745, %v3756
          %v3768 = vsub.f32 %v3747, %v3756
          %v3769 = vsub.f32 %v3749, %v3756
          %v3770 = vsub.f32 %v3751, %v3756
          %v3771 = vsub.f32 %v3753, %v3756
          %v3772 = vsub.f32 %v3755, %v3756
          %v3774 = vrot.slane %v3739, 6
          %v3784 = vrot.slane %v3757, 5
          %v3785 = vrot.slane %v3758, 5
          %v3786 = vrot.slane %v3759, 5
          %v3787 = vrot.slane %v3760, 5
          %v3788 = vrot.slane %v3761, 5
          %v3789 = vrot.slane %v3762, 5
          %v3790 = vrot.slane %v3763, 5
          %v3791 = vrot.slane %v3764, 5
          %v3808 = vrot.slane %v3765, 4
          %v3809 = vrot.slane %v3766, 4
          %v3810 = vrot.slane %v3767, 4
          %v3811 = vrot.slane %v3768, 4
          %v3812 = vrot.slane %v3769, 4
          %v3813 = vrot.slane %v3770, 4
          %v3814 = vrot.slane %v3771, 4
          %v3815 = vrot.slane %v3772, 4
          %vm3824 = vcmask 1040384
          %v3825 = vsel %vm3824, %v3589, %v3430
          %v3826 = vsel %vm3824, %v3595, %v3436
          %v3827 = vsel %vm3824, %v3601, %v3442
          %v3828 = vsel %vm3824, %v3607, %v3448
          %v3829 = vsel %vm3824, %v3613, %v3454
          %v3830 = vsel %vm3824, %v3619, %v3460
          %v3831 = vsel %vm3824, %v3625, %v3466
          %v3832 = vsel %vm3824, %v3631, %v3472
          %vm3833 = vcmask 1041408
          %v3834 = vsel %vm3833, %v3825, %v3637
          %v3835 = vsel %vm3833, %v3826, %v3643
          %v3836 = vsel %vm3833, %v3827, %v3649
          %v3837 = vsel %vm3833, %v3828, %v3655
          %v3838 = vsel %vm3833, %v3829, %v3661
          %v3839 = vsel %vm3833, %v3830, %v3667
          %v3840 = vsel %vm3833, %v3831, %v3673
          %v3841 = vsel %vm3833, %v3832, %v3679
          %vm3842 = vcmask 1042432
          %v3843 = vsel %vm3842, %v3834, %v3685
          %v3844 = vsel %vm3842, %v3835, %v3691
          %v3845 = vsel %vm3842, %v3836, %v3697
          %v3846 = vsel %vm3842, %v3837, %v3703
          %v3847 = vsel %vm3842, %v3838, %v3709
          %v3848 = vsel %vm3842, %v3839, %v3715
          %v3849 = vsel %vm3842, %v3840, %v3721
          %v3850 = vsel %vm3842, %v3841, %v3727
          %vm3851 = vcmask 1043456
          %v3852 = vsel %vm3851, %v3843, %v3774
          %v3853 = vsel %vm3851, %v3844, %v3774
          %v3854 = vsel %vm3851, %v3845, %v3774
          %v3855 = vsel %vm3851, %v3846, %v3774
          %v3856 = vsel %vm3851, %v3847, %v3774
          %v3857 = vsel %vm3851, %v3848, %v3774
          %v3858 = vsel %vm3851, %v3849, %v3774
          %v3859 = vsel %vm3851, %v3850, %v3774
          %vm3860 = vcmask 1044480
          %v3861 = vsel %vm3860, %v3852, %v3784
          %v3862 = vsel %vm3860, %v3853, %v3785
          %v3863 = vsel %vm3860, %v3854, %v3786
          %v3864 = vsel %vm3860, %v3855, %v3787
          %v3865 = vsel %vm3860, %v3856, %v3788
          %v3866 = vsel %vm3860, %v3857, %v3789
          %v3867 = vsel %vm3860, %v3858, %v3790
          %v3868 = vsel %vm3860, %v3859, %v3791
          %vm3869 = vcmask 1045504
          %v3870 = vsel %vm3869, %v3861, %v3808
          %v3871 = vsel %vm3869, %v3862, %v3809
          %v3872 = vsel %vm3869, %v3863, %v3810
          %v3873 = vsel %vm3869, %v3864, %v3811
          %v3874 = vsel %vm3869, %v3865, %v3812
          %v3875 = vsel %vm3869, %v3866, %v3813
          %v3876 = vsel %vm3869, %v3867, %v3814
          %v3877 = vsel %vm3869, %v3868, %v3815
          %vm3878 = vcmask 1046528
          %v3879 = vsel %vm3878, %v3870, 0.0
          %v3880 = vsel %vm3878, %v3871, 0.0
          %v3881 = vsel %vm3878, %v3872, 0.0
          %v3882 = vsel %vm3878, %v3873, 0.0
          %v3883 = vsel %vm3878, %v3874, 0.0
          %v3884 = vsel %vm3878, %v3875, 0.0
          %v3885 = vsel %vm3878, %v3876, 0.0
          %v3886 = vsel %vm3878, %v3877, 0.0
          %3887 = vst [vmem:[%s356] sm:$0xff] %v3879
          %3888 = vst [vmem:[%s356 + $0x8] sm:$0xff] %v3880
          %3889 = vst [vmem:[%s356 + $0x10] sm:$0xff] %v3881
          %3890 = vst [vmem:[%s356 + $0x18] sm:$0xff] %v3882
          %3891 = vst [vmem:[%s356 + $0x20] sm:$0xff] %v3883
          %3892 = vst [vmem:[%s356 + $0x28] sm:$0xff] %v3884
          %3893 = vst [vmem:[%s356 + $0x30] sm:$0xff] %v3885
          %3894 = vst [vmem:[%s356 + $0x38] sm:$0xff] %v3886
          %3895 = vst [vmem:[%s363] sm:$0xff] %v3416
          %3896 = vst [vmem:[%s363 + $0x8] sm:$0xff] %v3417
          %3897 = vst [vmem:[%s363 + $0x10] sm:$0xff] %v3418
          %3898 = vst [vmem:[%s363 + $0x18] sm:$0xff] %v3419
          %3899 = vst [vmem:[%s363 + $0x20] sm:$0xff] %v3420
          %3900 = vst [vmem:[%s363 + $0x28] sm:$0xff] %v3421
          %3901 = vst [vmem:[%s363 + $0x30] sm:$0xff] %v3422
          %3902 = vst [vmem:[%s363 + $0x38] sm:$0xff] %v3423
        $region56: #{tpu_custom_call.1} parent=35 // pred_fallthru
          _
        %s3903 = sand.u32 %s170, 1
        %s3904 = scalar_lea.sflag [#allocation8], %s3903
        %s3905 = sand.u32 %s170, 1
        %s3906 = smul.addr %s3905, 64
        %s3907 = scalar_lea.vmem [#allocation11], %s3906
        %s3908 = sand.u32 %s198, 1
        %s3909 = scalar_lea.sflag [#allocation13], %s3908
        %s3910 = sand.u32 %s198, 1
        %s3911 = smul.addr %s3910, 64
        %s3912 = scalar_lea.vmem [#allocation12], %s3911
        // Predicated region
        $region57: #{tpu_custom_call.1} parent=35 // pred_check
          %p3913 = pneg %p180
        $region58: #{tpu_custom_call.1} parent=35 // pred_check_branch
          %3915 = sbr.rel (%p3913) target = $region60
        $region59: #{tpu_custom_call.1} parent=35 // pred_region
          %s3916 = smul.u32 8, %s35
          %s3918 = ssub.s32 1024, 1024
          %3919 = vsyncadd %s3904, %s3918
          %s3920 = smul.addr %s34, 8
          %s3921 = sadd.s32 %s3916, %s3920
          %s3922 = smul.addr %s3921, 128
          %s3923 = scalar_lea.hbm %s4, %s3922
          %s3925 = sshll.u32 %s3907, 4
          %s3926 = int_to_ptr.vmem [resolvable:$true] %s3925
          %3928 = dma.vmem_to_hbm [thread:$0]  %s3926, 1024, %s3923, %s3904
        $region60: #{tpu_custom_call.1} parent=35 // pred_fallthru
          _
        // Predicated region
        $region61: #{tpu_custom_call.1} parent=35 // pred_check
          %p3929 = pneg %p208
        $region62: #{tpu_custom_call.1} parent=35 // pred_check_branch
          %3931 = sbr.rel (%p3929) target = $region64
        $region63: #{tpu_custom_call.1} parent=35 // pred_region
          %s3932 = smul.u32 8, %s35
          %s3934 = ssub.s32 1024, 1024
          %3935 = vsyncadd %s3909, %s3934
          %s3936 = smul.addr %s34, 8
          %s3937 = sadd.s32 %s3932, %s3936
          %s3938 = smul.addr %s3937, 128
          %s3939 = scalar_lea.hbm %s5, %s3938
          %s3941 = sshll.u32 %s3912, 4
          %s3942 = int_to_ptr.vmem [resolvable:$true] %s3941
          %3944 = dma.vmem_to_hbm [thread:$0]  %s3942, 1024, %s3939, %s3909
        $region64: #{tpu_custom_call.1} parent=35 // pred_fallthru
          _
      $region36: #{tpu_custom_call.1} parent=5 // pred_fallthru
        _
      %p3945 = scmp.le.s32.totalorder 2, %s24
      // Predicated region
      $region65: #{tpu_custom_call.1} parent=5 // pred_check
        %p3946 = pneg %p3945
      $region66: #{tpu_custom_call.1} parent=5 // pred_check_branch
        %3948 = sbr.rel (%p3946) target = $region68
      $region67: #{tpu_custom_call.1} parent=5 // pred_region
        %s3949 = ssub.s32 %s24, 2
        // Predicated region
        $region69: #{tpu_custom_call.1} parent=67 // pred_check
          %p3950 = pneg %p186
        $region70: #{tpu_custom_call.1} parent=67 // pred_check_branch
          %3952 = sbr.rel (%p3950) target = $region72
        $region71: #{tpu_custom_call.1} parent=67 // pred_region
          %s3953 = sand.u32 %s171, 1
          %s3954 = scalar_lea.sflag [#allocation8], %s3953
          %s3955 = sand.u32 %s171, 1
          %s3956 = smul.addr %s3955, 64
          %s3957 = scalar_lea.vmem [#allocation11], %s3956
          %3958 = dma.done %s3954, 1024
        $region72: #{tpu_custom_call.1} parent=67 // pred_fallthru
          _
        // Predicated region
        $region73: #{tpu_custom_call.1} parent=67 // pred_check
          %p3959 = pneg %p214
        $region74: #{tpu_custom_call.1} parent=67 // pred_check_branch
          %3961 = sbr.rel (%p3959) target = $region76
        $region75: #{tpu_custom_call.1} parent=67 // pred_region
          %s3962 = sand.u32 %s199, 1
          %s3963 = scalar_lea.sflag [#allocation13], %s3962
          %s3964 = sand.u32 %s199, 1
          %s3965 = smul.addr %s3964, 64
          %s3966 = scalar_lea.vmem [#allocation12], %s3965
          %3967 = dma.done %s3963, 1024
        $region76: #{tpu_custom_call.1} parent=67 // pred_fallthru
          _
      $region68: #{tpu_custom_call.1} parent=5 // pred_fallthru
        _
    $region6: #{tpu_custom_call.1} parent=1 // loop_footer
      %s28 = sadd.s32 1, %s24
    $region7: #{tpu_custom_call.1} parent=1 // loop_footer_branch
      %23 = sbr.rel target = $region3
    $region8: #{tpu_custom_call.1} parent=1 // loop_exit
      _
    %3968 = vsyncpa [#allocation7], 1
    %s3969 = scalar_lea.sflag [#allocation7], 1
    %3970 = vsyncpa %s3969, 1
    %3971 = vsyncpa [#allocation10], 1
    %s3972 = scalar_lea.sflag [#allocation10], 1
    %3973 = vsyncpa %s3972, 1
    %3974 = vsyncpa [#allocation8], 1
    %s3975 = scalar_lea.sflag [#allocation8], 1
    %3976 = vsyncpa %s3975, 1
    %3977 = vsyncpa [#allocation13], 1
    %s3978 = scalar_lea.sflag [#allocation13], 1
    %3979 = vsyncpa %s3978, 1

</llo_original>
